<compile_context>
chip_gen: v7x
topology: tpu7x:2x2x1
jax: 0.10.0
libtpu: 0.0.40
codegen_flags: <defaults>
</compile_context>

<pallas_src>
import jax
import jax.numpy as jnp
from jax.experimental import pallas as pl
from jax.experimental.pallas import tpu as pltpu

NLANE = 128          # lane width: every channel axis is padded to this
H_IMG = 28           # input spatial size implied by fc1's 1600 = 64*5*5
H1 = 13              # conv1 (26x26) -> 2x2 pool -> 13x13
W1PAD = 24           # conv1 feature-map width padded 13 -> 24 (multiple of 8, >= 2+16)
R1 = H1 * W1PAD      # 312 rows per pool sub-position (multiple of 8)
H2F = 11             # conv2 full-resolution output height/width (13 - 2)
W2PAD = 16           # conv2 full-res width padded 11 -> 16 (multiple of 8)
R2 = H2F * W2PAD     # 176
H2 = 5               # conv2 pooled spatial size (11 // 2, row/col 10 dropped)
KTAPS = 9            # 3x3 kernel taps


# ----------------------------------------------------------------------------------
# Fused Pallas kernel: one batch element per grid step, everything in VMEM.
# ----------------------------------------------------------------------------------
def fused_forward_kernel(p1_ref, w1_ref, b1_ref, w2_ref, b2_ref,
                         wf1_ref, bf1_ref, wf2_ref, bf2_ref, out_ref):
    # ---- conv1: one MXU matmul over all 4 pool sub-positions (M = 1248) ----
    p1 = p1_ref[0]                                                      # (1248, 9)
    y1 = jnp.dot(p1, w1_ref[...], preferred_element_type=jnp.float32)   # (1248, 128)

    # 2x2 max-pool == max over the 4 sub-position row groups; bias/ReLU hoisted.
    y1p = jnp.maximum(jnp.maximum(y1[0:R1], y1[R1:2 * R1]),
                      jnp.maximum(y1[2 * R1:3 * R1], y1[3 * R1:4 * R1]))  # (312, 128)
    a1 = jnp.maximum(y1p + b1_ref[...], 0.0)                            # (312, 128) NHWC-flat
    a1 = a1.reshape(H1, W1PAD, NLANE)                                   # (13, 24, 128)

    # ---- conv2: in-kernel im2col (9 shifted slabs, lane-concat) + one matmul ----
    slabs = []
    for kh in range(3):
        rows = a1[kh:kh + H2F]                                          # (11, 24, 128)
        for kw in range(3):
            slabs.append(rows[:, kw:kw + W2PAD, :])                     # (11, 16, 128)
    p2 = jnp.concatenate(slabs, axis=-1)                                # (11, 16, 1152)
    p2 = p2.reshape(R2, KTAPS * NLANE)                                  # (176, 1152)
    y2 = jnp.dot(p2, w2_ref[...], preferred_element_type=jnp.float32)   # (176, 128)
    y2 = y2.reshape(H2F, W2PAD, NLANE)                                  # (11, 16, 128)

    # ---- 2x2 max-pool over the valid 10x10 region (row/col 10 dropped, as PyTorch) ----
    e = y2[0:2 * H2].reshape(H2, 2, W2PAD, NLANE)                       # (5, 2, 16, 128)
    rp = jnp.maximum(e[:, 0], e[:, 1])                                  # (5, 16, 128) row-pooled

    # ---- column pool + bias + ReLU, flattened (h, w, c) straight into the fc1 row ----
    b2 = b2_ref[...]                                                    # (1, 128)
    pieces = []
    for i in range(H2):
        row = rp[i]                                                     # (16, 128)
        for j in range(H2):
            v = jnp.maximum(row[2 * j:2 * j + 1, :], row[2 * j + 1:2 * j + 2, :])  # (1, 128)
            pieces.append(jnp.maximum(v + b2, 0.0))
    flat = jnp.concatenate(pieces, axis=-1)                             # (1, 3200)

    # ---- fc1 -> relu -> fc2 (128-lane padded output; sliced back to 10 outside) ----
    h = jnp.dot(flat, wf1_ref[...], preferred_element_type=jnp.float32) + bf1_ref[...]
    h = jnp.maximum(h, 0.0)                                             # (1, 128)
    out_ref[0] = (jnp.dot(h, wf2_ref[...], preferred_element_type=jnp.float32)
                  + bf2_ref[...])                                       # (1, 128)


# ----------------------------------------------------------------------------------
# pallas_call wrapper
# ----------------------------------------------------------------------------------
def fused_forward(p1, params):
    B = p1.shape[0]

    def weight_spec(shape):
        return pl.BlockSpec(shape, lambda i: (0, 0))

    return pl.pallas_call(
        fused_forward_kernel,
        out_shape=jax.ShapeDtypeStruct((B, 1, NLANE), jnp.float32),
        grid=(B,),
        in_specs=[
            pl.BlockSpec((1, 4 * R1, KTAPS), lambda i: (i, 0, 0)),   # conv1 patches
            weight_spec((KTAPS, NLANE)),                             # w1p  (9, 128)
            weight_spec((1, NLANE)),                                 # b1p
            weight_spec((KTAPS * NLANE, NLANE)),                     # w2p  (1152, 128)
            weight_spec((1, NLANE)),                                 # b2p
            weight_spec((H2 * H2 * NLANE, NLANE)),                   # wf1p (3200, 128)
            weight_spec((1, NLANE)),                                 # bf1p
            weight_spec((NLANE, NLANE)),                             # wf2p (128, 128)
            weight_spec((1, NLANE)),                                 # bf2p
        ],
        out_specs=pl.BlockSpec((1, 1, NLANE), lambda i: (i, 0, 0)),
        compiler_params=pltpu.CompilerParams(
            dimension_semantics=("parallel",),
            vmem_limit_bytes=32 * 1024 * 1024,
        ),
    )(p1, params["w1p"], params["b1p"], params["w2p"], params["b2p"],
      params["wf1p"], params["bf1p"], params["wf2p"], params["bf2p"])


# ----------------------------------------------------------------------------------
# Input-side glue: pool-grouped, width-padded im2col of the raw image (plain JAX).
# ----------------------------------------------------------------------------------
def build_conv1_patches(x):
    """x: (B, 1, 28, 28) NCHW -> (B, 4*312, 9).
    Row layout: [pool sub-position d=(dy,dx)] x [spatial row r (13) x padded col slot (24)];
    tap order k = kh*3 + kw matches the PyTorch conv-weight flattening (cin=1)."""
    B, Cin, H, W = x.shape
    assert Cin == 1 and H == H_IMG and W == H_IMG, \
        "SimpleConvNet's fc1 in_features=1600 implies 1x28x28 inputs"
    img = x[:, 0]                                                       # (B, 28, 28)
    groups = []
    for dy in range(2):
        for dx in range(2):
            taps = []
            for kh in range(3):
                for kw in range(3):
                    taps.append(img[:, dy + kh:dy + kh + 2 * H1 - 1:2,
                                       dx + kw:dx + kw + 2 * H1 - 1:2])  # (B, 13, 13)
            p = jnp.stack(taps, axis=-1)                                # (B, 13, 13, 9)
            p = jnp.pad(p, ((0, 0), (0, 0), (0, W1PAD - H1), (0, 0)))   # (B, 13, 24, 9)
            groups.append(p.reshape(B, R1, KTAPS))                      # (B, 312, 9)
    return jnp.concatenate(groups, axis=1)                              # (B, 1248, 9)


def simple_conv_net_forward(x, params):
    B = x.shape[0]
    p1 = build_conv1_patches(x)            # only plain-JAX glue: im2col of the raw input
    out = fused_forward(p1, params)        # (B, 1, 128)
    return out.reshape(B, NLANE)[:, :10]   # drop the lane padding of the fc2 output


# ----------------------------------------------------------------------------------
# Parameter preparation: PyTorch-layout weights -> padded, channel-last kernel layout.
# ----------------------------------------------------------------------------------
def _pad_axis(a, size, axis):
    pad = [(0, 0)] * a.ndim
    pad[axis] = (0, size - a.shape[axis])
    return jnp.pad(a, pad)


def pack_params(w1, b1, w2, b2, fw1, fb1, fw2, fb2):
    c1, c2, f1 = w1.shape[0], w2.shape[0], fw1.shape[0]
    assert fw1.shape[1] == c2 * H2 * H2 == 1600
    assert max(c1, c2, f1, 10) <= NLANE

    w1p = _pad_axis(w1.reshape(c1, KTAPS).T, NLANE, 1)                  # (9, 128)
    b1p = _pad_axis(b1.reshape(1, c1), NLANE, 1)                        # (1, 128)

    w2hwio = jnp.transpose(w2, (2, 3, 1, 0))                            # (3, 3, c1, c2)
    w2p = _pad_axis(_pad_axis(w2hwio, NLANE, 2), NLANE, 3)              # (3, 3, 128, 128)
    w2p = w2p.reshape(KTAPS * NLANE, NLANE)                             # (1152, 128)
    b2p = _pad_axis(b2.reshape(1, c2), NLANE, 1)                        # (1, 128)

    # fc1 consumes the kernel's (h, w, c_pad) flatten; PyTorch's view(-1, 1600) is (c, h, w),
    # so permute and zero-pad the fc1 weight columns accordingly.
    wf1 = jnp.transpose(fw1.reshape(f1, c2, H2, H2), (2, 3, 1, 0))      # (5, 5, c2, f1)
    wf1p = _pad_axis(_pad_axis(wf1, NLANE, 2), NLANE, 3)                # (5, 5, 128, 128)
    wf1p = wf1p.reshape(H2 * H2 * NLANE, NLANE)                         # (3200, 128)
    bf1p = _pad_axis(fb1.reshape(1, f1), NLANE, 1)                      # (1, 128)

    wf2p = _pad_axis(_pad_axis(fw2.T, NLANE, 0), NLANE, 1)              # (128, 128)
    bf2p = _pad_axis(fb2.reshape(1, 10), NLANE, 1)                      # (1, 128)

    return {"w1p": w1p, "b1p": b1p, "w2p": w2p, "b2p": b2p,
            "wf1p": wf1p, "bf1p": bf1p, "wf2p": wf2p, "bf2p": bf2p}


def init_params(key, conv1_out=32, conv2_out=64, fc1_out=128):
    ks = jax.random.split(key, 8)
    w1 = jax.random.normal(ks[0], (conv1_out, 1, 3, 3), jnp.float32) * 0.1
    b1 = jax.random.normal(ks[1], (conv1_out,), jnp.float32) * 0.01
    w2 = jax.random.normal(ks[2], (conv2_out, conv1_out, 3, 3), jnp.float32) * 0.05
    b2 = jax.random.normal(ks[3], (conv2_out,), jnp.float32) * 0.01
    fw1 = jax.random.normal(ks[4], (fc1_out, 1600), jnp.float32) * 0.02
    fb1 = jax.random.normal(ks[5], (fc1_out,), jnp.float32) * 0.01
    fw2 = jax.random.normal(ks[6], (10, fc1_out), jnp.float32) * 0.05
    fb2 = jax.random.normal(ks[7], (10,), jnp.float32) * 0.01
    return pack_params(w1, b1, w2, b2, fw1, fb1, fw2, fb2)


if __name__ == "__main__":
    key = jax.random.PRNGKey(0)
    k_x, k_p = jax.random.split(key)
    # fc1's in_features=1600 = 64*5*5 pins the input to 1 channel, 28x28 spatial.
    x = jax.random.normal(k_x, (2, 1, 28, 28), jnp.float32)
    params = init_params(k_p)

    out = jax.jit(simple_conv_net_forward)(x, params)
    out = jax.block_until_ready(out)
    assert out.shape == (2, 10) and out.dtype == jnp.float32
    assert bool(jnp.all(jnp.isfinite(out)))
    print("KERNEL_OK")
</pallas_src>

<mosaic_0001>
module attributes {stable_mosaic.version = 11 : i64} {
  func.func @fused_forward_kernel(%arg0: i32, %arg1: memref<1x1248x9xf32, #tpu.memory_space<vmem>>, %arg2: memref<9x128xf32, #tpu.memory_space<vmem>>, %arg3: memref<1x128xf32, #tpu.memory_space<vmem>>, %arg4: memref<1152x128xf32, #tpu.memory_space<vmem>>, %arg5: memref<1x128xf32, #tpu.memory_space<vmem>>, %arg6: memref<3200x128xf32, #tpu.memory_space<vmem>>, %arg7: memref<1x128xf32, #tpu.memory_space<vmem>>, %arg8: memref<128x128xf32, #tpu.memory_space<vmem>>, %arg9: memref<1x128xf32, #tpu.memory_space<vmem>>, %arg10: memref<1x1x128xf32, #tpu.memory_space<vmem>>) attributes {dimension_semantics = [#tpu.dimension_semantics<parallel>], iteration_bounds = array<i64: 2>, scalar_prefetch = 0 : i64, scratch_operands = 0 : i64, tpu.core_type = #tpu.core_type<tc>, window_params = [{transform_indices = @transform_0, window_bounds = array<i64: 1, 1248, 9>}, {pipeline_mode = #tpu.pipeline_mode<synchronous>, transform_indices = @transform_1, window_bounds = array<i64: 9, 128>}, {pipeline_mode = #tpu.pipeline_mode<synchronous>, transform_indices = @transform_2, window_bounds = array<i64: 1, 128>}, {pipeline_mode = #tpu.pipeline_mode<synchronous>, transform_indices = @transform_3, window_bounds = array<i64: 1152, 128>}, {pipeline_mode = #tpu.pipeline_mode<synchronous>, transform_indices = @transform_4, window_bounds = array<i64: 1, 128>}, {pipeline_mode = #tpu.pipeline_mode<synchronous>, transform_indices = @transform_5, window_bounds = array<i64: 3200, 128>}, {pipeline_mode = #tpu.pipeline_mode<synchronous>, transform_indices = @transform_6, window_bounds = array<i64: 1, 128>}, {pipeline_mode = #tpu.pipeline_mode<synchronous>, transform_indices = @transform_7, window_bounds = array<i64: 128, 128>}, {pipeline_mode = #tpu.pipeline_mode<synchronous>, transform_indices = @transform_8, window_bounds = array<i64: 1, 128>}, {transform_indices = @transform_9, window_bounds = array<i64: 1, 1, 128>}]} {
    %c0 = arith.constant 0 : index
    %c0_0 = arith.constant 0 : index
    %c0_1 = arith.constant 0 : index
    %0 = vector.load %arg1[%c0, %c0_0, %c0_1] : memref<1x1248x9xf32, #tpu.memory_space<vmem>>, vector<1x1248x9xf32>
    %1 = vector.shape_cast %0 : vector<1x1248x9xf32> to vector<1248x9xf32>
    %c0_2 = arith.constant 0 : index
    %c0_3 = arith.constant 0 : index
    %2 = vector.load %arg2[%c0_2, %c0_3] : memref<9x128xf32, #tpu.memory_space<vmem>>, vector<9x128xf32>
    %cst = arith.constant dense<0.000000e+00> : vector<1248x128xf32>
    %3 = tpu.matmul %1, %2, %cst {dimension_numbers = #tpu.dot_dimension_numbers<[1], [0], [0], [1], [0, 0, 1, 1], [], []>} : vector<1248x9xf32>, vector<9x128xf32>, vector<1248x128xf32> -> vector<1248x128xf32>
    %4 = vector.extract_strided_slice %3 {offsets = [0, 0], sizes = [312, 128], strides = [1, 1]} : vector<1248x128xf32> to vector<312x128xf32>
    %5 = vector.extract_strided_slice %3 {offsets = [312, 0], sizes = [312, 128], strides = [1, 1]} : vector<1248x128xf32> to vector<312x128xf32>
    %6 = arith.maximumf %4, %5 : vector<312x128xf32>
    %7 = vector.extract_strided_slice %3 {offsets = [624, 0], sizes = [312, 128], strides = [1, 1]} : vector<1248x128xf32> to vector<312x128xf32>
    %8 = vector.extract_strided_slice %3 {offsets = [936, 0], sizes = [312, 128], strides = [1, 1]} : vector<1248x128xf32> to vector<312x128xf32>
    %9 = arith.maximumf %7, %8 : vector<312x128xf32>
    %10 = arith.maximumf %6, %9 : vector<312x128xf32>
    %c0_4 = arith.constant 0 : index
    %c0_5 = arith.constant 0 : index
    %11 = vector.load %arg3[%c0_4, %c0_5] : memref<1x128xf32, #tpu.memory_space<vmem>>, vector<1x128xf32>
    %12 = vector.broadcast %11 : vector<1x128xf32> to vector<312x128xf32>
    %13 = arith.addf %10, %12 : vector<312x128xf32>
    %cst_6 = arith.constant 0.000000e+00 : f32
    %14 = vector.broadcast %cst_6 : f32 to vector<312x128xf32>
    %15 = arith.maximumf %13, %14 : vector<312x128xf32>
    %16 = vector.shape_cast %15 : vector<312x128xf32> to vector<13x24x128xf32>
    %17 = vector.extract_strided_slice %16 {offsets = [0, 0, 0], sizes = [11, 24, 128], strides = [1, 1, 1]} : vector<13x24x128xf32> to vector<11x24x128xf32>
    %18 = vector.extract_strided_slice %17 {offsets = [0, 0, 0], sizes = [11, 16, 128], strides = [1, 1, 1]} : vector<11x24x128xf32> to vector<11x16x128xf32>
    %19 = vector.extract_strided_slice %17 {offsets = [0, 1, 0], sizes = [11, 16, 128], strides = [1, 1, 1]} : vector<11x24x128xf32> to vector<11x16x128xf32>
    %20 = vector.extract_strided_slice %17 {offsets = [0, 2, 0], sizes = [11, 16, 128], strides = [1, 1, 1]} : vector<11x24x128xf32> to vector<11x16x128xf32>
    %21 = vector.extract_strided_slice %16 {offsets = [1, 0, 0], sizes = [11, 24, 128], strides = [1, 1, 1]} : vector<13x24x128xf32> to vector<11x24x128xf32>
    %22 = vector.extract_strided_slice %21 {offsets = [0, 0, 0], sizes = [11, 16, 128], strides = [1, 1, 1]} : vector<11x24x128xf32> to vector<11x16x128xf32>
    %23 = vector.extract_strided_slice %21 {offsets = [0, 1, 0], sizes = [11, 16, 128], strides = [1, 1, 1]} : vector<11x24x128xf32> to vector<11x16x128xf32>
    %24 = vector.extract_strided_slice %21 {offsets = [0, 2, 0], sizes = [11, 16, 128], strides = [1, 1, 1]} : vector<11x24x128xf32> to vector<11x16x128xf32>
    %25 = vector.extract_strided_slice %16 {offsets = [2, 0, 0], sizes = [11, 24, 128], strides = [1, 1, 1]} : vector<13x24x128xf32> to vector<11x24x128xf32>
    %26 = vector.extract_strided_slice %25 {offsets = [0, 0, 0], sizes = [11, 16, 128], strides = [1, 1, 1]} : vector<11x24x128xf32> to vector<11x16x128xf32>
    %27 = vector.extract_strided_slice %25 {offsets = [0, 1, 0], sizes = [11, 16, 128], strides = [1, 1, 1]} : vector<11x24x128xf32> to vector<11x16x128xf32>
    %28 = vector.extract_strided_slice %25 {offsets = [0, 2, 0], sizes = [11, 16, 128], strides = [1, 1, 1]} : vector<11x24x128xf32> to vector<11x16x128xf32>
    %29 = tpu.concatenate %18, %19, %20, %22, %23, %24, %26, %27, %28 in 2 : vector<11x16x128xf32>, vector<11x16x128xf32>, vector<11x16x128xf32>, vector<11x16x128xf32>, vector<11x16x128xf32>, vector<11x16x128xf32>, vector<11x16x128xf32>, vector<11x16x128xf32>, vector<11x16x128xf32> -> vector<11x16x1152xf32>
    %30 = vector.shape_cast %29 : vector<11x16x1152xf32> to vector<176x1152xf32>
    %c0_7 = arith.constant 0 : index
    %c0_8 = arith.constant 0 : index
    %31 = vector.load %arg4[%c0_7, %c0_8] : memref<1152x128xf32, #tpu.memory_space<vmem>>, vector<1152x128xf32>
    %cst_9 = arith.constant dense<0.000000e+00> : vector<176x128xf32>
    %32 = tpu.matmul %30, %31, %cst_9 {dimension_numbers = #tpu.dot_dimension_numbers<[1], [0], [0], [1], [0, 0, 1, 1], [], []>} : vector<176x1152xf32>, vector<1152x128xf32>, vector<176x128xf32> -> vector<176x128xf32>
    %33 = vector.shape_cast %32 : vector<176x128xf32> to vector<11x16x128xf32>
    %34 = vector.extract_strided_slice %33 {offsets = [0, 0, 0], sizes = [10, 16, 128], strides = [1, 1, 1]} : vector<11x16x128xf32> to vector<10x16x128xf32>
    %35 = vector.shape_cast %34 : vector<10x16x128xf32> to vector<5x2x16x128xf32>
    %36 = vector.extract_strided_slice %35 {offsets = [0, 0, 0, 0], sizes = [5, 1, 16, 128], strides = [1, 1, 1, 1]} : vector<5x2x16x128xf32> to vector<5x1x16x128xf32>
    %37 = vector.shape_cast %36 : vector<5x1x16x128xf32> to vector<5x16x128xf32>
    %38 = vector.extract_strided_slice %35 {offsets = [0, 1, 0, 0], sizes = [5, 1, 16, 128], strides = [1, 1, 1, 1]} : vector<5x2x16x128xf32> to vector<5x1x16x128xf32>
    %39 = vector.shape_cast %38 : vector<5x1x16x128xf32> to vector<5x16x128xf32>
    %40 = arith.maximumf %37, %39 : vector<5x16x128xf32>
    %c0_10 = arith.constant 0 : index
    %c0_11 = arith.constant 0 : index
    %41 = vector.load %arg5[%c0_10, %c0_11] : memref<1x128xf32, #tpu.memory_space<vmem>>, vector<1x128xf32>
    %42 = vector.extract_strided_slice %40 {offsets = [0, 0, 0], sizes = [1, 16, 128], strides = [1, 1, 1]} : vector<5x16x128xf32> to vector<1x16x128xf32>
    %43 = vector.shape_cast %42 : vector<1x16x128xf32> to vector<16x128xf32>
    %44 = vector.extract_strided_slice %43 {offsets = [0, 0], sizes = [1, 128], strides = [1, 1]} : vector<16x128xf32> to vector<1x128xf32>
    %45 = vector.extract_strided_slice %43 {offsets = [1, 0], sizes = [1, 128], strides = [1, 1]} : vector<16x128xf32> to vector<1x128xf32>
    %46 = arith.maximumf %44, %45 : vector<1x128xf32>
    %47 = arith.addf %46, %41 : vector<1x128xf32>
    %cst_12 = arith.constant 0.000000e+00 : f32
    %48 = vector.broadcast %cst_12 : f32 to vector<1x128xf32>
    %49 = arith.maximumf %47, %48 : vector<1x128xf32>
    %50 = vector.extract_strided_slice %43 {offsets = [2, 0], sizes = [1, 128], strides = [1, 1]} : vector<16x128xf32> to vector<1x128xf32>
    %51 = vector.extract_strided_slice %43 {offsets = [3, 0], sizes = [1, 128], strides = [1, 1]} : vector<16x128xf32> to vector<1x128xf32>
    %52 = arith.maximumf %50, %51 : vector<1x128xf32>
    %53 = arith.addf %52, %41 : vector<1x128xf32>
    %cst_13 = arith.constant 0.000000e+00 : f32
    %54 = vector.broadcast %cst_13 : f32 to vector<1x128xf32>
    %55 = arith.maximumf %53, %54 : vector<1x128xf32>
    %56 = vector.extract_strided_slice %43 {offsets = [4, 0], sizes = [1, 128], strides = [1, 1]} : vector<16x128xf32> to vector<1x128xf32>
    %57 = vector.extract_strided_slice %43 {offsets = [5, 0], sizes = [1, 128], strides = [1, 1]} : vector<16x128xf32> to vector<1x128xf32>
    %58 = arith.maximumf %56, %57 : vector<1x128xf32>
    %59 = arith.addf %58, %41 : vector<1x128xf32>
    %cst_14 = arith.constant 0.000000e+00 : f32
    %60 = vector.broadcast %cst_14 : f32 to vector<1x128xf32>
    %61 = arith.maximumf %59, %60 : vector<1x128xf32>
    %62 = vector.extract_strided_slice %43 {offsets = [6, 0], sizes = [1, 128], strides = [1, 1]} : vector<16x128xf32> to vector<1x128xf32>
    %63 = vector.extract_strided_slice %43 {offsets = [7, 0], sizes = [1, 128], strides = [1, 1]} : vector<16x128xf32> to vector<1x128xf32>
    %64 = arith.maximumf %62, %63 : vector<1x128xf32>
    %65 = arith.addf %64, %41 : vector<1x128xf32>
    %cst_15 = arith.constant 0.000000e+00 : f32
    %66 = vector.broadcast %cst_15 : f32 to vector<1x128xf32>
    %67 = arith.maximumf %65, %66 : vector<1x128xf32>
    %68 = vector.extract_strided_slice %43 {offsets = [8, 0], sizes = [1, 128], strides = [1, 1]} : vector<16x128xf32> to vector<1x128xf32>
    %69 = vector.extract_strided_slice %43 {offsets = [9, 0], sizes = [1, 128], strides = [1, 1]} : vector<16x128xf32> to vector<1x128xf32>
    %70 = arith.maximumf %68, %69 : vector<1x128xf32>
    %71 = arith.addf %70, %41 : vector<1x128xf32>
    %cst_16 = arith.constant 0.000000e+00 : f32
    %72 = vector.broadcast %cst_16 : f32 to vector<1x128xf32>
    %73 = arith.maximumf %71, %72 : vector<1x128xf32>
    %74 = vector.extract_strided_slice %40 {offsets = [1, 0, 0], sizes = [1, 16, 128], strides = [1, 1, 1]} : vector<5x16x128xf32> to vector<1x16x128xf32>
    %75 = vector.shape_cast %74 : vector<1x16x128xf32> to vector<16x128xf32>
    %76 = vector.extract_strided_slice %75 {offsets = [0, 0], sizes = [1, 128], strides = [1, 1]} : vector<16x128xf32> to vector<1x128xf32>
    %77 = vector.extract_strided_slice %75 {offsets = [1, 0], sizes = [1, 128], strides = [1, 1]} : vector<16x128xf32> to vector<1x128xf32>
    %78 = arith.maximumf %76, %77 : vector<1x128xf32>
    %79 = arith.addf %78, %41 : vector<1x128xf32>
    %cst_17 = arith.constant 0.000000e+00 : f32
    %80 = vector.broadcast %cst_17 : f32 to vector<1x128xf32>
    %81 = arith.maximumf %79, %80 : vector<1x128xf32>
    %82 = vector.extract_strided_slice %75 {offsets = [2, 0], sizes = [1, 128], strides = [1, 1]} : vector<16x128xf32> to vector<1x128xf32>
    %83 = vector.extract_strided_slice %75 {offsets = [3, 0], sizes = [1, 128], strides = [1, 1]} : vector<16x128xf32> to vector<1x128xf32>
    %84 = arith.maximumf %82, %83 : vector<1x128xf32>
    %85 = arith.addf %84, %41 : vector<1x128xf32>
    %cst_18 = arith.constant 0.000000e+00 : f32
    %86 = vector.broadcast %cst_18 : f32 to vector<1x128xf32>
    %87 = arith.maximumf %85, %86 : vector<1x128xf32>
    %88 = vector.extract_strided_slice %75 {offsets = [4, 0], sizes = [1, 128], strides = [1, 1]} : vector<16x128xf32> to vector<1x128xf32>
    %89 = vector.extract_strided_slice %75 {offsets = [5, 0], sizes = [1, 128], strides = [1, 1]} : vector<16x128xf32> to vector<1x128xf32>
    %90 = arith.maximumf %88, %89 : vector<1x128xf32>
    %91 = arith.addf %90, %41 : vector<1x128xf32>
    %cst_19 = arith.constant 0.000000e+00 : f32
    %92 = vector.broadcast %cst_19 : f32 to vector<1x128xf32>
    %93 = arith.maximumf %91, %92 : vector<1x128xf32>
    %94 = vector.extract_strided_slice %75 {offsets = [6, 0], sizes = [1, 128], strides = [1, 1]} : vector<16x128xf32> to vector<1x128xf32>
    %95 = vector.extract_strided_slice %75 {offsets = [7, 0], sizes = [1, 128], strides = [1, 1]} : vector<16x128xf32> to vector<1x128xf32>
    %96 = arith.maximumf %94, %95 : vector<1x128xf32>
    %97 = arith.addf %96, %41 : vector<1x128xf32>
    %cst_20 = arith.constant 0.000000e+00 : f32
    %98 = vector.broadcast %cst_20 : f32 to vector<1x128xf32>
    %99 = arith.maximumf %97, %98 : vector<1x128xf32>
    %100 = vector.extract_strided_slice %75 {offsets = [8, 0], sizes = [1, 128], strides = [1, 1]} : vector<16x128xf32> to vector<1x128xf32>
    %101 = vector.extract_strided_slice %75 {offsets = [9, 0], sizes = [1, 128], strides = [1, 1]} : vector<16x128xf32> to vector<1x128xf32>
    %102 = arith.maximumf %100, %101 : vector<1x128xf32>
    %103 = arith.addf %102, %41 : vector<1x128xf32>
    %cst_21 = arith.constant 0.000000e+00 : f32
    %104 = vector.broadcast %cst_21 : f32 to vector<1x128xf32>
    %105 = arith.maximumf %103, %104 : vector<1x128xf32>
    %106 = vector.extract_strided_slice %40 {offsets = [2, 0, 0], sizes = [1, 16, 128], strides = [1, 1, 1]} : vector<5x16x128xf32> to vector<1x16x128xf32>
    %107 = vector.shape_cast %106 : vector<1x16x128xf32> to vector<16x128xf32>
    %108 = vector.extract_strided_slice %107 {offsets = [0, 0], sizes = [1, 128], strides = [1, 1]} : vector<16x128xf32> to vector<1x128xf32>
    %109 = vector.extract_strided_slice %107 {offsets = [1, 0], sizes = [1, 128], strides = [1, 1]} : vector<16x128xf32> to vector<1x128xf32>
    %110 = arith.maximumf %108, %109 : vector<1x128xf32>
    %111 = arith.addf %110, %41 : vector<1x128xf32>
    %cst_22 = arith.constant 0.000000e+00 : f32
    %112 = vector.broadcast %cst_22 : f32 to vector<1x128xf32>
    %113 = arith.maximumf %111, %112 : vector<1x128xf32>
    %114 = vector.extract_strided_slice %107 {offsets = [2, 0], sizes = [1, 128], strides = [1, 1]} : vector<16x128xf32> to vector<1x128xf32>
    %115 = vector.extract_strided_slice %107 {offsets = [3, 0], sizes = [1, 128], strides = [1, 1]} : vector<16x128xf32> to vector<1x128xf32>
    %116 = arith.maximumf %114, %115 : vector<1x128xf32>
    %117 = arith.addf %116, %41 : vector<1x128xf32>
    %cst_23 = arith.constant 0.000000e+00 : f32
    %118 = vector.broadcast %cst_23 : f32 to vector<1x128xf32>
    %119 = arith.maximumf %117, %118 : vector<1x128xf32>
    %120 = vector.extract_strided_slice %107 {offsets = [4, 0], sizes = [1, 128], strides = [1, 1]} : vector<16x128xf32> to vector<1x128xf32>
    %121 = vector.extract_strided_slice %107 {offsets = [5, 0], sizes = [1, 128], strides = [1, 1]} : vector<16x128xf32> to vector<1x128xf32>
    %122 = arith.maximumf %120, %121 : vector<1x128xf32>
    %123 = arith.addf %122, %41 : vector<1x128xf32>
    %cst_24 = arith.constant 0.000000e+00 : f32
    %124 = vector.broadcast %cst_24 : f32 to vector<1x128xf32>
    %125 = arith.maximumf %123, %124 : vector<1x128xf32>
    %126 = vector.extract_strided_slice %107 {offsets = [6, 0], sizes = [1, 128], strides = [1, 1]} : vector<16x128xf32> to vector<1x128xf32>
    %127 = vector.extract_strided_slice %107 {offsets = [7, 0], sizes = [1, 128], strides = [1, 1]} : vector<16x128xf32> to vector<1x128xf32>
    %128 = arith.maximumf %126, %127 : vector<1x128xf32>
    %129 = arith.addf %128, %41 : vector<1x128xf32>
    %cst_25 = arith.constant 0.000000e+00 : f32
    %130 = vector.broadcast %cst_25 : f32 to vector<1x128xf32>
    %131 = arith.maximumf %129, %130 : vector<1x128xf32>
    %132 = vector.extract_strided_slice %107 {offsets = [8, 0], sizes = [1, 128], strides = [1, 1]} : vector<16x128xf32> to vector<1x128xf32>
    %133 = vector.extract_strided_slice %107 {offsets = [9, 0], sizes = [1, 128], strides = [1, 1]} : vector<16x128xf32> to vector<1x128xf32>
    %134 = arith.maximumf %132, %133 : vector<1x128xf32>
    %135 = arith.addf %134, %41 : vector<1x128xf32>
    %cst_26 = arith.constant 0.000000e+00 : f32
    %136 = vector.broadcast %cst_26 : f32 to vector<1x128xf32>
    %137 = arith.maximumf %135, %136 : vector<1x128xf32>
    %138 = vector.extract_strided_slice %40 {offsets = [3, 0, 0], sizes = [1, 16, 128], strides = [1, 1, 1]} : vector<5x16x128xf32> to vector<1x16x128xf32>
    %139 = vector.shape_cast %138 : vector<1x16x128xf32> to vector<16x128xf32>
    %140 = vector.extract_strided_slice %139 {offsets = [0, 0], sizes = [1, 128], strides = [1, 1]} : vector<16x128xf32> to vector<1x128xf32>
    %141 = vector.extract_strided_slice %139 {offsets = [1, 0], sizes = [1, 128], strides = [1, 1]} : vector<16x128xf32> to vector<1x128xf32>
    %142 = arith.maximumf %140, %141 : vector<1x128xf32>
    %143 = arith.addf %142, %41 : vector<1x128xf32>
    %cst_27 = arith.constant 0.000000e+00 : f32
    %144 = vector.broadcast %cst_27 : f32 to vector<1x128xf32>
    %145 = arith.maximumf %143, %144 : vector<1x128xf32>
    %146 = vector.extract_strided_slice %139 {offsets = [2, 0], sizes = [1, 128], strides = [1, 1]} : vector<16x128xf32> to vector<1x128xf32>
    %147 = vector.extract_strided_slice %139 {offsets = [3, 0], sizes = [1, 128], strides = [1, 1]} : vector<16x128xf32> to vector<1x128xf32>
    %148 = arith.maximumf %146, %147 : vector<1x128xf32>
    %149 = arith.addf %148, %41 : vector<1x128xf32>
    %cst_28 = arith.constant 0.000000e+00 : f32
    %150 = vector.broadcast %cst_28 : f32 to vector<1x128xf32>
    %151 = arith.maximumf %149, %150 : vector<1x128xf32>
    %152 = vector.extract_strided_slice %139 {offsets = [4, 0], sizes = [1, 128], strides = [1, 1]} : vector<16x128xf32> to vector<1x128xf32>
    %153 = vector.extract_strided_slice %139 {offsets = [5, 0], sizes = [1, 128], strides = [1, 1]} : vector<16x128xf32> to vector<1x128xf32>
    %154 = arith.maximumf %152, %153 : vector<1x128xf32>
    %155 = arith.addf %154, %41 : vector<1x128xf32>
    %cst_29 = arith.constant 0.000000e+00 : f32
    %156 = vector.broadcast %cst_29 : f32 to vector<1x128xf32>
    %157 = arith.maximumf %155, %156 : vector<1x128xf32>
    %158 = vector.extract_strided_slice %139 {offsets = [6, 0], sizes = [1, 128], strides = [1, 1]} : vector<16x128xf32> to vector<1x128xf32>
    %159 = vector.extract_strided_slice %139 {offsets = [7, 0], sizes = [1, 128], strides = [1, 1]} : vector<16x128xf32> to vector<1x128xf32>
    %160 = arith.maximumf %158, %159 : vector<1x128xf32>
    %161 = arith.addf %160, %41 : vector<1x128xf32>
    %cst_30 = arith.constant 0.000000e+00 : f32
    %162 = vector.broadcast %cst_30 : f32 to vector<1x128xf32>
    %163 = arith.maximumf %161, %162 : vector<1x128xf32>
    %164 = vector.extract_strided_slice %139 {offsets = [8, 0], sizes = [1, 128], strides = [1, 1]} : vector<16x128xf32> to vector<1x128xf32>
    %165 = vector.extract_strided_slice %139 {offsets = [9, 0], sizes = [1, 128], strides = [1, 1]} : vector<16x128xf32> to vector<1x128xf32>
    %166 = arith.maximumf %164, %165 : vector<1x128xf32>
    %167 = arith.addf %166, %41 : vector<1x128xf32>
    %cst_31 = arith.constant 0.000000e+00 : f32
    %168 = vector.broadcast %cst_31 : f32 to vector<1x128xf32>
    %169 = arith.maximumf %167, %168 : vector<1x128xf32>
    %170 = vector.extract_strided_slice %40 {offsets = [4, 0, 0], sizes = [1, 16, 128], strides = [1, 1, 1]} : vector<5x16x128xf32> to vector<1x16x128xf32>
    %171 = vector.shape_cast %170 : vector<1x16x128xf32> to vector<16x128xf32>
    %172 = vector.extract_strided_slice %171 {offsets = [0, 0], sizes = [1, 128], strides = [1, 1]} : vector<16x128xf32> to vector<1x128xf32>
    %173 = vector.extract_strided_slice %171 {offsets = [1, 0], sizes = [1, 128], strides = [1, 1]} : vector<16x128xf32> to vector<1x128xf32>
    %174 = arith.maximumf %172, %173 : vector<1x128xf32>
    %175 = arith.addf %174, %41 : vector<1x128xf32>
    %cst_32 = arith.constant 0.000000e+00 : f32
    %176 = vector.broadcast %cst_32 : f32 to vector<1x128xf32>
    %177 = arith.maximumf %175, %176 : vector<1x128xf32>
    %178 = vector.extract_strided_slice %171 {offsets = [2, 0], sizes = [1, 128], strides = [1, 1]} : vector<16x128xf32> to vector<1x128xf32>
    %179 = vector.extract_strided_slice %171 {offsets = [3, 0], sizes = [1, 128], strides = [1, 1]} : vector<16x128xf32> to vector<1x128xf32>
    %180 = arith.maximumf %178, %179 : vector<1x128xf32>
    %181 = arith.addf %180, %41 : vector<1x128xf32>
    %cst_33 = arith.constant 0.000000e+00 : f32
    %182 = vector.broadcast %cst_33 : f32 to vector<1x128xf32>
    %183 = arith.maximumf %181, %182 : vector<1x128xf32>
    %184 = vector.extract_strided_slice %171 {offsets = [4, 0], sizes = [1, 128], strides = [1, 1]} : vector<16x128xf32> to vector<1x128xf32>
    %185 = vector.extract_strided_slice %171 {offsets = [5, 0], sizes = [1, 128], strides = [1, 1]} : vector<16x128xf32> to vector<1x128xf32>
    %186 = arith.maximumf %184, %185 : vector<1x128xf32>
    %187 = arith.addf %186, %41 : vector<1x128xf32>
    %cst_34 = arith.constant 0.000000e+00 : f32
    %188 = vector.broadcast %cst_34 : f32 to vector<1x128xf32>
    %189 = arith.maximumf %187, %188 : vector<1x128xf32>
    %190 = vector.extract_strided_slice %171 {offsets = [6, 0], sizes = [1, 128], strides = [1, 1]} : vector<16x128xf32> to vector<1x128xf32>
    %191 = vector.extract_strided_slice %171 {offsets = [7, 0], sizes = [1, 128], strides = [1, 1]} : vector<16x128xf32> to vector<1x128xf32>
    %192 = arith.maximumf %190, %191 : vector<1x128xf32>
    %193 = arith.addf %192, %41 : vector<1x128xf32>
    %cst_35 = arith.constant 0.000000e+00 : f32
    %194 = vector.broadcast %cst_35 : f32 to vector<1x128xf32>
    %195 = arith.maximumf %193, %194 : vector<1x128xf32>
    %196 = vector.extract_strided_slice %171 {offsets = [8, 0], sizes = [1, 128], strides = [1, 1]} : vector<16x128xf32> to vector<1x128xf32>
    %197 = vector.extract_strided_slice %171 {offsets = [9, 0], sizes = [1, 128], strides = [1, 1]} : vector<16x128xf32> to vector<1x128xf32>
    %198 = arith.maximumf %196, %197 : vector<1x128xf32>
    %199 = arith.addf %198, %41 : vector<1x128xf32>
    %cst_36 = arith.constant 0.000000e+00 : f32
    %200 = vector.broadcast %cst_36 : f32 to vector<1x128xf32>
    %201 = arith.maximumf %199, %200 : vector<1x128xf32>
    %202 = tpu.concatenate %49, %55, %61, %67, %73, %81, %87, %93, %99, %105, %113, %119, %125, %131, %137, %145 in 1 : vector<1x128xf32>, vector<1x128xf32>, vector<1x128xf32>, vector<1x128xf32>, vector<1x128xf32>, vector<1x128xf32>, vector<1x128xf32>, vector<1x128xf32>, vector<1x128xf32>, vector<1x128xf32>, vector<1x128xf32>, vector<1x128xf32>, vector<1x128xf32>, vector<1x128xf32>, vector<1x128xf32>, vector<1x128xf32> -> vector<1x2048xf32>
    %203 = tpu.concatenate %151, %157, %163, %169, %177, %183, %189, %195, %201 in 1 : vector<1x128xf32>, vector<1x128xf32>, vector<1x128xf32>, vector<1x128xf32>, vector<1x128xf32>, vector<1x128xf32>, vector<1x128xf32>, vector<1x128xf32>, vector<1x128xf32> -> vector<1x1152xf32>
    %204 = tpu.concatenate %202, %203 in 1 : vector<1x2048xf32>, vector<1x1152xf32> -> vector<1x3200xf32>
    %c0_37 = arith.constant 0 : index
    %c0_38 = arith.constant 0 : index
    %205 = vector.load %arg6[%c0_37, %c0_38] : memref<3200x128xf32, #tpu.memory_space<vmem>>, vector<3200x128xf32>
    %cst_39 = arith.constant dense<0.000000e+00> : vector<1x128xf32>
    %206 = tpu.matmul %204, %205, %cst_39 {dimension_numbers = #tpu.dot_dimension_numbers<[1], [0], [0], [1], [0, 0, 1, 1], [], []>} : vector<1x3200xf32>, vector<3200x128xf32>, vector<1x128xf32> -> vector<1x128xf32>
    %c0_40 = arith.constant 0 : index
    %c0_41 = arith.constant 0 : index
    %207 = vector.load %arg7[%c0_40, %c0_41] : memref<1x128xf32, #tpu.memory_space<vmem>>, vector<1x128xf32>
    %208 = arith.addf %206, %207 : vector<1x128xf32>
    %cst_42 = arith.constant 0.000000e+00 : f32
    %209 = vector.broadcast %cst_42 : f32 to vector<1x128xf32>
    %210 = arith.maximumf %208, %209 : vector<1x128xf32>
    %c0_43 = arith.constant 0 : index
    %c0_44 = arith.constant 0 : index
    %211 = vector.load %arg8[%c0_43, %c0_44] : memref<128x128xf32, #tpu.memory_space<vmem>>, vector<128x128xf32>
    %cst_45 = arith.constant dense<0.000000e+00> : vector<1x128xf32>
    %212 = tpu.matmul %210, %211, %cst_45 {dimension_numbers = #tpu.dot_dimension_numbers<[1], [0], [0], [1], [0, 0, 1, 1], [], []>} : vector<1x128xf32>, vector<128x128xf32>, vector<1x128xf32> -> vector<1x128xf32>
    %c0_46 = arith.constant 0 : index
    %c0_47 = arith.constant 0 : index
    %213 = vector.load %arg9[%c0_46, %c0_47] : memref<1x128xf32, #tpu.memory_space<vmem>>, vector<1x128xf32>
    %214 = arith.addf %212, %213 : vector<1x128xf32>
    %c0_48 = arith.constant 0 : index
    %c0_49 = arith.constant 0 : index
    %c0_50 = arith.constant 0 : index
    %215 = vector.load %arg10[%c0_48, %c0_49, %c0_50] : memref<1x1x128xf32, #tpu.memory_space<vmem>>, vector<1x1x128xf32>
    %216 = vector.shape_cast %215 : vector<1x1x128xf32> to vector<1x128xf32>
    %217 = vector.shape_cast %214 : vector<1x128xf32> to vector<1x1x128xf32>
    tpu.vector_store %arg10[%c0_48, %c0_49, %c0_50], %217 {strides = array<i32>} : memref<1x1x128xf32, #tpu.memory_space<vmem>>, vector<1x1x128xf32>,
    return
  }
  func.func @transform_0(%arg0: i32) -> (i32, i32, i32) {
    %c0_i32 = arith.constant 0 : i32
    %c0_i32_0 = arith.constant 0 : i32
    %c0_i32_1 = arith.constant 0 : i32
    return %arg0, %c0_i32, %c0_i32_0 : i32, i32, i32
  }
  func.func @transform_1(%arg0: i32) -> (i32, i32) {
    %c0_i32 = arith.constant 0 : i32
    %c0_i32_0 = arith.constant 0 : i32
    %c0_i32_1 = arith.constant 0 : i32
    return %c0_i32, %c0_i32_0 : i32, i32
  }
  func.func @transform_2(%arg0: i32) -> (i32, i32) {
    %c0_i32 = arith.constant 0 : i32
    %c0_i32_0 = arith.constant 0 : i32
    %c0_i32_1 = arith.constant 0 : i32
    return %c0_i32, %c0_i32_0 : i32, i32
  }
  func.func @transform_3(%arg0: i32) -> (i32, i32) {
    %c0_i32 = arith.constant 0 : i32
    %c0_i32_0 = arith.constant 0 : i32
    %c0_i32_1 = arith.constant 0 : i32
    return %c0_i32, %c0_i32_0 : i32, i32
  }
  func.func @transform_4(%arg0: i32) -> (i32, i32) {
    %c0_i32 = arith.constant 0 : i32
    %c0_i32_0 = arith.constant 0 : i32
    %c0_i32_1 = arith.constant 0 : i32
    return %c0_i32, %c0_i32_0 : i32, i32
  }
  func.func @transform_5(%arg0: i32) -> (i32, i32) {
    %c0_i32 = arith.constant 0 : i32
    %c0_i32_0 = arith.constant 0 : i32
    %c0_i32_1 = arith.constant 0 : i32
    return %c0_i32, %c0_i32_0 : i32, i32
  }
  func.func @transform_6(%arg0: i32) -> (i32, i32) {
    %c0_i32 = arith.constant 0 : i32
    %c0_i32_0 = arith.constant 0 : i32
    %c0_i32_1 = arith.constant 0 : i32
    return %c0_i32, %c0_i32_0 : i32, i32
  }
  func.func @transform_7(%arg0: i32) -> (i32, i32) {
    %c0_i32 = arith.constant 0 : i32
    %c0_i32_0 = arith.constant 0 : i32
    %c0_i32_1 = arith.constant 0 : i32
    return %c0_i32, %c0_i32_0 : i32, i32
  }
  func.func @transform_8(%arg0: i32) -> (i32, i32) {
    %c0_i32 = arith.constant 0 : i32
    %c0_i32_0 = arith.constant 0 : i32
    %c0_i32_1 = arith.constant 0 : i32
    return %c0_i32, %c0_i32_0 : i32, i32
  }
  func.func @transform_9(%arg0: i32) -> (i32, i32, i32) {
    %c0_i32 = arith.constant 0 : i32
    %c0_i32_0 = arith.constant 0 : i32
    %c0_i32_1 = arith.constant 0 : i32
    return %arg0, %c0_i32, %c0_i32_0 : i32, i32, i32
  }
}

</mosaic_0001>

<llo_original>
// kernel: simple_conv_net_forward.1
$region0: #{simple_conv_net_forward.1}
  #allocation0 [shape = 'u32[]', space=smem, size = 0x4, offset = 0x4, fixed_abs, tag = 'smem constant byte address 0x4 - core index']
  #allocation1 [shape = 'u32[144,128]{1,0:T(1,128)}', space=vmem, size = 0x12000, scoped, tag = 'internal scratch']
  %s0 = inlined_call_operand.vmem [shape: f32[2,1248,9], index: 0, kind: input, shape index: {}]
  %s1 = inlined_call_operand.vmem [shape: f32[9,128], index: 1, kind: input, shape index: {}]
  %s2 = inlined_call_operand.vmem [shape: f32[1,128], index: 2, kind: input, shape index: {}]
  %s3 = inlined_call_operand.vmem [shape: f32[1152,128], index: 3, kind: input, shape index: {}]
  %s4 = inlined_call_operand.vmem [shape: f32[1,128], index: 4, kind: input, shape index: {}]
  %s5 = inlined_call_operand.vmem [shape: f32[3200,128], index: 5, kind: input, shape index: {}]
  %s6 = inlined_call_operand.vmem [shape: f32[1,128], index: 6, kind: input, shape index: {}]
  %s7 = inlined_call_operand.vmem [shape: f32[128,128], index: 7, kind: input, shape index: {}]
  %s8 = inlined_call_operand.vmem [shape: f32[1,128], index: 8, kind: input, shape index: {}]
  %s9 = inlined_call_operand.hbm [shape: f32[2,1,128], index: 9, kind: output, shape index: {}]
  %s10 = sld [smem:[#allocation0]]
  $region69: #{simple_conv_net_forward.1} parent=0
    _
  %s12 = ssub.s32 1, %s10
  %s13 = scalar_select 0, %s12, %s10
  $region1: #{simple_conv_net_forward.1} parent=0
    #allocation2 [shape = 'u8[1024]{0}', space=vmem, size = 0x400, scoped, tag = 'output window, operand 0']
    #allocation3 [shape = 's32[2]{0}', space=sflag, size = 0x8, scoped, tag = 'scoped memory for simple_conv_net_forward.1']
    %14 = vsyncpa [#allocation3], 0
    %s15 = scalar_lea.sflag [#allocation3], 1
    %16 = vsyncpa %s15, 0
    loop: start=0, step=1, limit=4
    $region2: #{simple_conv_net_forward.1} parent=1 // loop_pre_header
      _
    $region3: #{simple_conv_net_forward.1} parent=1 // loop_header
      %s18 = sphi 0, %s22
      %p19 = scmp.ge.s32.totalorder %s18, 4
      %s28 = sphi 0, %s30
      %s31 = sphi 0, %s28
      %s32 = sphi 0, %s31
      %s48 = sphi 0, %s32
      %s52 = sphi 0, %s52
      %s54 = sphi 0, %s52
      %s55 = sphi 0, %s54
      %s69 = sphi 0, %s55
      %s73 = sphi 0, %s73
      %s75 = sphi 0, %s73
      %s76 = sphi 0, %s75
      %s90 = sphi 0, %s76
      %s94 = sphi 0, %s94
      %s96 = sphi 0, %s94
      %s97 = sphi 0, %s96
      %s111 = sphi 0, %s97
      %s115 = sphi 0, %s115
      %s117 = sphi 0, %s115
      %s118 = sphi 0, %s117
      %s132 = sphi 0, %s118
      %s136 = sphi 0, %s136
      %s138 = sphi 0, %s136
      %s139 = sphi 0, %s138
      %s153 = sphi 0, %s139
      %s157 = sphi 0, %s157
      %s159 = sphi 0, %s157
      %s160 = sphi 0, %s159
      %s174 = sphi 0, %s160
      %s178 = sphi 0, %s178
      %s180 = sphi 0, %s178
      %s181 = sphi 0, %s180
      %s195 = sphi 0, %s181
      %s199 = sphi 0, %s199
      %s201 = sphi 0, %s199
      %s202 = sphi 0, %s201
      %s216 = sphi 0, %s202
      %s222 = sphi 0, %s224
      %s225 = sphi 0, %s222
      %s226 = sphi 0, %s225
      %s242 = sphi 0, %s226
    $region4: #{simple_conv_net_forward.1} parent=1 // loop_header_branch
      %21 = sbr.rel (%p19) target = $region8
    $region5: #{simple_conv_net_forward.1} parent=1 // loop_body
      %s23 = ssub.s32 %s18, 1
      %s24 = ssub.s32 %s18, 2
      %s25 = sadd.s32 %s18, 1
      %s26 = ssub.s32 %s18, %s25
      %p27 = scmp.eq.s32.totalorder %s26, 0
      %s29 = sadd.s32 %s28, 1
      %s30 = scalar_select %p27, %s28, %s29
      %p33 = pneg %p27
      %p34 = scmp.eq.s32.totalorder %s18, 1
      %p35 = por %p33, %p34
      %p36 = scmp.ne.s32.totalorder %s28, %s31
      %p37 = scmp.eq.s32.totalorder %s18, 0
      %p38 = por %p36, %p37
      %p39 = scmp.ne.s32.totalorder %s28, %s31
      %p40 = scmp.eq.s32.totalorder %s23, 1
      %p41 = por %p39, %p40
      %p42 = scmp.ne.s32.totalorder %s31, %s32
      %p43 = scmp.eq.s32.totalorder %s23, 0
      %p44 = por %p42, %p43
      %p45 = scmp.ne.s32.totalorder %s31, %s32
      %p46 = scmp.eq.s32.totalorder %s24, 1
      %p47 = por %p45, %p46
      %p49 = scmp.ne.s32.totalorder %s32, %s48
      %p50 = scmp.eq.s32.totalorder %s24, 0
      %p51 = por %p49, %p50
      %s53 = sadd.s32 %s52, 1
      %p56 = scmp.eq.s32.totalorder %s18, 1
      %p57 = scmp.ne.s32.totalorder %s52, %s54
      %p58 = scmp.eq.s32.totalorder %s18, 0
      %p59 = por %p57, %p58
      %p60 = scmp.ne.s32.totalorder %s52, %s54
      %p61 = scmp.eq.s32.totalorder %s23, 1
      %p62 = por %p60, %p61
      %p63 = scmp.ne.s32.totalorder %s54, %s55
      %p64 = scmp.eq.s32.totalorder %s23, 0
      %p65 = por %p63, %p64
      %p66 = scmp.ne.s32.totalorder %s54, %s55
      %p67 = scmp.eq.s32.totalorder %s24, 1
      %p68 = por %p66, %p67
      %p70 = scmp.ne.s32.totalorder %s55, %s69
      %p71 = scmp.eq.s32.totalorder %s24, 0
      %p72 = por %p70, %p71
      %s74 = sadd.s32 %s73, 1
      %p77 = scmp.eq.s32.totalorder %s18, 1
      %p78 = scmp.ne.s32.totalorder %s73, %s75
      %p79 = scmp.eq.s32.totalorder %s18, 0
      %p80 = por %p78, %p79
      %p81 = scmp.ne.s32.totalorder %s73, %s75
      %p82 = scmp.eq.s32.totalorder %s23, 1
      %p83 = por %p81, %p82
      %p84 = scmp.ne.s32.totalorder %s75, %s76
      %p85 = scmp.eq.s32.totalorder %s23, 0
      %p86 = por %p84, %p85
      %p87 = scmp.ne.s32.totalorder %s75, %s76
      %p88 = scmp.eq.s32.totalorder %s24, 1
      %p89 = por %p87, %p88
      %p91 = scmp.ne.s32.totalorder %s76, %s90
      %p92 = scmp.eq.s32.totalorder %s24, 0
      %p93 = por %p91, %p92
      %s95 = sadd.s32 %s94, 1
      %p98 = scmp.eq.s32.totalorder %s18, 1
      %p99 = scmp.ne.s32.totalorder %s94, %s96
      %p100 = scmp.eq.s32.totalorder %s18, 0
      %p101 = por %p99, %p100
      %p102 = scmp.ne.s32.totalorder %s94, %s96
      %p103 = scmp.eq.s32.totalorder %s23, 1
      %p104 = por %p102, %p103
      %p105 = scmp.ne.s32.totalorder %s96, %s97
      %p106 = scmp.eq.s32.totalorder %s23, 0
      %p107 = por %p105, %p106
      %p108 = scmp.ne.s32.totalorder %s96, %s97
      %p109 = scmp.eq.s32.totalorder %s24, 1
      %p110 = por %p108, %p109
      %p112 = scmp.ne.s32.totalorder %s97, %s111
      %p113 = scmp.eq.s32.totalorder %s24, 0
      %p114 = por %p112, %p113
      %s116 = sadd.s32 %s115, 1
      %p119 = scmp.eq.s32.totalorder %s18, 1
      %p120 = scmp.ne.s32.totalorder %s115, %s117
      %p121 = scmp.eq.s32.totalorder %s18, 0
      %p122 = por %p120, %p121
      %p123 = scmp.ne.s32.totalorder %s115, %s117
      %p124 = scmp.eq.s32.totalorder %s23, 1
      %p125 = por %p123, %p124
      %p126 = scmp.ne.s32.totalorder %s117, %s118
      %p127 = scmp.eq.s32.totalorder %s23, 0
      %p128 = por %p126, %p127
      %p129 = scmp.ne.s32.totalorder %s117, %s118
      %p130 = scmp.eq.s32.totalorder %s24, 1
      %p131 = por %p129, %p130
      %p133 = scmp.ne.s32.totalorder %s118, %s132
      %p134 = scmp.eq.s32.totalorder %s24, 0
      %p135 = por %p133, %p134
      %s137 = sadd.s32 %s136, 1
      %p140 = scmp.eq.s32.totalorder %s18, 1
      %p141 = scmp.ne.s32.totalorder %s136, %s138
      %p142 = scmp.eq.s32.totalorder %s18, 0
      %p143 = por %p141, %p142
      %p144 = scmp.ne.s32.totalorder %s136, %s138
      %p145 = scmp.eq.s32.totalorder %s23, 1
      %p146 = por %p144, %p145
      %p147 = scmp.ne.s32.totalorder %s138, %s139
      %p148 = scmp.eq.s32.totalorder %s23, 0
      %p149 = por %p147, %p148
      %p150 = scmp.ne.s32.totalorder %s138, %s139
      %p151 = scmp.eq.s32.totalorder %s24, 1
      %p152 = por %p150, %p151
      %p154 = scmp.ne.s32.totalorder %s139, %s153
      %p155 = scmp.eq.s32.totalorder %s24, 0
      %p156 = por %p154, %p155
      %s158 = sadd.s32 %s157, 1
      %p161 = scmp.eq.s32.totalorder %s18, 1
      %p162 = scmp.ne.s32.totalorder %s157, %s159
      %p163 = scmp.eq.s32.totalorder %s18, 0
      %p164 = por %p162, %p163
      %p165 = scmp.ne.s32.totalorder %s157, %s159
      %p166 = scmp.eq.s32.totalorder %s23, 1
      %p167 = por %p165, %p166
      %p168 = scmp.ne.s32.totalorder %s159, %s160
      %p169 = scmp.eq.s32.totalorder %s23, 0
      %p170 = por %p168, %p169
      %p171 = scmp.ne.s32.totalorder %s159, %s160
      %p172 = scmp.eq.s32.totalorder %s24, 1
      %p173 = por %p171, %p172
      %p175 = scmp.ne.s32.totalorder %s160, %s174
      %p176 = scmp.eq.s32.totalorder %s24, 0
      %p177 = por %p175, %p176
      %s179 = sadd.s32 %s178, 1
      %p182 = scmp.eq.s32.totalorder %s18, 1
      %p183 = scmp.ne.s32.totalorder %s178, %s180
      %p184 = scmp.eq.s32.totalorder %s18, 0
      %p185 = por %p183, %p184
      %p186 = scmp.ne.s32.totalorder %s178, %s180
      %p187 = scmp.eq.s32.totalorder %s23, 1
      %p188 = por %p186, %p187
      %p189 = scmp.ne.s32.totalorder %s180, %s181
      %p190 = scmp.eq.s32.totalorder %s23, 0
      %p191 = por %p189, %p190
      %p192 = scmp.ne.s32.totalorder %s180, %s181
      %p193 = scmp.eq.s32.totalorder %s24, 1
      %p194 = por %p192, %p193
      %p196 = scmp.ne.s32.totalorder %s181, %s195
      %p197 = scmp.eq.s32.totalorder %s24, 0
      %p198 = por %p196, %p197
      %s200 = sadd.s32 %s199, 1
      %p203 = scmp.eq.s32.totalorder %s18, 1
      %p204 = scmp.ne.s32.totalorder %s199, %s201
      %p205 = scmp.eq.s32.totalorder %s18, 0
      %p206 = por %p204, %p205
      %p207 = scmp.ne.s32.totalorder %s199, %s201
      %p208 = scmp.eq.s32.totalorder %s23, 1
      %p209 = por %p207, %p208
      %p210 = scmp.ne.s32.totalorder %s201, %s202
      %p211 = scmp.eq.s32.totalorder %s23, 0
      %p212 = por %p210, %p211
      %p213 = scmp.ne.s32.totalorder %s201, %s202
      %p214 = scmp.eq.s32.totalorder %s24, 1
      %p215 = por %p213, %p214
      %p217 = scmp.ne.s32.totalorder %s202, %s216
      %p218 = scmp.eq.s32.totalorder %s24, 0
      %p219 = por %p217, %p218
      %s220 = ssub.s32 %s18, %s25
      %p221 = scmp.eq.s32.totalorder %s220, 0
      %s223 = sadd.s32 %s222, 1
      %s224 = scalar_select %p221, %s222, %s223
      %p227 = pneg %p221
      %p228 = scmp.eq.s32.totalorder %s18, 1
      %p229 = por %p227, %p228
      %p230 = scmp.ne.s32.totalorder %s222, %s225
      %p231 = scmp.eq.s32.totalorder %s18, 0
      %p232 = por %p230, %p231
      %p233 = scmp.ne.s32.totalorder %s222, %s225
      %p234 = scmp.eq.s32.totalorder %s23, 1
      %p235 = por %p233, %p234
      %p236 = scmp.ne.s32.totalorder %s225, %s226
      %p237 = scmp.eq.s32.totalorder %s23, 0
      %p238 = por %p236, %p237
      %p239 = scmp.ne.s32.totalorder %s225, %s226
      %p240 = scmp.eq.s32.totalorder %s24, 1
      %p241 = por %p239, %p240
      %p243 = scmp.ne.s32.totalorder %s226, %s242
      %p244 = scmp.eq.s32.totalorder %s24, 0
      %p245 = por %p243, %p244
      %p246 = scmp.le.s32.totalorder 1, %s18
      %p247 = scmp.lt.s32.totalorder %s18, 3
      %p248 = pnand %p246, %p247
      %p249 = pneg %p248
      // Predicated region
      $region9: #{simple_conv_net_forward.1} parent=5 // pred_check
        _
      $region10: #{simple_conv_net_forward.1} parent=5 // pred_check_branch
        %251 = sbr.rel (%p248) target = $region12
      $region11: #{simple_conv_net_forward.1} parent=5 // pred_region
        %s252 = ssub.s32 %s18, 1
        // Predicated region
        $region13: #{simple_conv_net_forward.1} parent=11 // pred_check
          %p253 = pneg %p65
        $region14: #{simple_conv_net_forward.1} parent=11 // pred_check_branch
          %255 = sbr.rel (%p253) target = $region16
        $region15: #{simple_conv_net_forward.1} parent=11 // pred_region
          _
        $region16: #{simple_conv_net_forward.1} parent=11 // pred_fallthru
          _
        // Predicated region
        $region17: #{simple_conv_net_forward.1} parent=11 // pred_check
          %p256 = pneg %p86
        $region18: #{simple_conv_net_forward.1} parent=11 // pred_check_branch
          %258 = sbr.rel (%p256) target = $region20
        $region19: #{simple_conv_net_forward.1} parent=11 // pred_region
          _
        $region20: #{simple_conv_net_forward.1} parent=11 // pred_fallthru
          _
        // Predicated region
        $region21: #{simple_conv_net_forward.1} parent=11 // pred_check
          %p259 = pneg %p107
        $region22: #{simple_conv_net_forward.1} parent=11 // pred_check_branch
          %261 = sbr.rel (%p259) target = $region24
        $region23: #{simple_conv_net_forward.1} parent=11 // pred_region
          _
        $region24: #{simple_conv_net_forward.1} parent=11 // pred_fallthru
          _
        // Predicated region
        $region25: #{simple_conv_net_forward.1} parent=11 // pred_check
          %p262 = pneg %p128
        $region26: #{simple_conv_net_forward.1} parent=11 // pred_check_branch
          %264 = sbr.rel (%p262) target = $region28
        $region27: #{simple_conv_net_forward.1} parent=11 // pred_region
          _
        $region28: #{simple_conv_net_forward.1} parent=11 // pred_fallthru
          _
        // Predicated region
        $region29: #{simple_conv_net_forward.1} parent=11 // pred_check
          %p265 = pneg %p149
        $region30: #{simple_conv_net_forward.1} parent=11 // pred_check_branch
          %267 = sbr.rel (%p265) target = $region32
        $region31: #{simple_conv_net_forward.1} parent=11 // pred_region
          _
        $region32: #{simple_conv_net_forward.1} parent=11 // pred_fallthru
          _
        // Predicated region
        $region33: #{simple_conv_net_forward.1} parent=11 // pred_check
          %p268 = pneg %p170
        $region34: #{simple_conv_net_forward.1} parent=11 // pred_check_branch
          %270 = sbr.rel (%p268) target = $region36
        $region35: #{simple_conv_net_forward.1} parent=11 // pred_region
          _
        $region36: #{simple_conv_net_forward.1} parent=11 // pred_fallthru
          _
        // Predicated region
        $region37: #{simple_conv_net_forward.1} parent=11 // pred_check
          %p271 = pneg %p191
        $region38: #{simple_conv_net_forward.1} parent=11 // pred_check_branch
          %273 = sbr.rel (%p271) target = $region40
        $region39: #{simple_conv_net_forward.1} parent=11 // pred_region
          _
        $region40: #{simple_conv_net_forward.1} parent=11 // pred_fallthru
          _
        // Predicated region
        $region41: #{simple_conv_net_forward.1} parent=11 // pred_check
          %p274 = pneg %p212
        $region42: #{simple_conv_net_forward.1} parent=11 // pred_check_branch
          %276 = sbr.rel (%p274) target = $region44
        $region43: #{simple_conv_net_forward.1} parent=11 // pred_region
          _
        $region44: #{simple_conv_net_forward.1} parent=11 // pred_fallthru
          _
      $region12: #{simple_conv_net_forward.1} parent=5 // pred_fallthru
        _
      %p277 = scmp.lt.s32.totalorder %s18, 2
      // Predicated region
      $region45: #{simple_conv_net_forward.1} parent=5 // pred_check
        %p278 = pneg %p277
      $region46: #{simple_conv_net_forward.1} parent=5 // pred_check_branch
        %280 = sbr.rel (%p278) target = $region48
      $region47: #{simple_conv_net_forward.1} parent=5 // pred_region
        // Predicated region
        $region49: #{simple_conv_net_forward.1} parent=47 // pred_check
          %p281 = pneg %p38
        $region50: #{simple_conv_net_forward.1} parent=47 // pred_check_branch
          %283 = sbr.rel (%p281) target = $region52
        $region51: #{simple_conv_net_forward.1} parent=47 // pred_region
          %p284 = scmp.lt.s32.totalorder %s18, 1
          %s285 = scalar_select %p284, %s18, 1
          %s286 = smul.addr %s285, 156
          %s287 = smul.addr %s286, 8
          %s288 = scalar_lea.vmem %s0, %s287
        $region52: #{simple_conv_net_forward.1} parent=47 // pred_fallthru
          _
      $region48: #{simple_conv_net_forward.1} parent=5 // pred_fallthru
        _
      %p289 = scmp.le.s32.totalorder 1, %s18
      %p290 = scmp.lt.s32.totalorder %s18, 3
      %p291 = pnand %p289, %p290
      %p292 = pneg %p291
      // Predicated region
      $region53: #{simple_conv_net_forward.1} parent=5 // pred_check
        _
      $region54: #{simple_conv_net_forward.1} parent=5 // pred_check_branch
        %294 = sbr.rel (%p291) target = $region56
      $region55: #{simple_conv_net_forward.1} parent=5 // pred_region
        %s295 = ssub.s32 %s18, 1
        %p296 = scmp.lt.s32.totalorder %s23, 1
        %s297 = scalar_select %p296, %s23, 1
        %s298 = smul.addr %s297, 156
        %s299 = smul.addr %s298, 8
        %s300 = scalar_lea.vmem %s0, %s299
        %p301 = pneg %p44
        %p302 = pneg %p41
        %p303 = pneg %p65
        %p304 = pneg %p62
        %p305 = pneg %p86
        %p306 = pneg %p83
        %p307 = pneg %p107
        %p308 = pneg %p104
        %p309 = pneg %p128
        %p310 = pneg %p125
        %p311 = pneg %p149
        %p312 = pneg %p146
        %p313 = pneg %p170
        %p314 = pneg %p167
        %p315 = pneg %p191
        %p316 = pneg %p188
        %p317 = pneg %p212
        %p318 = pneg %p209
        %p319 = pneg %p238
        %p320 = pneg %p235
        %s321 = sand.u32 %s225, 1
        %s322 = scalar_lea.sflag [#allocation3], %s321
        %s323 = sand.u32 %s225, 1
        %s324 = scalar_lea.vmem [#allocation2], %s323
        %p325 = scmp.lt.s32.totalorder %s23, 1
        %s326 = scalar_select %p325, %s23, 1
        %s327 = smul.addr %s326, 156
        %s328 = smul.addr %s327, 8
        %s329 = scalar_lea.vmem %s0, %s328
        %v330 = vld [vmem:[%s329] sm:$0xff]
        %v331 = vld [vmem:[%s329 + $0x8] sm:$0xff]
        %v332 = vld [vmem:[%s329 + $0x10] sm:$0xff]
        %v333 = vld [vmem:[%s329 + $0x18] sm:$0xff]
        %v334 = vld [vmem:[%s329 + $0x20] sm:$0xff]
        %v335 = vld [vmem:[%s329 + $0x28] sm:$0xff]
        %v336 = vld [vmem:[%s329 + $0x30] sm:$0xff]
        %v337 = vld [vmem:[%s329 + $0x38] sm:$0xff]
        %v338 = vld [vmem:[%s329 + $0x40] sm:$0xff]
        %v339 = vld [vmem:[%s329 + $0x48] sm:$0xff]
        %v340 = vld [vmem:[%s329 + $0x50] sm:$0xff]
        %v341 = vld [vmem:[%s329 + $0x58] sm:$0xff]
        %v342 = vld [vmem:[%s329 + $0x60] sm:$0xff]
        %v343 = vld [vmem:[%s329 + $0x68] sm:$0xff]
        %v344 = vld [vmem:[%s329 + $0x70] sm:$0xff]
        %v345 = vld [vmem:[%s329 + $0x78] sm:$0xff]
        %v346 = vld [vmem:[%s329 + $0x80] sm:$0xff]
        %v347 = vld [vmem:[%s329 + $0x88] sm:$0xff]
        %v348 = vld [vmem:[%s329 + $0x90] sm:$0xff]
        %v349 = vld [vmem:[%s329 + $0x98] sm:$0xff]
        %v350 = vld [vmem:[%s329 + $0xa0] sm:$0xff]
        %v351 = vld [vmem:[%s329 + $0xa8] sm:$0xff]
        %v352 = vld [vmem:[%s329 + $0xb0] sm:$0xff]
        %v353 = vld [vmem:[%s329 + $0xb8] sm:$0xff]
        %v354 = vld [vmem:[%s329 + $0xc0] sm:$0xff]
        %v355 = vld [vmem:[%s329 + $0xc8] sm:$0xff]
        %v356 = vld [vmem:[%s329 + $0xd0] sm:$0xff]
        %v357 = vld [vmem:[%s329 + $0xd8] sm:$0xff]
        %v358 = vld [vmem:[%s329 + $0xe0] sm:$0xff]
        %v359 = vld [vmem:[%s329 + $0xe8] sm:$0xff]
        %v360 = vld [vmem:[%s329 + $0xf0] sm:$0xff]
        %v361 = vld [vmem:[%s329 + $0xf8] sm:$0xff]
        %v362 = vld [vmem:[%s329 + $0x100] sm:$0xff]
        %v363 = vld [vmem:[%s329 + $0x108] sm:$0xff]
        %v364 = vld [vmem:[%s329 + $0x110] sm:$0xff]
        %v365 = vld [vmem:[%s329 + $0x118] sm:$0xff]
        %v366 = vld [vmem:[%s329 + $0x120] sm:$0xff]
        %v367 = vld [vmem:[%s329 + $0x128] sm:$0xff]
        %v368 = vld [vmem:[%s329 + $0x130] sm:$0xff]
        %v369 = vld [vmem:[%s329 + $0x138] sm:$0xff]
        %v370 = vld [vmem:[%s329 + $0x140] sm:$0xff]
        %v371 = vld [vmem:[%s329 + $0x148] sm:$0xff]
        %v372 = vld [vmem:[%s329 + $0x150] sm:$0xff]
        %v373 = vld [vmem:[%s329 + $0x158] sm:$0xff]
        %v374 = vld [vmem:[%s329 + $0x160] sm:$0xff]
        %v375 = vld [vmem:[%s329 + $0x168] sm:$0xff]
        %v376 = vld [vmem:[%s329 + $0x170] sm:$0xff]
        %v377 = vld [vmem:[%s329 + $0x178] sm:$0xff]
        %v378 = vld [vmem:[%s329 + $0x180] sm:$0xff]
        %v379 = vld [vmem:[%s329 + $0x188] sm:$0xff]
        %v380 = vld [vmem:[%s329 + $0x190] sm:$0xff]
        %v381 = vld [vmem:[%s329 + $0x198] sm:$0xff]
        %v382 = vld [vmem:[%s329 + $0x1a0] sm:$0xff]
        %v383 = vld [vmem:[%s329 + $0x1a8] sm:$0xff]
        %v384 = vld [vmem:[%s329 + $0x1b0] sm:$0xff]
        %v385 = vld [vmem:[%s329 + $0x1b8] sm:$0xff]
        %v386 = vld [vmem:[%s329 + $0x1c0] sm:$0xff]
        %v387 = vld [vmem:[%s329 + $0x1c8] sm:$0xff]
        %v388 = vld [vmem:[%s329 + $0x1d0] sm:$0xff]
        %v389 = vld [vmem:[%s329 + $0x1d8] sm:$0xff]
        %v390 = vld [vmem:[%s329 + $0x1e0] sm:$0xff]
        %v391 = vld [vmem:[%s329 + $0x1e8] sm:$0xff]
        %v392 = vld [vmem:[%s329 + $0x1f0] sm:$0xff]
        %v393 = vld [vmem:[%s329 + $0x1f8] sm:$0xff]
        %v394 = vld [vmem:[%s329 + $0x200] sm:$0xff]
        %v395 = vld [vmem:[%s329 + $0x208] sm:$0xff]
        %v396 = vld [vmem:[%s329 + $0x210] sm:$0xff]
        %v397 = vld [vmem:[%s329 + $0x218] sm:$0xff]
        %v398 = vld [vmem:[%s329 + $0x220] sm:$0xff]
        %v399 = vld [vmem:[%s329 + $0x228] sm:$0xff]
        %v400 = vld [vmem:[%s329 + $0x230] sm:$0xff]
        %v401 = vld [vmem:[%s329 + $0x238] sm:$0xff]
        %v402 = vld [vmem:[%s329 + $0x240] sm:$0xff]
        %v403 = vld [vmem:[%s329 + $0x248] sm:$0xff]
        %v404 = vld [vmem:[%s329 + $0x250] sm:$0xff]
        %v405 = vld [vmem:[%s329 + $0x258] sm:$0xff]
        %v406 = vld [vmem:[%s329 + $0x260] sm:$0xff]
        %v407 = vld [vmem:[%s329 + $0x268] sm:$0xff]
        %v408 = vld [vmem:[%s329 + $0x270] sm:$0xff]
        %v409 = vld [vmem:[%s329 + $0x278] sm:$0xff]
        %v410 = vld [vmem:[%s329 + $0x280] sm:$0xff]
        %v411 = vld [vmem:[%s329 + $0x288] sm:$0xff]
        %v412 = vld [vmem:[%s329 + $0x290] sm:$0xff]
        %v413 = vld [vmem:[%s329 + $0x298] sm:$0xff]
        %v414 = vld [vmem:[%s329 + $0x2a0] sm:$0xff]
        %v415 = vld [vmem:[%s329 + $0x2a8] sm:$0xff]
        %v416 = vld [vmem:[%s329 + $0x2b0] sm:$0xff]
        %v417 = vld [vmem:[%s329 + $0x2b8] sm:$0xff]
        %v418 = vld [vmem:[%s329 + $0x2c0] sm:$0xff]
        %v419 = vld [vmem:[%s329 + $0x2c8] sm:$0xff]
        %v420 = vld [vmem:[%s329 + $0x2d0] sm:$0xff]
        %v421 = vld [vmem:[%s329 + $0x2d8] sm:$0xff]
        %v422 = vld [vmem:[%s329 + $0x2e0] sm:$0xff]
        %v423 = vld [vmem:[%s329 + $0x2e8] sm:$0xff]
        %v424 = vld [vmem:[%s329 + $0x2f0] sm:$0xff]
        %v425 = vld [vmem:[%s329 + $0x2f8] sm:$0xff]
        %v426 = vld [vmem:[%s329 + $0x300] sm:$0xff]
        %v427 = vld [vmem:[%s329 + $0x308] sm:$0xff]
        %v428 = vld [vmem:[%s329 + $0x310] sm:$0xff]
        %v429 = vld [vmem:[%s329 + $0x318] sm:$0xff]
        %v430 = vld [vmem:[%s329 + $0x320] sm:$0xff]
        %v431 = vld [vmem:[%s329 + $0x328] sm:$0xff]
        %v432 = vld [vmem:[%s329 + $0x330] sm:$0xff]
        %v433 = vld [vmem:[%s329 + $0x338] sm:$0xff]
        %v434 = vld [vmem:[%s329 + $0x340] sm:$0xff]
        %v435 = vld [vmem:[%s329 + $0x348] sm:$0xff]
        %v436 = vld [vmem:[%s329 + $0x350] sm:$0xff]
        %v437 = vld [vmem:[%s329 + $0x358] sm:$0xff]
        %v438 = vld [vmem:[%s329 + $0x360] sm:$0xff]
        %v439 = vld [vmem:[%s329 + $0x368] sm:$0xff]
        %v440 = vld [vmem:[%s329 + $0x370] sm:$0xff]
        %v441 = vld [vmem:[%s329 + $0x378] sm:$0xff]
        %v442 = vld [vmem:[%s329 + $0x380] sm:$0xff]
        %v443 = vld [vmem:[%s329 + $0x388] sm:$0xff]
        %v444 = vld [vmem:[%s329 + $0x390] sm:$0xff]
        %v445 = vld [vmem:[%s329 + $0x398] sm:$0xff]
        %v446 = vld [vmem:[%s329 + $0x3a0] sm:$0xff]
        %v447 = vld [vmem:[%s329 + $0x3a8] sm:$0xff]
        %v448 = vld [vmem:[%s329 + $0x3b0] sm:$0xff]
        %v449 = vld [vmem:[%s329 + $0x3b8] sm:$0xff]
        %v450 = vld [vmem:[%s329 + $0x3c0] sm:$0xff]
        %v451 = vld [vmem:[%s329 + $0x3c8] sm:$0xff]
        %v452 = vld [vmem:[%s329 + $0x3d0] sm:$0xff]
        %v453 = vld [vmem:[%s329 + $0x3d8] sm:$0xff]
        %v454 = vld [vmem:[%s329 + $0x3e0] sm:$0xff]
        %v455 = vld [vmem:[%s329 + $0x3e8] sm:$0xff]
        %v456 = vld [vmem:[%s329 + $0x3f0] sm:$0xff]
        %v457 = vld [vmem:[%s329 + $0x3f8] sm:$0xff]
        %v458 = vld [vmem:[%s329 + $0x400] sm:$0xff]
        %v459 = vld [vmem:[%s329 + $0x408] sm:$0xff]
        %v460 = vld [vmem:[%s329 + $0x410] sm:$0xff]
        %v461 = vld [vmem:[%s329 + $0x418] sm:$0xff]
        %v462 = vld [vmem:[%s329 + $0x420] sm:$0xff]
        %v463 = vld [vmem:[%s329 + $0x428] sm:$0xff]
        %v464 = vld [vmem:[%s329 + $0x430] sm:$0xff]
        %v465 = vld [vmem:[%s329 + $0x438] sm:$0xff]
        %v466 = vld [vmem:[%s329 + $0x440] sm:$0xff]
        %v467 = vld [vmem:[%s329 + $0x448] sm:$0xff]
        %v468 = vld [vmem:[%s329 + $0x450] sm:$0xff]
        %v469 = vld [vmem:[%s329 + $0x458] sm:$0xff]
        %v470 = vld [vmem:[%s329 + $0x460] sm:$0xff]
        %v471 = vld [vmem:[%s329 + $0x468] sm:$0xff]
        %v472 = vld [vmem:[%s329 + $0x470] sm:$0xff]
        %v473 = vld [vmem:[%s329 + $0x478] sm:$0xff]
        %v474 = vld [vmem:[%s329 + $0x480] sm:$0xff]
        %v475 = vld [vmem:[%s329 + $0x488] sm:$0xff]
        %v476 = vld [vmem:[%s329 + $0x490] sm:$0xff]
        %v477 = vld [vmem:[%s329 + $0x498] sm:$0xff]
        %v478 = vld [vmem:[%s329 + $0x4a0] sm:$0xff]
        %v479 = vld [vmem:[%s329 + $0x4a8] sm:$0xff]
        %v480 = vld [vmem:[%s329 + $0x4b0] sm:$0xff]
        %v481 = vld [vmem:[%s329 + $0x4b8] sm:$0xff]
        %v482 = vld [vmem:[%s329 + $0x4c0] sm:$0xff]
        %v483 = vld [vmem:[%s329 + $0x4c8] sm:$0xff]
        %v484 = vld [vmem:[%s329 + $0x4d0] sm:$0xff]
        %v485 = vld [vmem:[%s329 + $0x4d8] sm:$0xff]
        %v486 = vld [vmem:[%s1] sm:$0xff]
        %v487 = vld [vmem:[%s1 + $0x8] sm:$0x1]
        %vm488 = vcmask 72704
        %v490 = vsel %vm488, %v330, 0
        %v493 = vsel %vm488, %v331, 0
        %v496 = vsel %vm488, %v332, 0
        %v499 = vsel %vm488, %v333, 0
        %v502 = vsel %vm488, %v334, 0
        %v505 = vsel %vm488, %v335, 0
        %v508 = vsel %vm488, %v336, 0
        %v511 = vsel %vm488, %v337, 0
        %v514 = vsel %vm488, %v338, 0
        %v517 = vsel %vm488, %v339, 0
        %v520 = vsel %vm488, %v340, 0
        %v523 = vsel %vm488, %v341, 0
        %v526 = vsel %vm488, %v342, 0
        %v529 = vsel %vm488, %v343, 0
        %v532 = vsel %vm488, %v344, 0
        %v535 = vsel %vm488, %v345, 0
        %v538 = vsel %vm488, %v346, 0
        %v541 = vsel %vm488, %v347, 0
        %v544 = vsel %vm488, %v348, 0
        %v547 = vsel %vm488, %v349, 0
        %v550 = vsel %vm488, %v350, 0
        %v553 = vsel %vm488, %v351, 0
        %v556 = vsel %vm488, %v352, 0
        %v559 = vsel %vm488, %v353, 0
        %v562 = vsel %vm488, %v354, 0
        %v565 = vsel %vm488, %v355, 0
        %v568 = vsel %vm488, %v356, 0
        %v571 = vsel %vm488, %v357, 0
        %v574 = vsel %vm488, %v358, 0
        %v577 = vsel %vm488, %v359, 0
        %v580 = vsel %vm488, %v360, 0
        %v583 = vsel %vm488, %v361, 0
        %v586 = vsel %vm488, %v362, 0
        %v589 = vsel %vm488, %v363, 0
        %v592 = vsel %vm488, %v364, 0
        %v595 = vsel %vm488, %v365, 0
        %v598 = vsel %vm488, %v366, 0
        %v601 = vsel %vm488, %v367, 0
        %v604 = vsel %vm488, %v368, 0
        %v607 = vsel %vm488, %v369, 0
        %v610 = vsel %vm488, %v370, 0
        %v613 = vsel %vm488, %v371, 0
        %v616 = vsel %vm488, %v372, 0
        %v619 = vsel %vm488, %v373, 0
        %v622 = vsel %vm488, %v374, 0
        %v625 = vsel %vm488, %v375, 0
        %v628 = vsel %vm488, %v376, 0
        %v631 = vsel %vm488, %v377, 0
        %v634 = vsel %vm488, %v378, 0
        %v637 = vsel %vm488, %v379, 0
        %v640 = vsel %vm488, %v380, 0
        %v643 = vsel %vm488, %v381, 0
        %v646 = vsel %vm488, %v382, 0
        %v649 = vsel %vm488, %v383, 0
        %v652 = vsel %vm488, %v384, 0
        %v655 = vsel %vm488, %v385, 0
        %v658 = vsel %vm488, %v386, 0
        %v661 = vsel %vm488, %v387, 0
        %v664 = vsel %vm488, %v388, 0
        %v667 = vsel %vm488, %v389, 0
        %v670 = vsel %vm488, %v390, 0
        %v673 = vsel %vm488, %v391, 0
        %v676 = vsel %vm488, %v392, 0
        %v679 = vsel %vm488, %v393, 0
        %v682 = vsel %vm488, %v394, 0
        %v685 = vsel %vm488, %v395, 0
        %v688 = vsel %vm488, %v396, 0
        %v691 = vsel %vm488, %v397, 0
        %v694 = vsel %vm488, %v398, 0
        %v697 = vsel %vm488, %v399, 0
        %v700 = vsel %vm488, %v400, 0
        %v703 = vsel %vm488, %v401, 0
        %v706 = vsel %vm488, %v402, 0
        %v709 = vsel %vm488, %v403, 0
        %v712 = vsel %vm488, %v404, 0
        %v715 = vsel %vm488, %v405, 0
        %v718 = vsel %vm488, %v406, 0
        %v721 = vsel %vm488, %v407, 0
        %v724 = vsel %vm488, %v408, 0
        %v727 = vsel %vm488, %v409, 0
        %v730 = vsel %vm488, %v410, 0
        %v733 = vsel %vm488, %v411, 0
        %v736 = vsel %vm488, %v412, 0
        %v739 = vsel %vm488, %v413, 0
        %v742 = vsel %vm488, %v414, 0
        %v745 = vsel %vm488, %v415, 0
        %v748 = vsel %vm488, %v416, 0
        %v751 = vsel %vm488, %v417, 0
        %v754 = vsel %vm488, %v418, 0
        %v757 = vsel %vm488, %v419, 0
        %v760 = vsel %vm488, %v420, 0
        %v763 = vsel %vm488, %v421, 0
        %v766 = vsel %vm488, %v422, 0
        %v769 = vsel %vm488, %v423, 0
        %v772 = vsel %vm488, %v424, 0
        %v775 = vsel %vm488, %v425, 0
        %v778 = vsel %vm488, %v426, 0
        %v781 = vsel %vm488, %v427, 0
        %v784 = vsel %vm488, %v428, 0
        %v787 = vsel %vm488, %v429, 0
        %v790 = vsel %vm488, %v430, 0
        %v793 = vsel %vm488, %v431, 0
        %v796 = vsel %vm488, %v432, 0
        %v799 = vsel %vm488, %v433, 0
        %v802 = vsel %vm488, %v434, 0
        %v805 = vsel %vm488, %v435, 0
        %v808 = vsel %vm488, %v436, 0
        %v811 = vsel %vm488, %v437, 0
        %v814 = vsel %vm488, %v438, 0
        %v817 = vsel %vm488, %v439, 0
        %v820 = vsel %vm488, %v440, 0
        %v823 = vsel %vm488, %v441, 0
        %v826 = vsel %vm488, %v442, 0
        %v829 = vsel %vm488, %v443, 0
        %v832 = vsel %vm488, %v444, 0
        %v835 = vsel %vm488, %v445, 0
        %v838 = vsel %vm488, %v446, 0
        %v841 = vsel %vm488, %v447, 0
        %v844 = vsel %vm488, %v448, 0
        %v847 = vsel %vm488, %v449, 0
        %v850 = vsel %vm488, %v450, 0
        %v853 = vsel %vm488, %v451, 0
        %v856 = vsel %vm488, %v452, 0
        %v859 = vsel %vm488, %v453, 0
        %v862 = vsel %vm488, %v454, 0
        %v865 = vsel %vm488, %v455, 0
        %v868 = vsel %vm488, %v456, 0
        %v871 = vsel %vm488, %v457, 0
        %v874 = vsel %vm488, %v458, 0
        %v877 = vsel %vm488, %v459, 0
        %v880 = vsel %vm488, %v460, 0
        %v883 = vsel %vm488, %v461, 0
        %v886 = vsel %vm488, %v462, 0
        %v889 = vsel %vm488, %v463, 0
        %v892 = vsel %vm488, %v464, 0
        %v895 = vsel %vm488, %v465, 0
        %v898 = vsel %vm488, %v466, 0
        %v901 = vsel %vm488, %v467, 0
        %v904 = vsel %vm488, %v468, 0
        %v907 = vsel %vm488, %v469, 0
        %v910 = vsel %vm488, %v470, 0
        %v913 = vsel %vm488, %v471, 0
        %v916 = vsel %vm488, %v472, 0
        %v919 = vsel %vm488, %v473, 0
        %v922 = vsel %vm488, %v474, 0
        %v925 = vsel %vm488, %v475, 0
        %v928 = vsel %vm488, %v476, 0
        %v931 = vsel %vm488, %v477, 0
        %v934 = vsel %vm488, %v478, 0
        %v937 = vsel %vm488, %v479, 0
        %v940 = vsel %vm488, %v480, 0
        %v943 = vsel %vm488, %v481, 0
        %v946 = vsel %vm488, %v482, 0
        %v949 = vsel %vm488, %v483, 0
        %v952 = vsel %vm488, %v484, 0
        %v955 = vsel %vm488, %v485, 0
        %vm957 = vcmask 1040384
        %v959 = vsel %vm957, %v487, 0
        %961 = vmatprep.subr.mxu0 0.0
        %962 = vmatpush1.msra.mxu0 %v486
        %963 = vmatprep.subr.mxu0 0.0
        %964 = vmatpush1.msra.mxu0 %v959
        %965 = vmatprep.subr.mxu0 0.0
        %966 = vmatpush1.msra.mxu0 0.0
        %967 = vmatprep.subr.mxu0 0.0
        %968 = vmatpush1.msra.mxu0 0.0
        %969 = vmatprep.subr.mxu0 0.0
        %970 = vmatpush1.msra.mxu0 0.0
        %971 = vmatprep.subr.mxu0 0.0
        %972 = vmatpush1.msra.mxu0 0.0
        %973 = vmatprep.subr.mxu0 0.0
        %974 = vmatpush1.msra.mxu0 0.0
        %975 = vmatprep.subr.mxu0 0.0
        %976 = vmatpush1.msra.mxu0 0.0
        %977 = vmatprep.subr.mxu0 0.0
        %978 = vmatpush1.msra.mxu0 0.0
        %979 = vmatprep.subr.mxu0 0.0
        %980 = vmatpush1.msra.mxu0 0.0
        %981 = vmatprep.subr.mxu0 0.0
        %982 = vmatpush1.msra.mxu0 0.0
        %983 = vmatprep.subr.mxu0 0.0
        %984 = vmatpush1.msra.mxu0 0.0
        %985 = vmatprep.subr.mxu0 0.0
        %986 = vmatpush1.msra.mxu0 0.0
        %987 = vmatprep.subr.mxu0 0.0
        %988 = vmatpush1.msra.mxu0 0.0
        %989 = vmatprep.subr.mxu0 0.0
        %990 = vmatpush1.msra.mxu0 0.0
        %991 = vmatprep.subr.mxu0 0.0
        %992 = vmatpush1.msra.mxu0 0.0
        %993 = vmatprep.subr.mxu0 0.0
        %994 = vmatpush1.msra.mxu0 0.0
        %995 = vmatprep.subr.mxu0 0.0
        %996 = vmatpush1.msra.mxu0 0.0
        %997 = vmatprep.subr.mxu0 0.0
        %998 = vmatpush1.msra.mxu0 0.0
        %999 = vmatprep.subr.mxu0 0.0
        %1000 = vmatpush1.msra.mxu0 0.0
        %1001 = vmatprep.subr.mxu0 0.0
        %1002 = vmatpush1.msra.mxu0 0.0
        %1003 = vmatprep.subr.mxu0 0.0
        %1004 = vmatpush1.msra.mxu0 0.0
        %1005 = vmatprep.subr.mxu0 0.0
        %1006 = vmatpush1.msra.mxu0 0.0
        %1007 = vmatprep.subr.mxu0 0.0
        %1008 = vmatpush1.msra.mxu0 0.0
        %1009 = vmatprep.subr.mxu0 0.0
        %1010 = vmatpush1.msra.mxu0 0.0
        %1011 = vmatprep.subr.mxu0 0.0
        %1012 = vmatpush1.msra.mxu0 0.0
        %1013 = vmatprep.subr.mxu0 0.0
        %1014 = vmatpush1.msra.mxu0 0.0
        %1015 = vmatprep.subr.mxu0 0.0
        %1016 = vmatpush1.msra.mxu0 0.0
        %1017 = vmatprep.subr.mxu0 0.0
        %1018 = vmatpush1.msra.mxu0 0.0
        %1019 = vmatprep.subr.mxu0 0.0
        %1020 = vmatpush1.msra.mxu0 0.0
        %1021 = vmatprep.subr.mxu0 0.0
        %1022 = vmatpush1.msra.mxu0 0.0
        %1023 = vmatprep.subr.mxu0 0.0
        %1024 = vmatpush1.msra.mxu0 0.0
        %1025 = vmatprep.mubr.f32.mxu0 0.0
        %1026 = vmatmul.mubr.f32.gmra.mrb[0].mxu0 %v490
        %v1027 = vpop.f32.mrb[0].mxu0
        %v1028 = vadd.f32 0.0, %v1027
        %v1029 = vpop.f32.mrb[0].mxu0
        %1030 = vmatprep.mubr.f32.mxu0 0.0
        %1031 = vmatmul.mubr.f32.gmra.mrb[0].mxu0 %v493
        %v1032 = vpop.f32.mrb[0].mxu0
        %v1033 = vadd.f32 0.0, %v1032
        %v1034 = vpop.f32.mrb[0].mxu0
        %1035 = vmatprep.mubr.f32.mxu0 0.0
        %1036 = vmatmul.mubr.f32.gmra.mrb[0].mxu0 %v496
        %v1037 = vpop.f32.mrb[0].mxu0
        %v1038 = vadd.f32 0.0, %v1037
        %v1039 = vpop.f32.mrb[0].mxu0
        %1040 = vmatprep.mubr.f32.mxu0 0.0
        %1041 = vmatmul.mubr.f32.gmra.mrb[0].mxu0 %v499
        %v1042 = vpop.f32.mrb[0].mxu0
        %v1043 = vadd.f32 0.0, %v1042
        %v1044 = vpop.f32.mrb[0].mxu0
        %1045 = vmatprep.mubr.f32.mxu0 0.0
        %1046 = vmatmul.mubr.f32.gmra.mrb[0].mxu0 %v502
        %v1047 = vpop.f32.mrb[0].mxu0
        %v1048 = vadd.f32 0.0, %v1047
        %v1049 = vpop.f32.mrb[0].mxu0
        %1050 = vmatprep.mubr.f32.mxu0 0.0
        %1051 = vmatmul.mubr.f32.gmra.mrb[0].mxu0 %v505
        %v1052 = vpop.f32.mrb[0].mxu0
        %v1053 = vadd.f32 0.0, %v1052
        %v1054 = vpop.f32.mrb[0].mxu0
        %1055 = vmatprep.mubr.f32.mxu0 0.0
        %1056 = vmatmul.mubr.f32.gmra.mrb[0].mxu0 %v508
        %v1057 = vpop.f32.mrb[0].mxu0
        %v1058 = vadd.f32 0.0, %v1057
        %v1059 = vpop.f32.mrb[0].mxu0
        %1060 = vmatprep.mubr.f32.mxu0 0.0
        %1061 = vmatmul.mubr.f32.gmra.mrb[0].mxu0 %v511
        %v1062 = vpop.f32.mrb[0].mxu0
        %v1063 = vadd.f32 0.0, %v1062
        %v1064 = vpop.f32.mrb[0].mxu0
        %1065 = vmatprep.mubr.f32.mxu0 0.0
        %1066 = vmatmul.mubr.f32.gmra.mrb[0].mxu0 %v514
        %v1067 = vpop.f32.mrb[0].mxu0
        %v1068 = vadd.f32 0.0, %v1067
        %v1069 = vpop.f32.mrb[0].mxu0
        %1070 = vmatprep.mubr.f32.mxu0 0.0
        %1071 = vmatmul.mubr.f32.gmra.mrb[0].mxu0 %v517
        %v1072 = vpop.f32.mrb[0].mxu0
        %v1073 = vadd.f32 0.0, %v1072
        %v1074 = vpop.f32.mrb[0].mxu0
        %1075 = vmatprep.mubr.f32.mxu0 0.0
        %1076 = vmatmul.mubr.f32.gmra.mrb[0].mxu0 %v520
        %v1077 = vpop.f32.mrb[0].mxu0
        %v1078 = vadd.f32 0.0, %v1077
        %v1079 = vpop.f32.mrb[0].mxu0
        %1080 = vmatprep.mubr.f32.mxu0 0.0
        %1081 = vmatmul.mubr.f32.gmra.mrb[0].mxu0 %v523
        %v1082 = vpop.f32.mrb[0].mxu0
        %v1083 = vadd.f32 0.0, %v1082
        %v1084 = vpop.f32.mrb[0].mxu0
        %1085 = vmatprep.mubr.f32.mxu0 0.0
        %1086 = vmatmul.mubr.f32.gmra.mrb[0].mxu0 %v526
        %v1087 = vpop.f32.mrb[0].mxu0
        %v1088 = vadd.f32 0.0, %v1087
        %v1089 = vpop.f32.mrb[0].mxu0
        %1090 = vmatprep.mubr.f32.mxu0 0.0
        %1091 = vmatmul.mubr.f32.gmra.mrb[0].mxu0 %v529
        %v1092 = vpop.f32.mrb[0].mxu0
        %v1093 = vadd.f32 0.0, %v1092
        %v1094 = vpop.f32.mrb[0].mxu0
        %1095 = vmatprep.mubr.f32.mxu0 0.0
        %1096 = vmatmul.mubr.f32.gmra.mrb[0].mxu0 %v532
        %v1097 = vpop.f32.mrb[0].mxu0
        %v1098 = vadd.f32 0.0, %v1097
        %v1099 = vpop.f32.mrb[0].mxu0
        %1100 = vmatprep.mubr.f32.mxu0 0.0
        %1101 = vmatmul.mubr.f32.gmra.mrb[0].mxu0 %v535
        %v1102 = vpop.f32.mrb[0].mxu0
        %v1103 = vadd.f32 0.0, %v1102
        %v1104 = vpop.f32.mrb[0].mxu0
        %1105 = vmatprep.mubr.f32.mxu0 0.0
        %1106 = vmatmul.mubr.f32.gmra.mrb[0].mxu0 %v538
        %v1107 = vpop.f32.mrb[0].mxu0
        %v1108 = vadd.f32 0.0, %v1107
        %v1109 = vpop.f32.mrb[0].mxu0
        %1110 = vmatprep.mubr.f32.mxu0 0.0
        %1111 = vmatmul.mubr.f32.gmra.mrb[0].mxu0 %v541
        %v1112 = vpop.f32.mrb[0].mxu0
        %v1113 = vadd.f32 0.0, %v1112
        %v1114 = vpop.f32.mrb[0].mxu0
        %1115 = vmatprep.mubr.f32.mxu0 0.0
        %1116 = vmatmul.mubr.f32.gmra.mrb[0].mxu0 %v544
        %v1117 = vpop.f32.mrb[0].mxu0
        %v1118 = vadd.f32 0.0, %v1117
        %v1119 = vpop.f32.mrb[0].mxu0
        %1120 = vmatprep.mubr.f32.mxu0 0.0
        %1121 = vmatmul.mubr.f32.gmra.mrb[0].mxu0 %v547
        %v1122 = vpop.f32.mrb[0].mxu0
        %v1123 = vadd.f32 0.0, %v1122
        %v1124 = vpop.f32.mrb[0].mxu0
        %1125 = vmatprep.mubr.f32.mxu0 0.0
        %1126 = vmatmul.mubr.f32.gmra.mrb[0].mxu0 %v550
        %v1127 = vpop.f32.mrb[0].mxu0
        %v1128 = vadd.f32 0.0, %v1127
        %v1129 = vpop.f32.mrb[0].mxu0
        %1130 = vmatprep.mubr.f32.mxu0 0.0
        %1131 = vmatmul.mubr.f32.gmra.mrb[0].mxu0 %v553
        %v1132 = vpop.f32.mrb[0].mxu0
        %v1133 = vadd.f32 0.0, %v1132
        %v1134 = vpop.f32.mrb[0].mxu0
        %1135 = vmatprep.mubr.f32.mxu0 0.0
        %1136 = vmatmul.mubr.f32.gmra.mrb[0].mxu0 %v556
        %v1137 = vpop.f32.mrb[0].mxu0
        %v1138 = vadd.f32 0.0, %v1137
        %v1139 = vpop.f32.mrb[0].mxu0
        %1140 = vmatprep.mubr.f32.mxu0 0.0
        %1141 = vmatmul.mubr.f32.gmra.mrb[0].mxu0 %v559
        %v1142 = vpop.f32.mrb[0].mxu0
        %v1143 = vadd.f32 0.0, %v1142
        %v1144 = vpop.f32.mrb[0].mxu0
        %1145 = vmatprep.mubr.f32.mxu0 0.0
        %1146 = vmatmul.mubr.f32.gmra.mrb[0].mxu0 %v562
        %v1147 = vpop.f32.mrb[0].mxu0
        %v1148 = vadd.f32 0.0, %v1147
        %v1149 = vpop.f32.mrb[0].mxu0
        %1150 = vmatprep.mubr.f32.mxu0 0.0
        %1151 = vmatmul.mubr.f32.gmra.mrb[0].mxu0 %v565
        %v1152 = vpop.f32.mrb[0].mxu0
        %v1153 = vadd.f32 0.0, %v1152
        %v1154 = vpop.f32.mrb[0].mxu0
        %1155 = vmatprep.mubr.f32.mxu0 0.0
        %1156 = vmatmul.mubr.f32.gmra.mrb[0].mxu0 %v568
        %v1157 = vpop.f32.mrb[0].mxu0
        %v1158 = vadd.f32 0.0, %v1157
        %v1159 = vpop.f32.mrb[0].mxu0
        %1160 = vmatprep.mubr.f32.mxu0 0.0
        %1161 = vmatmul.mubr.f32.gmra.mrb[0].mxu0 %v571
        %v1162 = vpop.f32.mrb[0].mxu0
        %v1163 = vadd.f32 0.0, %v1162
        %v1164 = vpop.f32.mrb[0].mxu0
        %1165 = vmatprep.mubr.f32.mxu0 0.0
        %1166 = vmatmul.mubr.f32.gmra.mrb[0].mxu0 %v574
        %v1167 = vpop.f32.mrb[0].mxu0
        %v1168 = vadd.f32 0.0, %v1167
        %v1169 = vpop.f32.mrb[0].mxu0
        %1170 = vmatprep.mubr.f32.mxu0 0.0
        %1171 = vmatmul.mubr.f32.gmra.mrb[0].mxu0 %v577
        %v1172 = vpop.f32.mrb[0].mxu0
        %v1173 = vadd.f32 0.0, %v1172
        %v1174 = vpop.f32.mrb[0].mxu0
        %1175 = vmatprep.mubr.f32.mxu0 0.0
        %1176 = vmatmul.mubr.f32.gmra.mrb[0].mxu0 %v580
        %v1177 = vpop.f32.mrb[0].mxu0
        %v1178 = vadd.f32 0.0, %v1177
        %v1179 = vpop.f32.mrb[0].mxu0
        %1180 = vmatprep.mubr.f32.mxu0 0.0
        %1181 = vmatmul.mubr.f32.gmra.mrb[0].mxu0 %v583
        %v1182 = vpop.f32.mrb[0].mxu0
        %v1183 = vadd.f32 0.0, %v1182
        %v1184 = vpop.f32.mrb[0].mxu0
        %1185 = vmatprep.mubr.f32.mxu0 0.0
        %1186 = vmatmul.mubr.f32.gmra.mrb[0].mxu0 %v586
        %v1187 = vpop.f32.mrb[0].mxu0
        %v1188 = vadd.f32 0.0, %v1187
        %v1189 = vpop.f32.mrb[0].mxu0
        %1190 = vmatprep.mubr.f32.mxu0 0.0
        %1191 = vmatmul.mubr.f32.gmra.mrb[0].mxu0 %v589
        %v1192 = vpop.f32.mrb[0].mxu0
        %v1193 = vadd.f32 0.0, %v1192
        %v1194 = vpop.f32.mrb[0].mxu0
        %1195 = vmatprep.mubr.f32.mxu0 0.0
        %1196 = vmatmul.mubr.f32.gmra.mrb[0].mxu0 %v592
        %v1197 = vpop.f32.mrb[0].mxu0
        %v1198 = vadd.f32 0.0, %v1197
        %v1199 = vpop.f32.mrb[0].mxu0
        %1200 = vmatprep.mubr.f32.mxu0 0.0
        %1201 = vmatmul.mubr.f32.gmra.mrb[0].mxu0 %v595
        %v1202 = vpop.f32.mrb[0].mxu0
        %v1203 = vadd.f32 0.0, %v1202
        %v1204 = vpop.f32.mrb[0].mxu0
        %1205 = vmatprep.mubr.f32.mxu0 0.0
        %1206 = vmatmul.mubr.f32.gmra.mrb[0].mxu0 %v598
        %v1207 = vpop.f32.mrb[0].mxu0
        %v1208 = vadd.f32 0.0, %v1207
        %v1209 = vpop.f32.mrb[0].mxu0
        %1210 = vmatprep.mubr.f32.mxu0 0.0
        %1211 = vmatmul.mubr.f32.gmra.mrb[0].mxu0 %v601
        %v1212 = vpop.f32.mrb[0].mxu0
        %v1213 = vadd.f32 0.0, %v1212
        %v1214 = vpop.f32.mrb[0].mxu0
        %1215 = vmatprep.mubr.f32.mxu0 0.0
        %1216 = vmatmul.mubr.f32.gmra.mrb[0].mxu0 %v604
        %v1217 = vpop.f32.mrb[0].mxu0
        %v1218 = vadd.f32 0.0, %v1217
        %v1219 = vpop.f32.mrb[0].mxu0
        %1220 = vmatprep.mubr.f32.mxu0 0.0
        %1221 = vmatmul.mubr.f32.gmra.mrb[0].mxu0 %v607
        %v1222 = vpop.f32.mrb[0].mxu0
        %v1223 = vadd.f32 0.0, %v1222
        %v1224 = vpop.f32.mrb[0].mxu0
        %1225 = vmatprep.mubr.f32.mxu0 0.0
        %1226 = vmatmul.mubr.f32.gmra.mrb[0].mxu0 %v610
        %v1227 = vpop.f32.mrb[0].mxu0
        %v1228 = vadd.f32 0.0, %v1227
        %v1229 = vpop.f32.mrb[0].mxu0
        %1230 = vmatprep.mubr.f32.mxu0 0.0
        %1231 = vmatmul.mubr.f32.gmra.mrb[0].mxu0 %v613
        %v1232 = vpop.f32.mrb[0].mxu0
        %v1233 = vadd.f32 0.0, %v1232
        %v1234 = vpop.f32.mrb[0].mxu0
        %1235 = vmatprep.mubr.f32.mxu0 0.0
        %1236 = vmatmul.mubr.f32.gmra.mrb[0].mxu0 %v616
        %v1237 = vpop.f32.mrb[0].mxu0
        %v1238 = vadd.f32 0.0, %v1237
        %v1239 = vpop.f32.mrb[0].mxu0
        %1240 = vmatprep.mubr.f32.mxu0 0.0
        %1241 = vmatmul.mubr.f32.gmra.mrb[0].mxu0 %v619
        %v1242 = vpop.f32.mrb[0].mxu0
        %v1243 = vadd.f32 0.0, %v1242
        %v1244 = vpop.f32.mrb[0].mxu0
        %1245 = vmatprep.mubr.f32.mxu0 0.0
        %1246 = vmatmul.mubr.f32.gmra.mrb[0].mxu0 %v622
        %v1247 = vpop.f32.mrb[0].mxu0
        %v1248 = vadd.f32 0.0, %v1247
        %v1249 = vpop.f32.mrb[0].mxu0
        %1250 = vmatprep.mubr.f32.mxu0 0.0
        %1251 = vmatmul.mubr.f32.gmra.mrb[0].mxu0 %v625
        %v1252 = vpop.f32.mrb[0].mxu0
        %v1253 = vadd.f32 0.0, %v1252
        %v1254 = vpop.f32.mrb[0].mxu0
        %1255 = vmatprep.mubr.f32.mxu0 0.0
        %1256 = vmatmul.mubr.f32.gmra.mrb[0].mxu0 %v628
        %v1257 = vpop.f32.mrb[0].mxu0
        %v1258 = vadd.f32 0.0, %v1257
        %v1259 = vpop.f32.mrb[0].mxu0
        %1260 = vmatprep.mubr.f32.mxu0 0.0
        %1261 = vmatmul.mubr.f32.gmra.mrb[0].mxu0 %v631
        %v1262 = vpop.f32.mrb[0].mxu0
        %v1263 = vadd.f32 0.0, %v1262
        %v1264 = vpop.f32.mrb[0].mxu0
        %1265 = vmatprep.mubr.f32.mxu0 0.0
        %1266 = vmatmul.mubr.f32.gmra.mrb[0].mxu0 %v634
        %v1267 = vpop.f32.mrb[0].mxu0
        %v1268 = vadd.f32 0.0, %v1267
        %v1269 = vpop.f32.mrb[0].mxu0
        %1270 = vmatprep.mubr.f32.mxu0 0.0
        %1271 = vmatmul.mubr.f32.gmra.mrb[0].mxu0 %v637
        %v1272 = vpop.f32.mrb[0].mxu0
        %v1273 = vadd.f32 0.0, %v1272
        %v1274 = vpop.f32.mrb[0].mxu0
        %1275 = vmatprep.mubr.f32.mxu0 0.0
        %1276 = vmatmul.mubr.f32.gmra.mrb[0].mxu0 %v640
        %v1277 = vpop.f32.mrb[0].mxu0
        %v1278 = vadd.f32 0.0, %v1277
        %v1279 = vpop.f32.mrb[0].mxu0
        %1280 = vmatprep.mubr.f32.mxu0 0.0
        %1281 = vmatmul.mubr.f32.gmra.mrb[0].mxu0 %v643
        %v1282 = vpop.f32.mrb[0].mxu0
        %v1283 = vadd.f32 0.0, %v1282
        %v1284 = vpop.f32.mrb[0].mxu0
        %1285 = vmatprep.mubr.f32.mxu0 0.0
        %1286 = vmatmul.mubr.f32.gmra.mrb[0].mxu0 %v646
        %v1287 = vpop.f32.mrb[0].mxu0
        %v1288 = vadd.f32 0.0, %v1287
        %v1289 = vpop.f32.mrb[0].mxu0
        %1290 = vmatprep.mubr.f32.mxu0 0.0
        %1291 = vmatmul.mubr.f32.gmra.mrb[0].mxu0 %v649
        %v1292 = vpop.f32.mrb[0].mxu0
        %v1293 = vadd.f32 0.0, %v1292
        %v1294 = vpop.f32.mrb[0].mxu0
        %1295 = vmatprep.mubr.f32.mxu0 0.0
        %1296 = vmatmul.mubr.f32.gmra.mrb[0].mxu0 %v652
        %v1297 = vpop.f32.mrb[0].mxu0
        %v1298 = vadd.f32 0.0, %v1297
        %v1299 = vpop.f32.mrb[0].mxu0
        %1300 = vmatprep.mubr.f32.mxu0 0.0
        %1301 = vmatmul.mubr.f32.gmra.mrb[0].mxu0 %v655
        %v1302 = vpop.f32.mrb[0].mxu0
        %v1303 = vadd.f32 0.0, %v1302
        %v1304 = vpop.f32.mrb[0].mxu0
        %1305 = vmatprep.mubr.f32.mxu0 0.0
        %1306 = vmatmul.mubr.f32.gmra.mrb[0].mxu0 %v658
        %v1307 = vpop.f32.mrb[0].mxu0
        %v1308 = vadd.f32 0.0, %v1307
        %v1309 = vpop.f32.mrb[0].mxu0
        %1310 = vmatprep.mubr.f32.mxu0 0.0
        %1311 = vmatmul.mubr.f32.gmra.mrb[0].mxu0 %v661
        %v1312 = vpop.f32.mrb[0].mxu0
        %v1313 = vadd.f32 0.0, %v1312
        %v1314 = vpop.f32.mrb[0].mxu0
        %1315 = vmatprep.mubr.f32.mxu0 0.0
        %1316 = vmatmul.mubr.f32.gmra.mrb[0].mxu0 %v664
        %v1317 = vpop.f32.mrb[0].mxu0
        %v1318 = vadd.f32 0.0, %v1317
        %v1319 = vpop.f32.mrb[0].mxu0
        %1320 = vmatprep.mubr.f32.mxu0 0.0
        %1321 = vmatmul.mubr.f32.gmra.mrb[0].mxu0 %v667
        %v1322 = vpop.f32.mrb[0].mxu0
        %v1323 = vadd.f32 0.0, %v1322
        %v1324 = vpop.f32.mrb[0].mxu0
        %1325 = vmatprep.mubr.f32.mxu0 0.0
        %1326 = vmatmul.mubr.f32.gmra.mrb[0].mxu0 %v670
        %v1327 = vpop.f32.mrb[0].mxu0
        %v1328 = vadd.f32 0.0, %v1327
        %v1329 = vpop.f32.mrb[0].mxu0
        %1330 = vmatprep.mubr.f32.mxu0 0.0
        %1331 = vmatmul.mubr.f32.gmra.mrb[0].mxu0 %v673
        %v1332 = vpop.f32.mrb[0].mxu0
        %v1333 = vadd.f32 0.0, %v1332
        %v1334 = vpop.f32.mrb[0].mxu0
        %1335 = vmatprep.mubr.f32.mxu0 0.0
        %1336 = vmatmul.mubr.f32.gmra.mrb[0].mxu0 %v676
        %v1337 = vpop.f32.mrb[0].mxu0
        %v1338 = vadd.f32 0.0, %v1337
        %v1339 = vpop.f32.mrb[0].mxu0
        %1340 = vmatprep.mubr.f32.mxu0 0.0
        %1341 = vmatmul.mubr.f32.gmra.mrb[0].mxu0 %v679
        %v1342 = vpop.f32.mrb[0].mxu0
        %v1343 = vadd.f32 0.0, %v1342
        %v1344 = vpop.f32.mrb[0].mxu0
        %1345 = vmatprep.mubr.f32.mxu0 0.0
        %1346 = vmatmul.mubr.f32.gmra.mrb[0].mxu0 %v682
        %v1347 = vpop.f32.mrb[0].mxu0
        %v1348 = vadd.f32 0.0, %v1347
        %v1349 = vpop.f32.mrb[0].mxu0
        %1350 = vmatprep.mubr.f32.mxu0 0.0
        %1351 = vmatmul.mubr.f32.gmra.mrb[0].mxu0 %v685
        %v1352 = vpop.f32.mrb[0].mxu0
        %v1353 = vadd.f32 0.0, %v1352
        %v1354 = vpop.f32.mrb[0].mxu0
        %1355 = vmatprep.mubr.f32.mxu0 0.0
        %1356 = vmatmul.mubr.f32.gmra.mrb[0].mxu0 %v688
        %v1357 = vpop.f32.mrb[0].mxu0
        %v1358 = vadd.f32 0.0, %v1357
        %v1359 = vpop.f32.mrb[0].mxu0
        %1360 = vmatprep.mubr.f32.mxu0 0.0
        %1361 = vmatmul.mubr.f32.gmra.mrb[0].mxu0 %v691
        %v1362 = vpop.f32.mrb[0].mxu0
        %v1363 = vadd.f32 0.0, %v1362
        %v1364 = vpop.f32.mrb[0].mxu0
        %1365 = vmatprep.mubr.f32.mxu0 0.0
        %1366 = vmatmul.mubr.f32.gmra.mrb[0].mxu0 %v694
        %v1367 = vpop.f32.mrb[0].mxu0
        %v1368 = vadd.f32 0.0, %v1367
        %v1369 = vpop.f32.mrb[0].mxu0
        %1370 = vmatprep.mubr.f32.mxu0 0.0
        %1371 = vmatmul.mubr.f32.gmra.mrb[0].mxu0 %v697
        %v1372 = vpop.f32.mrb[0].mxu0
        %v1373 = vadd.f32 0.0, %v1372
        %v1374 = vpop.f32.mrb[0].mxu0
        %1375 = vmatprep.mubr.f32.mxu0 0.0
        %1376 = vmatmul.mubr.f32.gmra.mrb[0].mxu0 %v700
        %v1377 = vpop.f32.mrb[0].mxu0
        %v1378 = vadd.f32 0.0, %v1377
        %v1379 = vpop.f32.mrb[0].mxu0
        %1380 = vmatprep.mubr.f32.mxu0 0.0
        %1381 = vmatmul.mubr.f32.gmra.mrb[0].mxu0 %v703
        %v1382 = vpop.f32.mrb[0].mxu0
        %v1383 = vadd.f32 0.0, %v1382
        %v1384 = vpop.f32.mrb[0].mxu0
        %1385 = vmatprep.mubr.f32.mxu0 0.0
        %1386 = vmatmul.mubr.f32.gmra.mrb[0].mxu0 %v706
        %v1387 = vpop.f32.mrb[0].mxu0
        %v1388 = vadd.f32 0.0, %v1387
        %v1389 = vpop.f32.mrb[0].mxu0
        %1390 = vmatprep.mubr.f32.mxu0 0.0
        %1391 = vmatmul.mubr.f32.gmra.mrb[0].mxu0 %v709
        %v1392 = vpop.f32.mrb[0].mxu0
        %v1393 = vadd.f32 0.0, %v1392
        %v1394 = vpop.f32.mrb[0].mxu0
        %1395 = vmatprep.mubr.f32.mxu0 0.0
        %1396 = vmatmul.mubr.f32.gmra.mrb[0].mxu0 %v712
        %v1397 = vpop.f32.mrb[0].mxu0
        %v1398 = vadd.f32 0.0, %v1397
        %v1399 = vpop.f32.mrb[0].mxu0
        %1400 = vmatprep.mubr.f32.mxu0 0.0
        %1401 = vmatmul.mubr.f32.gmra.mrb[0].mxu0 %v715
        %v1402 = vpop.f32.mrb[0].mxu0
        %v1403 = vadd.f32 0.0, %v1402
        %v1404 = vpop.f32.mrb[0].mxu0
        %1405 = vmatprep.mubr.f32.mxu0 0.0
        %1406 = vmatmul.mubr.f32.gmra.mrb[0].mxu0 %v718
        %v1407 = vpop.f32.mrb[0].mxu0
        %v1408 = vadd.f32 0.0, %v1407
        %v1409 = vpop.f32.mrb[0].mxu0
        %1410 = vmatprep.mubr.f32.mxu0 0.0
        %1411 = vmatmul.mubr.f32.gmra.mrb[0].mxu0 %v721
        %v1412 = vpop.f32.mrb[0].mxu0
        %v1413 = vadd.f32 0.0, %v1412
        %v1414 = vpop.f32.mrb[0].mxu0
        %1415 = vmatprep.mubr.f32.mxu0 0.0
        %1416 = vmatmul.mubr.f32.gmra.mrb[0].mxu0 %v724
        %v1417 = vpop.f32.mrb[0].mxu0
        %v1418 = vadd.f32 0.0, %v1417
        %v1419 = vpop.f32.mrb[0].mxu0
        %1420 = vmatprep.mubr.f32.mxu0 0.0
        %1421 = vmatmul.mubr.f32.gmra.mrb[0].mxu0 %v727
        %v1422 = vpop.f32.mrb[0].mxu0
        %v1423 = vadd.f32 0.0, %v1422
        %v1424 = vpop.f32.mrb[0].mxu0
        %1425 = vmatprep.mubr.f32.mxu0 0.0
        %1426 = vmatmul.mubr.f32.gmra.mrb[0].mxu0 %v730
        %v1427 = vpop.f32.mrb[0].mxu0
        %v1428 = vadd.f32 0.0, %v1427
        %v1429 = vpop.f32.mrb[0].mxu0
        %1430 = vmatprep.mubr.f32.mxu0 0.0
        %1431 = vmatmul.mubr.f32.gmra.mrb[0].mxu0 %v733
        %v1432 = vpop.f32.mrb[0].mxu0
        %v1433 = vadd.f32 0.0, %v1432
        %v1434 = vpop.f32.mrb[0].mxu0
        %1435 = vmatprep.mubr.f32.mxu0 0.0
        %1436 = vmatmul.mubr.f32.gmra.mrb[0].mxu0 %v736
        %v1437 = vpop.f32.mrb[0].mxu0
        %v1438 = vadd.f32 0.0, %v1437
        %v1439 = vpop.f32.mrb[0].mxu0
        %1440 = vmatprep.mubr.f32.mxu0 0.0
        %1441 = vmatmul.mubr.f32.gmra.mrb[0].mxu0 %v739
        %v1442 = vpop.f32.mrb[0].mxu0
        %v1443 = vadd.f32 0.0, %v1442
        %v1444 = vpop.f32.mrb[0].mxu0
        %1445 = vmatprep.mubr.f32.mxu0 0.0
        %1446 = vmatmul.mubr.f32.gmra.mrb[0].mxu0 %v742
        %v1447 = vpop.f32.mrb[0].mxu0
        %v1448 = vadd.f32 0.0, %v1447
        %v1449 = vpop.f32.mrb[0].mxu0
        %1450 = vmatprep.mubr.f32.mxu0 0.0
        %1451 = vmatmul.mubr.f32.gmra.mrb[0].mxu0 %v745
        %v1452 = vpop.f32.mrb[0].mxu0
        %v1453 = vadd.f32 0.0, %v1452
        %v1454 = vpop.f32.mrb[0].mxu0
        %1455 = vmatprep.mubr.f32.mxu0 0.0
        %1456 = vmatmul.mubr.f32.gmra.mrb[0].mxu0 %v748
        %v1457 = vpop.f32.mrb[0].mxu0
        %v1458 = vadd.f32 0.0, %v1457
        %v1459 = vpop.f32.mrb[0].mxu0
        %1460 = vmatprep.mubr.f32.mxu0 0.0
        %1461 = vmatmul.mubr.f32.gmra.mrb[0].mxu0 %v751
        %v1462 = vpop.f32.mrb[0].mxu0
        %v1463 = vadd.f32 0.0, %v1462
        %v1464 = vpop.f32.mrb[0].mxu0
        %1465 = vmatprep.mubr.f32.mxu0 0.0
        %1466 = vmatmul.mubr.f32.gmra.mrb[0].mxu0 %v754
        %v1467 = vpop.f32.mrb[0].mxu0
        %v1468 = vadd.f32 0.0, %v1467
        %v1469 = vpop.f32.mrb[0].mxu0
        %1470 = vmatprep.mubr.f32.mxu0 0.0
        %1471 = vmatmul.mubr.f32.gmra.mrb[0].mxu0 %v757
        %v1472 = vpop.f32.mrb[0].mxu0
        %v1473 = vadd.f32 0.0, %v1472
        %v1474 = vpop.f32.mrb[0].mxu0
        %1475 = vmatprep.mubr.f32.mxu0 0.0
        %1476 = vmatmul.mubr.f32.gmra.mrb[0].mxu0 %v760
        %v1477 = vpop.f32.mrb[0].mxu0
        %v1478 = vadd.f32 0.0, %v1477
        %v1479 = vpop.f32.mrb[0].mxu0
        %1480 = vmatprep.mubr.f32.mxu0 0.0
        %1481 = vmatmul.mubr.f32.gmra.mrb[0].mxu0 %v763
        %v1482 = vpop.f32.mrb[0].mxu0
        %v1483 = vadd.f32 0.0, %v1482
        %v1484 = vpop.f32.mrb[0].mxu0
        %1485 = vmatprep.mubr.f32.mxu0 0.0
        %1486 = vmatmul.mubr.f32.gmra.mrb[0].mxu0 %v766
        %v1487 = vpop.f32.mrb[0].mxu0
        %v1488 = vadd.f32 0.0, %v1487
        %v1489 = vpop.f32.mrb[0].mxu0
        %1490 = vmatprep.mubr.f32.mxu0 0.0
        %1491 = vmatmul.mubr.f32.gmra.mrb[0].mxu0 %v769
        %v1492 = vpop.f32.mrb[0].mxu0
        %v1493 = vadd.f32 0.0, %v1492
        %v1494 = vpop.f32.mrb[0].mxu0
        %1495 = vmatprep.mubr.f32.mxu0 0.0
        %1496 = vmatmul.mubr.f32.gmra.mrb[0].mxu0 %v772
        %v1497 = vpop.f32.mrb[0].mxu0
        %v1498 = vadd.f32 0.0, %v1497
        %v1499 = vpop.f32.mrb[0].mxu0
        %1500 = vmatprep.mubr.f32.mxu0 0.0
        %1501 = vmatmul.mubr.f32.gmra.mrb[0].mxu0 %v775
        %v1502 = vpop.f32.mrb[0].mxu0
        %v1503 = vadd.f32 0.0, %v1502
        %v1504 = vpop.f32.mrb[0].mxu0
        %1505 = vmatprep.mubr.f32.mxu0 0.0
        %1506 = vmatmul.mubr.f32.gmra.mrb[0].mxu0 %v778
        %v1507 = vpop.f32.mrb[0].mxu0
        %v1508 = vadd.f32 0.0, %v1507
        %v1509 = vpop.f32.mrb[0].mxu0
        %1510 = vmatprep.mubr.f32.mxu0 0.0
        %1511 = vmatmul.mubr.f32.gmra.mrb[0].mxu0 %v781
        %v1512 = vpop.f32.mrb[0].mxu0
        %v1513 = vadd.f32 0.0, %v1512
        %v1514 = vpop.f32.mrb[0].mxu0
        %1515 = vmatprep.mubr.f32.mxu0 0.0
        %1516 = vmatmul.mubr.f32.gmra.mrb[0].mxu0 %v784
        %v1517 = vpop.f32.mrb[0].mxu0
        %v1518 = vadd.f32 0.0, %v1517
        %v1519 = vpop.f32.mrb[0].mxu0
        %1520 = vmatprep.mubr.f32.mxu0 0.0
        %1521 = vmatmul.mubr.f32.gmra.mrb[0].mxu0 %v787
        %v1522 = vpop.f32.mrb[0].mxu0
        %v1523 = vadd.f32 0.0, %v1522
        %v1524 = vpop.f32.mrb[0].mxu0
        %1525 = vmatprep.mubr.f32.mxu0 0.0
        %1526 = vmatmul.mubr.f32.gmra.mrb[0].mxu0 %v790
        %v1527 = vpop.f32.mrb[0].mxu0
        %v1528 = vadd.f32 0.0, %v1527
        %v1529 = vpop.f32.mrb[0].mxu0
        %1530 = vmatprep.mubr.f32.mxu0 0.0
        %1531 = vmatmul.mubr.f32.gmra.mrb[0].mxu0 %v793
        %v1532 = vpop.f32.mrb[0].mxu0
        %v1533 = vadd.f32 0.0, %v1532
        %v1534 = vpop.f32.mrb[0].mxu0
        %1535 = vmatprep.mubr.f32.mxu0 0.0
        %1536 = vmatmul.mubr.f32.gmra.mrb[0].mxu0 %v796
        %v1537 = vpop.f32.mrb[0].mxu0
        %v1538 = vadd.f32 0.0, %v1537
        %v1539 = vpop.f32.mrb[0].mxu0
        %1540 = vmatprep.mubr.f32.mxu0 0.0
        %1541 = vmatmul.mubr.f32.gmra.mrb[0].mxu0 %v799
        %v1542 = vpop.f32.mrb[0].mxu0
        %v1543 = vadd.f32 0.0, %v1542
        %v1544 = vpop.f32.mrb[0].mxu0
        %1545 = vmatprep.mubr.f32.mxu0 0.0
        %1546 = vmatmul.mubr.f32.gmra.mrb[0].mxu0 %v802
        %v1547 = vpop.f32.mrb[0].mxu0
        %v1548 = vadd.f32 0.0, %v1547
        %v1549 = vpop.f32.mrb[0].mxu0
        %1550 = vmatprep.mubr.f32.mxu0 0.0
        %1551 = vmatmul.mubr.f32.gmra.mrb[0].mxu0 %v805
        %v1552 = vpop.f32.mrb[0].mxu0
        %v1553 = vadd.f32 0.0, %v1552
        %v1554 = vpop.f32.mrb[0].mxu0
        %1555 = vmatprep.mubr.f32.mxu0 0.0
        %1556 = vmatmul.mubr.f32.gmra.mrb[0].mxu0 %v808
        %v1557 = vpop.f32.mrb[0].mxu0
        %v1558 = vadd.f32 0.0, %v1557
        %v1559 = vpop.f32.mrb[0].mxu0
        %1560 = vmatprep.mubr.f32.mxu0 0.0
        %1561 = vmatmul.mubr.f32.gmra.mrb[0].mxu0 %v811
        %v1562 = vpop.f32.mrb[0].mxu0
        %v1563 = vadd.f32 0.0, %v1562
        %v1564 = vpop.f32.mrb[0].mxu0
        %1565 = vmatprep.mubr.f32.mxu0 0.0
        %1566 = vmatmul.mubr.f32.gmra.mrb[0].mxu0 %v814
        %v1567 = vpop.f32.mrb[0].mxu0
        %v1568 = vadd.f32 0.0, %v1567
        %v1569 = vpop.f32.mrb[0].mxu0
        %1570 = vmatprep.mubr.f32.mxu0 0.0
        %1571 = vmatmul.mubr.f32.gmra.mrb[0].mxu0 %v817
        %v1572 = vpop.f32.mrb[0].mxu0
        %v1573 = vadd.f32 0.0, %v1572
        %v1574 = vpop.f32.mrb[0].mxu0
        %1575 = vmatprep.mubr.f32.mxu0 0.0
        %1576 = vmatmul.mubr.f32.gmra.mrb[0].mxu0 %v820
        %v1577 = vpop.f32.mrb[0].mxu0
        %v1578 = vadd.f32 0.0, %v1577
        %v1579 = vpop.f32.mrb[0].mxu0
        %1580 = vmatprep.mubr.f32.mxu0 0.0
        %1581 = vmatmul.mubr.f32.gmra.mrb[0].mxu0 %v823
        %v1582 = vpop.f32.mrb[0].mxu0
        %v1583 = vadd.f32 0.0, %v1582
        %v1584 = vpop.f32.mrb[0].mxu0
        %1585 = vmatprep.mubr.f32.mxu0 0.0
        %1586 = vmatmul.mubr.f32.gmra.mrb[0].mxu0 %v826
        %v1587 = vpop.f32.mrb[0].mxu0
        %v1588 = vadd.f32 0.0, %v1587
        %v1589 = vpop.f32.mrb[0].mxu0
        %1590 = vmatprep.mubr.f32.mxu0 0.0
        %1591 = vmatmul.mubr.f32.gmra.mrb[0].mxu0 %v829
        %v1592 = vpop.f32.mrb[0].mxu0
        %v1593 = vadd.f32 0.0, %v1592
        %v1594 = vpop.f32.mrb[0].mxu0
        %1595 = vmatprep.mubr.f32.mxu0 0.0
        %1596 = vmatmul.mubr.f32.gmra.mrb[0].mxu0 %v832
        %v1597 = vpop.f32.mrb[0].mxu0
        %v1598 = vadd.f32 0.0, %v1597
        %v1599 = vpop.f32.mrb[0].mxu0
        %1600 = vmatprep.mubr.f32.mxu0 0.0
        %1601 = vmatmul.mubr.f32.gmra.mrb[0].mxu0 %v835
        %v1602 = vpop.f32.mrb[0].mxu0
        %v1603 = vadd.f32 0.0, %v1602
        %v1604 = vpop.f32.mrb[0].mxu0
        %1605 = vmatprep.mubr.f32.mxu0 0.0
        %1606 = vmatmul.mubr.f32.gmra.mrb[0].mxu0 %v838
        %v1607 = vpop.f32.mrb[0].mxu0
        %v1608 = vadd.f32 0.0, %v1607
        %v1609 = vpop.f32.mrb[0].mxu0
        %1610 = vmatprep.mubr.f32.mxu0 0.0
        %1611 = vmatmul.mubr.f32.gmra.mrb[0].mxu0 %v841
        %v1612 = vpop.f32.mrb[0].mxu0
        %v1613 = vadd.f32 0.0, %v1612
        %v1614 = vpop.f32.mrb[0].mxu0
        %1615 = vmatprep.mubr.f32.mxu0 0.0
        %1616 = vmatmul.mubr.f32.gmra.mrb[0].mxu0 %v844
        %v1617 = vpop.f32.mrb[0].mxu0
        %v1618 = vadd.f32 0.0, %v1617
        %v1619 = vpop.f32.mrb[0].mxu0
        %1620 = vmatprep.mubr.f32.mxu0 0.0
        %1621 = vmatmul.mubr.f32.gmra.mrb[0].mxu0 %v847
        %v1622 = vpop.f32.mrb[0].mxu0
        %v1623 = vadd.f32 0.0, %v1622
        %v1624 = vpop.f32.mrb[0].mxu0
        %1625 = vmatprep.mubr.f32.mxu0 0.0
        %1626 = vmatmul.mubr.f32.gmra.mrb[0].mxu0 %v850
        %v1627 = vpop.f32.mrb[0].mxu0
        %v1628 = vadd.f32 0.0, %v1627
        %v1629 = vpop.f32.mrb[0].mxu0
        %1630 = vmatprep.mubr.f32.mxu0 0.0
        %1631 = vmatmul.mubr.f32.gmra.mrb[0].mxu0 %v853
        %v1632 = vpop.f32.mrb[0].mxu0
        %v1633 = vadd.f32 0.0, %v1632
        %v1634 = vpop.f32.mrb[0].mxu0
        %1635 = vmatprep.mubr.f32.mxu0 0.0
        %1636 = vmatmul.mubr.f32.gmra.mrb[0].mxu0 %v856
        %v1637 = vpop.f32.mrb[0].mxu0
        %v1638 = vadd.f32 0.0, %v1637
        %v1639 = vpop.f32.mrb[0].mxu0
        %1640 = vmatprep.mubr.f32.mxu0 0.0
        %1641 = vmatmul.mubr.f32.gmra.mrb[0].mxu0 %v859
        %v1642 = vpop.f32.mrb[0].mxu0
        %v1643 = vadd.f32 0.0, %v1642
        %v1644 = vpop.f32.mrb[0].mxu0
        %1645 = vmatprep.mubr.f32.mxu0 0.0
        %1646 = vmatmul.mubr.f32.gmra.mrb[0].mxu0 %v862
        %v1647 = vpop.f32.mrb[0].mxu0
        %v1648 = vadd.f32 0.0, %v1647
        %v1649 = vpop.f32.mrb[0].mxu0
        %1650 = vmatprep.mubr.f32.mxu0 0.0
        %1651 = vmatmul.mubr.f32.gmra.mrb[0].mxu0 %v865
        %v1652 = vpop.f32.mrb[0].mxu0
        %v1653 = vadd.f32 0.0, %v1652
        %v1654 = vpop.f32.mrb[0].mxu0
        %1655 = vmatprep.mubr.f32.mxu0 0.0
        %1656 = vmatmul.mubr.f32.gmra.mrb[0].mxu0 %v868
        %v1657 = vpop.f32.mrb[0].mxu0
        %v1658 = vadd.f32 0.0, %v1657
        %v1659 = vpop.f32.mrb[0].mxu0
        %1660 = vmatprep.mubr.f32.mxu0 0.0
        %1661 = vmatmul.mubr.f32.gmra.mrb[0].mxu0 %v871
        %v1662 = vpop.f32.mrb[0].mxu0
        %v1663 = vadd.f32 0.0, %v1662
        %v1664 = vpop.f32.mrb[0].mxu0
        %1665 = vmatprep.mubr.f32.mxu0 0.0
        %1666 = vmatmul.mubr.f32.gmra.mrb[0].mxu0 %v874
        %v1667 = vpop.f32.mrb[0].mxu0
        %v1668 = vadd.f32 0.0, %v1667
        %v1669 = vpop.f32.mrb[0].mxu0
        %1670 = vmatprep.mubr.f32.mxu0 0.0
        %1671 = vmatmul.mubr.f32.gmra.mrb[0].mxu0 %v877
        %v1672 = vpop.f32.mrb[0].mxu0
        %v1673 = vadd.f32 0.0, %v1672
        %v1674 = vpop.f32.mrb[0].mxu0
        %1675 = vmatprep.mubr.f32.mxu0 0.0
        %1676 = vmatmul.mubr.f32.gmra.mrb[0].mxu0 %v880
        %v1677 = vpop.f32.mrb[0].mxu0
        %v1678 = vadd.f32 0.0, %v1677
        %v1679 = vpop.f32.mrb[0].mxu0
        %1680 = vmatprep.mubr.f32.mxu0 0.0
        %1681 = vmatmul.mubr.f32.gmra.mrb[0].mxu0 %v883
        %v1682 = vpop.f32.mrb[0].mxu0
        %v1683 = vadd.f32 0.0, %v1682
        %v1684 = vpop.f32.mrb[0].mxu0
        %1685 = vmatprep.mubr.f32.mxu0 0.0
        %1686 = vmatmul.mubr.f32.gmra.mrb[0].mxu0 %v886
        %v1687 = vpop.f32.mrb[0].mxu0
        %v1688 = vadd.f32 0.0, %v1687
        %v1689 = vpop.f32.mrb[0].mxu0
        %1690 = vmatprep.mubr.f32.mxu0 0.0
        %1691 = vmatmul.mubr.f32.gmra.mrb[0].mxu0 %v889
        %v1692 = vpop.f32.mrb[0].mxu0
        %v1693 = vadd.f32 0.0, %v1692
        %v1694 = vpop.f32.mrb[0].mxu0
        %1695 = vmatprep.mubr.f32.mxu0 0.0
        %1696 = vmatmul.mubr.f32.gmra.mrb[0].mxu0 %v892
        %v1697 = vpop.f32.mrb[0].mxu0
        %v1698 = vadd.f32 0.0, %v1697
        %v1699 = vpop.f32.mrb[0].mxu0
        %1700 = vmatprep.mubr.f32.mxu0 0.0
        %1701 = vmatmul.mubr.f32.gmra.mrb[0].mxu0 %v895
        %v1702 = vpop.f32.mrb[0].mxu0
        %v1703 = vadd.f32 0.0, %v1702
        %v1704 = vpop.f32.mrb[0].mxu0
        %1705 = vmatprep.mubr.f32.mxu0 0.0
        %1706 = vmatmul.mubr.f32.gmra.mrb[0].mxu0 %v898
        %v1707 = vpop.f32.mrb[0].mxu0
        %v1708 = vadd.f32 0.0, %v1707
        %v1709 = vpop.f32.mrb[0].mxu0
        %1710 = vmatprep.mubr.f32.mxu0 0.0
        %1711 = vmatmul.mubr.f32.gmra.mrb[0].mxu0 %v901
        %v1712 = vpop.f32.mrb[0].mxu0
        %v1713 = vadd.f32 0.0, %v1712
        %v1714 = vpop.f32.mrb[0].mxu0
        %1715 = vmatprep.mubr.f32.mxu0 0.0
        %1716 = vmatmul.mubr.f32.gmra.mrb[0].mxu0 %v904
        %v1717 = vpop.f32.mrb[0].mxu0
        %v1718 = vadd.f32 0.0, %v1717
        %v1719 = vpop.f32.mrb[0].mxu0
        %1720 = vmatprep.mubr.f32.mxu0 0.0
        %1721 = vmatmul.mubr.f32.gmra.mrb[0].mxu0 %v907
        %v1722 = vpop.f32.mrb[0].mxu0
        %v1723 = vadd.f32 0.0, %v1722
        %v1724 = vpop.f32.mrb[0].mxu0
        %1725 = vmatprep.mubr.f32.mxu0 0.0
        %1726 = vmatmul.mubr.f32.gmra.mrb[0].mxu0 %v910
        %v1727 = vpop.f32.mrb[0].mxu0
        %v1728 = vadd.f32 0.0, %v1727
        %v1729 = vpop.f32.mrb[0].mxu0
        %1730 = vmatprep.mubr.f32.mxu0 0.0
        %1731 = vmatmul.mubr.f32.gmra.mrb[0].mxu0 %v913
        %v1732 = vpop.f32.mrb[0].mxu0
        %v1733 = vadd.f32 0.0, %v1732
        %v1734 = vpop.f32.mrb[0].mxu0
        %1735 = vmatprep.mubr.f32.mxu0 0.0
        %1736 = vmatmul.mubr.f32.gmra.mrb[0].mxu0 %v916
        %v1737 = vpop.f32.mrb[0].mxu0
        %v1738 = vadd.f32 0.0, %v1737
        %v1739 = vpop.f32.mrb[0].mxu0
        %1740 = vmatprep.mubr.f32.mxu0 0.0
        %1741 = vmatmul.mubr.f32.gmra.mrb[0].mxu0 %v919
        %v1742 = vpop.f32.mrb[0].mxu0
        %v1743 = vadd.f32 0.0, %v1742
        %v1744 = vpop.f32.mrb[0].mxu0
        %1745 = vmatprep.mubr.f32.mxu0 0.0
        %1746 = vmatmul.mubr.f32.gmra.mrb[0].mxu0 %v922
        %v1747 = vpop.f32.mrb[0].mxu0
        %v1748 = vadd.f32 0.0, %v1747
        %v1749 = vpop.f32.mrb[0].mxu0
        %1750 = vmatprep.mubr.f32.mxu0 0.0
        %1751 = vmatmul.mubr.f32.gmra.mrb[0].mxu0 %v925
        %v1752 = vpop.f32.mrb[0].mxu0
        %v1753 = vadd.f32 0.0, %v1752
        %v1754 = vpop.f32.mrb[0].mxu0
        %1755 = vmatprep.mubr.f32.mxu0 0.0
        %1756 = vmatmul.mubr.f32.gmra.mrb[0].mxu0 %v928
        %v1757 = vpop.f32.mrb[0].mxu0
        %v1758 = vadd.f32 0.0, %v1757
        %v1759 = vpop.f32.mrb[0].mxu0
        %1760 = vmatprep.mubr.f32.mxu0 0.0
        %1761 = vmatmul.mubr.f32.gmra.mrb[0].mxu0 %v931
        %v1762 = vpop.f32.mrb[0].mxu0
        %v1763 = vadd.f32 0.0, %v1762
        %v1764 = vpop.f32.mrb[0].mxu0
        %1765 = vmatprep.mubr.f32.mxu0 0.0
        %1766 = vmatmul.mubr.f32.gmra.mrb[0].mxu0 %v934
        %v1767 = vpop.f32.mrb[0].mxu0
        %v1768 = vadd.f32 0.0, %v1767
        %v1769 = vpop.f32.mrb[0].mxu0
        %1770 = vmatprep.mubr.f32.mxu0 0.0
        %1771 = vmatmul.mubr.f32.gmra.mrb[0].mxu0 %v937
        %v1772 = vpop.f32.mrb[0].mxu0
        %v1773 = vadd.f32 0.0, %v1772
        %v1774 = vpop.f32.mrb[0].mxu0
        %1775 = vmatprep.mubr.f32.mxu0 0.0
        %1776 = vmatmul.mubr.f32.gmra.mrb[0].mxu0 %v940
        %v1777 = vpop.f32.mrb[0].mxu0
        %v1778 = vadd.f32 0.0, %v1777
        %v1779 = vpop.f32.mrb[0].mxu0
        %1780 = vmatprep.mubr.f32.mxu0 0.0
        %1781 = vmatmul.mubr.f32.gmra.mrb[0].mxu0 %v943
        %v1782 = vpop.f32.mrb[0].mxu0
        %v1783 = vadd.f32 0.0, %v1782
        %v1784 = vpop.f32.mrb[0].mxu0
        %1785 = vmatprep.mubr.f32.mxu0 0.0
        %1786 = vmatmul.mubr.f32.gmra.mrb[0].mxu0 %v946
        %v1787 = vpop.f32.mrb[0].mxu0
        %v1788 = vadd.f32 0.0, %v1787
        %v1789 = vpop.f32.mrb[0].mxu0
        %1790 = vmatprep.mubr.f32.mxu0 0.0
        %1791 = vmatmul.mubr.f32.gmra.mrb[0].mxu0 %v949
        %v1792 = vpop.f32.mrb[0].mxu0
        %v1793 = vadd.f32 0.0, %v1792
        %v1794 = vpop.f32.mrb[0].mxu0
        %1795 = vmatprep.mubr.f32.mxu0 0.0
        %1796 = vmatmul.mubr.f32.gmra.mrb[0].mxu0 %v952
        %v1797 = vpop.f32.mrb[0].mxu0
        %v1798 = vadd.f32 0.0, %v1797
        %v1799 = vpop.f32.mrb[0].mxu0
        %1800 = vmatprep.mubr.f32.mxu0 0.0
        %1801 = vmatmul.mubr.f32.gmra.mrb[0].mxu0 %v955
        %v1802 = vpop.f32.mrb[0].mxu0
        %v1803 = vadd.f32 0.0, %v1802
        %v1804 = vpop.f32.mrb[0].mxu0
        %1805 = vdwg.mxu0
        %v1806 = vmax.f32 %v1028, %v1223
        %v1807 = vmax.f32 %v1033, %v1228
        %v1808 = vmax.f32 %v1038, %v1233
        %v1809 = vmax.f32 %v1043, %v1238
        %v1810 = vmax.f32 %v1048, %v1243
        %v1811 = vmax.f32 %v1053, %v1248
        %v1812 = vmax.f32 %v1058, %v1253
        %v1813 = vmax.f32 %v1063, %v1258
        %v1814 = vmax.f32 %v1068, %v1263
        %v1815 = vmax.f32 %v1073, %v1268
        %v1816 = vmax.f32 %v1078, %v1273
        %v1817 = vmax.f32 %v1083, %v1278
        %v1818 = vmax.f32 %v1088, %v1283
        %v1819 = vmax.f32 %v1093, %v1288
        %v1820 = vmax.f32 %v1098, %v1293
        %v1821 = vmax.f32 %v1103, %v1298
        %v1822 = vmax.f32 %v1108, %v1303
        %v1823 = vmax.f32 %v1113, %v1308
        %v1824 = vmax.f32 %v1118, %v1313
        %v1825 = vmax.f32 %v1123, %v1318
        %v1826 = vmax.f32 %v1128, %v1323
        %v1827 = vmax.f32 %v1133, %v1328
        %v1828 = vmax.f32 %v1138, %v1333
        %v1829 = vmax.f32 %v1143, %v1338
        %v1830 = vmax.f32 %v1148, %v1343
        %v1831 = vmax.f32 %v1153, %v1348
        %v1832 = vmax.f32 %v1158, %v1353
        %v1833 = vmax.f32 %v1163, %v1358
        %v1834 = vmax.f32 %v1168, %v1363
        %v1835 = vmax.f32 %v1173, %v1368
        %v1836 = vmax.f32 %v1178, %v1373
        %v1837 = vmax.f32 %v1183, %v1378
        %v1838 = vmax.f32 %v1188, %v1383
        %v1839 = vmax.f32 %v1193, %v1388
        %v1840 = vmax.f32 %v1198, %v1393
        %v1841 = vmax.f32 %v1203, %v1398
        %v1842 = vmax.f32 %v1208, %v1403
        %v1843 = vmax.f32 %v1213, %v1408
        %v1844 = vmax.f32 %v1218, %v1413
        %v1845 = vmax.f32 %v1418, %v1613
        %v1846 = vmax.f32 %v1423, %v1618
        %v1847 = vmax.f32 %v1428, %v1623
        %v1848 = vmax.f32 %v1433, %v1628
        %v1849 = vmax.f32 %v1438, %v1633
        %v1850 = vmax.f32 %v1443, %v1638
        %v1851 = vmax.f32 %v1448, %v1643
        %v1852 = vmax.f32 %v1453, %v1648
        %v1853 = vmax.f32 %v1458, %v1653
        %v1854 = vmax.f32 %v1463, %v1658
        %v1855 = vmax.f32 %v1468, %v1663
        %v1856 = vmax.f32 %v1473, %v1668
        %v1857 = vmax.f32 %v1478, %v1673
        %v1858 = vmax.f32 %v1483, %v1678
        %v1859 = vmax.f32 %v1488, %v1683
        %v1860 = vmax.f32 %v1493, %v1688
        %v1861 = vmax.f32 %v1498, %v1693
        %v1862 = vmax.f32 %v1503, %v1698
        %v1863 = vmax.f32 %v1508, %v1703
        %v1864 = vmax.f32 %v1513, %v1708
        %v1865 = vmax.f32 %v1518, %v1713
        %v1866 = vmax.f32 %v1523, %v1718
        %v1867 = vmax.f32 %v1528, %v1723
        %v1868 = vmax.f32 %v1533, %v1728
        %v1869 = vmax.f32 %v1538, %v1733
        %v1870 = vmax.f32 %v1543, %v1738
        %v1871 = vmax.f32 %v1548, %v1743
        %v1872 = vmax.f32 %v1553, %v1748
        %v1873 = vmax.f32 %v1558, %v1753
        %v1874 = vmax.f32 %v1563, %v1758
        %v1875 = vmax.f32 %v1568, %v1763
        %v1876 = vmax.f32 %v1573, %v1768
        %v1877 = vmax.f32 %v1578, %v1773
        %v1878 = vmax.f32 %v1583, %v1778
        %v1879 = vmax.f32 %v1588, %v1783
        %v1880 = vmax.f32 %v1593, %v1788
        %v1881 = vmax.f32 %v1598, %v1793
        %v1882 = vmax.f32 %v1603, %v1798
        %v1883 = vmax.f32 %v1608, %v1803
        %v1884 = vmax.f32 %v1806, %v1845
        %v1885 = vmax.f32 %v1807, %v1846
        %v1886 = vmax.f32 %v1808, %v1847
        %v1887 = vmax.f32 %v1809, %v1848
        %v1888 = vmax.f32 %v1810, %v1849
        %v1889 = vmax.f32 %v1811, %v1850
        %v1890 = vmax.f32 %v1812, %v1851
        %v1891 = vmax.f32 %v1813, %v1852
        %v1892 = vmax.f32 %v1814, %v1853
        %v1893 = vmax.f32 %v1815, %v1854
        %v1894 = vmax.f32 %v1816, %v1855
        %v1895 = vmax.f32 %v1817, %v1856
        %v1896 = vmax.f32 %v1818, %v1857
        %v1897 = vmax.f32 %v1819, %v1858
        %v1898 = vmax.f32 %v1820, %v1859
        %v1899 = vmax.f32 %v1821, %v1860
        %v1900 = vmax.f32 %v1822, %v1861
        %v1901 = vmax.f32 %v1823, %v1862
        %v1902 = vmax.f32 %v1824, %v1863
        %v1903 = vmax.f32 %v1825, %v1864
        %v1904 = vmax.f32 %v1826, %v1865
        %v1905 = vmax.f32 %v1827, %v1866
        %v1906 = vmax.f32 %v1828, %v1867
        %v1907 = vmax.f32 %v1829, %v1868
        %v1908 = vmax.f32 %v1830, %v1869
        %v1909 = vmax.f32 %v1831, %v1870
        %v1910 = vmax.f32 %v1832, %v1871
        %v1911 = vmax.f32 %v1833, %v1872
        %v1912 = vmax.f32 %v1834, %v1873
        %v1913 = vmax.f32 %v1835, %v1874
        %v1914 = vmax.f32 %v1836, %v1875
        %v1915 = vmax.f32 %v1837, %v1876
        %v1916 = vmax.f32 %v1838, %v1877
        %v1917 = vmax.f32 %v1839, %v1878
        %v1918 = vmax.f32 %v1840, %v1879
        %v1919 = vmax.f32 %v1841, %v1880
        %v1920 = vmax.f32 %v1842, %v1881
        %v1921 = vmax.f32 %v1843, %v1882
        %v1922 = vmax.f32 %v1844, %v1883
        %v1923 = vld [vmem:[%s2] sm:$0x1]
        %v1925 = vlaneseq
        %v1926 = vshrl.u32 %v1925, 7
        %v1927 = vsub.s32 0, %v1926
        %v1928 = vrot.slane %v1923, %v1927
        %v1930 = vadd.f32 %v1884, %v1928
        %v1931 = vadd.f32 %v1885, %v1928
        %v1932 = vadd.f32 %v1886, %v1928
        %v1933 = vadd.f32 %v1887, %v1928
        %v1934 = vadd.f32 %v1888, %v1928
        %v1935 = vadd.f32 %v1889, %v1928
        %v1936 = vadd.f32 %v1890, %v1928
        %v1937 = vadd.f32 %v1891, %v1928
        %v1938 = vadd.f32 %v1892, %v1928
        %v1939 = vadd.f32 %v1893, %v1928
        %v1940 = vadd.f32 %v1894, %v1928
        %v1941 = vadd.f32 %v1895, %v1928
        %v1942 = vadd.f32 %v1896, %v1928
        %v1943 = vadd.f32 %v1897, %v1928
        %v1944 = vadd.f32 %v1898, %v1928
        %v1945 = vadd.f32 %v1899, %v1928
        %v1946 = vadd.f32 %v1900, %v1928
        %v1947 = vadd.f32 %v1901, %v1928
        %v1948 = vadd.f32 %v1902, %v1928
        %v1949 = vadd.f32 %v1903, %v1928
        %v1950 = vadd.f32 %v1904, %v1928
        %v1951 = vadd.f32 %v1905, %v1928
        %v1952 = vadd.f32 %v1906, %v1928
        %v1953 = vadd.f32 %v1907, %v1928
        %v1954 = vadd.f32 %v1908, %v1928
        %v1955 = vadd.f32 %v1909, %v1928
        %v1956 = vadd.f32 %v1910, %v1928
        %v1957 = vadd.f32 %v1911, %v1928
        %v1958 = vadd.f32 %v1912, %v1928
        %v1959 = vadd.f32 %v1913, %v1928
        %v1960 = vadd.f32 %v1914, %v1928
        %v1961 = vadd.f32 %v1915, %v1928
        %v1962 = vadd.f32 %v1916, %v1928
        %v1963 = vadd.f32 %v1917, %v1928
        %v1964 = vadd.f32 %v1918, %v1928
        %v1965 = vadd.f32 %v1919, %v1928
        %v1966 = vadd.f32 %v1920, %v1928
        %v1967 = vadd.f32 %v1921, %v1928
        %v1968 = vadd.f32 %v1922, %v1928
        %v1969 = vmax.f32 %v1930, 0.0
        %v1970 = vmax.f32 %v1931, 0.0
        %v1971 = vmax.f32 %v1932, 0.0
        %v1972 = vmax.f32 %v1933, 0.0
        %v1973 = vmax.f32 %v1934, 0.0
        %v1974 = vmax.f32 %v1935, 0.0
        %v1975 = vmax.f32 %v1936, 0.0
        %v1976 = vmax.f32 %v1937, 0.0
        %v1977 = vmax.f32 %v1938, 0.0
        %v1978 = vmax.f32 %v1939, 0.0
        %v1979 = vmax.f32 %v1940, 0.0
        %v1980 = vmax.f32 %v1941, 0.0
        %v1981 = vmax.f32 %v1942, 0.0
        %v1982 = vmax.f32 %v1943, 0.0
        %v1983 = vmax.f32 %v1944, 0.0
        %v1984 = vmax.f32 %v1945, 0.0
        %v1985 = vmax.f32 %v1946, 0.0
        %v1986 = vmax.f32 %v1947, 0.0
        %v1987 = vmax.f32 %v1948, 0.0
        %v1988 = vmax.f32 %v1949, 0.0
        %v1989 = vmax.f32 %v1950, 0.0
        %v1990 = vmax.f32 %v1951, 0.0
        %v1991 = vmax.f32 %v1952, 0.0
        %v1992 = vmax.f32 %v1953, 0.0
        %v1993 = vmax.f32 %v1954, 0.0
        %v1994 = vmax.f32 %v1955, 0.0
        %v1995 = vmax.f32 %v1956, 0.0
        %v1996 = vmax.f32 %v1957, 0.0
        %v1997 = vmax.f32 %v1958, 0.0
        %v1998 = vmax.f32 %v1959, 0.0
        %v1999 = vmax.f32 %v1960, 0.0
        %v2000 = vmax.f32 %v1961, 0.0
        %v2001 = vmax.f32 %v1962, 0.0
        %v2002 = vmax.f32 %v1963, 0.0
        %v2003 = vmax.f32 %v1964, 0.0
        %v2004 = vmax.f32 %v1965, 0.0
        %v2005 = vmax.f32 %v1966, 0.0
        %v2006 = vmax.f32 %v1967, 0.0
        %v2007 = vmax.f32 %v1968, 0.0
        %vm2041 = vcmask 1046528
        %v2042 = vrot.slane %v1969, 1
        %v2043 = vrot.slane %v1970, 1
        %v2044 = vsel %vm2041, %v2042, %v2043
        %v2045 = vrot.slane %v1971, 1
        %v2046 = vsel %vm2041, %v2043, %v2045
        %v2047 = vrot.slane %v1972, 1
        %v2048 = vrot.slane %v1973, 1
        %v2049 = vsel %vm2041, %v2047, %v2048
        %v2050 = vrot.slane %v1974, 1
        %v2051 = vsel %vm2041, %v2048, %v2050
        %v2052 = vrot.slane %v1975, 1
        %v2053 = vrot.slane %v1976, 1
        %v2054 = vsel %vm2041, %v2052, %v2053
        %v2055 = vrot.slane %v1977, 1
        %v2056 = vsel %vm2041, %v2053, %v2055
        %v2057 = vrot.slane %v1978, 1
        %v2058 = vrot.slane %v1979, 1
        %v2059 = vsel %vm2041, %v2057, %v2058
        %v2060 = vrot.slane %v1980, 1
        %v2061 = vsel %vm2041, %v2058, %v2060
        %v2062 = vrot.slane %v1981, 1
        %v2063 = vrot.slane %v1982, 1
        %v2064 = vsel %vm2041, %v2062, %v2063
        %v2065 = vrot.slane %v1983, 1
        %v2066 = vsel %vm2041, %v2063, %v2065
        %v2067 = vrot.slane %v1984, 1
        %v2068 = vrot.slane %v1985, 1
        %v2069 = vsel %vm2041, %v2067, %v2068
        %v2070 = vrot.slane %v1986, 1
        %v2071 = vsel %vm2041, %v2068, %v2070
        %v2072 = vrot.slane %v1987, 1
        %v2073 = vrot.slane %v1988, 1
        %v2074 = vsel %vm2041, %v2072, %v2073
        %v2075 = vrot.slane %v1989, 1
        %v2076 = vsel %vm2041, %v2073, %v2075
        %v2077 = vrot.slane %v1990, 1
        %v2078 = vrot.slane %v1991, 1
        %v2079 = vsel %vm2041, %v2077, %v2078
        %v2080 = vrot.slane %v1992, 1
        %v2081 = vsel %vm2041, %v2078, %v2080
        %v2082 = vrot.slane %v1993, 1
        %v2083 = vrot.slane %v1994, 1
        %v2084 = vsel %vm2041, %v2082, %v2083
        %v2085 = vrot.slane %v1995, 1
        %v2086 = vsel %vm2041, %v2083, %v2085
        %v2087 = vrot.slane %v1996, 1
        %v2088 = vrot.slane %v1997, 1
        %v2089 = vsel %vm2041, %v2087, %v2088
        %v2090 = vrot.slane %v1998, 1
        %v2091 = vsel %vm2041, %v2088, %v2090
        %v2092 = vrot.slane %v1999, 1
        %v2093 = vrot.slane %v2000, 1
        %v2094 = vsel %vm2041, %v2092, %v2093
        %v2095 = vrot.slane %v2001, 1
        %v2096 = vsel %vm2041, %v2093, %v2095
        %vm2119 = vcmask 1045504
        %v2120 = vrot.slane %v1969, 2
        %v2121 = vrot.slane %v1970, 2
        %v2122 = vsel %vm2119, %v2120, %v2121
        %v2123 = vrot.slane %v1971, 2
        %v2124 = vsel %vm2119, %v2121, %v2123
        %v2125 = vrot.slane %v1972, 2
        %v2126 = vrot.slane %v1973, 2
        %v2127 = vsel %vm2119, %v2125, %v2126
        %v2128 = vrot.slane %v1974, 2
        %v2129 = vsel %vm2119, %v2126, %v2128
        %v2130 = vrot.slane %v1975, 2
        %v2131 = vrot.slane %v1976, 2
        %v2132 = vsel %vm2119, %v2130, %v2131
        %v2133 = vrot.slane %v1977, 2
        %v2134 = vsel %vm2119, %v2131, %v2133
        %v2135 = vrot.slane %v1978, 2
        %v2136 = vrot.slane %v1979, 2
        %v2137 = vsel %vm2119, %v2135, %v2136
        %v2138 = vrot.slane %v1980, 2
        %v2139 = vsel %vm2119, %v2136, %v2138
        %v2140 = vrot.slane %v1981, 2
        %v2141 = vrot.slane %v1982, 2
        %v2142 = vsel %vm2119, %v2140, %v2141
        %v2143 = vrot.slane %v1983, 2
        %v2144 = vsel %vm2119, %v2141, %v2143
        %v2145 = vrot.slane %v1984, 2
        %v2146 = vrot.slane %v1985, 2
        %v2147 = vsel %vm2119, %v2145, %v2146
        %v2148 = vrot.slane %v1986, 2
        %v2149 = vsel %vm2119, %v2146, %v2148
        %v2150 = vrot.slane %v1987, 2
        %v2151 = vrot.slane %v1988, 2
        %v2152 = vsel %vm2119, %v2150, %v2151
        %v2153 = vrot.slane %v1989, 2
        %v2154 = vsel %vm2119, %v2151, %v2153
        %v2155 = vrot.slane %v1990, 2
        %v2156 = vrot.slane %v1991, 2
        %v2157 = vsel %vm2119, %v2155, %v2156
        %v2158 = vrot.slane %v1992, 2
        %v2159 = vsel %vm2119, %v2156, %v2158
        %v2160 = vrot.slane %v1993, 2
        %v2161 = vrot.slane %v1994, 2
        %v2162 = vsel %vm2119, %v2160, %v2161
        %v2163 = vrot.slane %v1995, 2
        %v2164 = vsel %vm2119, %v2161, %v2163
        %v2165 = vrot.slane %v1996, 2
        %v2166 = vrot.slane %v1997, 2
        %v2167 = vsel %vm2119, %v2165, %v2166
        %v2168 = vrot.slane %v1998, 2
        %v2169 = vsel %vm2119, %v2166, %v2168
        %v2170 = vrot.slane %v1999, 2
        %v2171 = vrot.slane %v2000, 2
        %v2172 = vsel %vm2119, %v2170, %v2171
        %v2173 = vrot.slane %v2001, 2
        %v2174 = vsel %vm2119, %v2171, %v2173
        %v2200 = vrot.slane %v2002, 1
        %v2201 = vrot.slane %v2003, 1
        %v2202 = vsel %vm2041, %v2200, %v2201
        %v2203 = vrot.slane %v2004, 1
        %v2204 = vsel %vm2041, %v2201, %v2203
        %v2207 = vrot.slane %v2002, 2
        %v2208 = vrot.slane %v2003, 2
        %v2209 = vsel %vm2119, %v2207, %v2208
        %v2210 = vrot.slane %v2004, 2
        %v2211 = vsel %vm2119, %v2208, %v2210
        %v2217 = vrot.slane %v2005, 1
        %v2218 = vrot.slane %v2006, 1
        %v2219 = vsel %vm2041, %v2217, %v2218
        %v2220 = vrot.slane %v2007, 1
        %v2221 = vsel %vm2041, %v2218, %v2220
        %v2224 = vrot.slane %v2005, 2
        %v2225 = vrot.slane %v2006, 2
        %v2226 = vsel %vm2119, %v2224, %v2225
        %v2227 = vrot.slane %v2007, 2
        %v2228 = vsel %vm2119, %v2225, %v2227
        %v2231 = vld [vmem:[%s3] sm:$0xff]
        %v2232 = vld [vmem:[%s3 + $0x8] sm:$0xff]
        %v2233 = vld [vmem:[%s3 + $0x10] sm:$0xff]
        %v2234 = vld [vmem:[%s3 + $0x18] sm:$0xff]
        %v2235 = vld [vmem:[%s3 + $0x20] sm:$0xff]
        %v2236 = vld [vmem:[%s3 + $0x28] sm:$0xff]
        %v2237 = vld [vmem:[%s3 + $0x30] sm:$0xff]
        %v2238 = vld [vmem:[%s3 + $0x38] sm:$0xff]
        %v2239 = vld [vmem:[%s3 + $0x40] sm:$0xff]
        %v2240 = vld [vmem:[%s3 + $0x48] sm:$0xff]
        %v2241 = vld [vmem:[%s3 + $0x50] sm:$0xff]
        %v2242 = vld [vmem:[%s3 + $0x58] sm:$0xff]
        %v2243 = vld [vmem:[%s3 + $0x60] sm:$0xff]
        %v2244 = vld [vmem:[%s3 + $0x68] sm:$0xff]
        %v2245 = vld [vmem:[%s3 + $0x70] sm:$0xff]
        %v2246 = vld [vmem:[%s3 + $0x78] sm:$0xff]
        %v2247 = vld [vmem:[%s3 + $0x80] sm:$0xff]
        %v2248 = vld [vmem:[%s3 + $0x88] sm:$0xff]
        %v2249 = vld [vmem:[%s3 + $0x90] sm:$0xff]
        %v2250 = vld [vmem:[%s3 + $0x98] sm:$0xff]
        %v2251 = vld [vmem:[%s3 + $0xa0] sm:$0xff]
        %v2252 = vld [vmem:[%s3 + $0xa8] sm:$0xff]
        %v2253 = vld [vmem:[%s3 + $0xb0] sm:$0xff]
        %v2254 = vld [vmem:[%s3 + $0xb8] sm:$0xff]
        %v2255 = vld [vmem:[%s3 + $0xc0] sm:$0xff]
        %v2256 = vld [vmem:[%s3 + $0xc8] sm:$0xff]
        %v2257 = vld [vmem:[%s3 + $0xd0] sm:$0xff]
        %v2258 = vld [vmem:[%s3 + $0xd8] sm:$0xff]
        %v2259 = vld [vmem:[%s3 + $0xe0] sm:$0xff]
        %v2260 = vld [vmem:[%s3 + $0xe8] sm:$0xff]
        %v2261 = vld [vmem:[%s3 + $0xf0] sm:$0xff]
        %v2262 = vld [vmem:[%s3 + $0xf8] sm:$0xff]
        %v2263 = vld [vmem:[%s3 + $0x100] sm:$0xff]
        %v2264 = vld [vmem:[%s3 + $0x108] sm:$0xff]
        %v2265 = vld [vmem:[%s3 + $0x110] sm:$0xff]
        %v2266 = vld [vmem:[%s3 + $0x118] sm:$0xff]
        %v2267 = vld [vmem:[%s3 + $0x120] sm:$0xff]
        %v2268 = vld [vmem:[%s3 + $0x128] sm:$0xff]
        %v2269 = vld [vmem:[%s3 + $0x130] sm:$0xff]
        %v2270 = vld [vmem:[%s3 + $0x138] sm:$0xff]
        %v2271 = vld [vmem:[%s3 + $0x140] sm:$0xff]
        %v2272 = vld [vmem:[%s3 + $0x148] sm:$0xff]
        %v2273 = vld [vmem:[%s3 + $0x150] sm:$0xff]
        %v2274 = vld [vmem:[%s3 + $0x158] sm:$0xff]
        %v2275 = vld [vmem:[%s3 + $0x160] sm:$0xff]
        %v2276 = vld [vmem:[%s3 + $0x168] sm:$0xff]
        %v2277 = vld [vmem:[%s3 + $0x170] sm:$0xff]
        %v2278 = vld [vmem:[%s3 + $0x178] sm:$0xff]
        %v2279 = vld [vmem:[%s3 + $0x180] sm:$0xff]
        %v2280 = vld [vmem:[%s3 + $0x188] sm:$0xff]
        %v2281 = vld [vmem:[%s3 + $0x190] sm:$0xff]
        %v2282 = vld [vmem:[%s3 + $0x198] sm:$0xff]
        %v2283 = vld [vmem:[%s3 + $0x1a0] sm:$0xff]
        %v2284 = vld [vmem:[%s3 + $0x1a8] sm:$0xff]
        %v2285 = vld [vmem:[%s3 + $0x1b0] sm:$0xff]
        %v2286 = vld [vmem:[%s3 + $0x1b8] sm:$0xff]
        %v2287 = vld [vmem:[%s3 + $0x1c0] sm:$0xff]
        %v2288 = vld [vmem:[%s3 + $0x1c8] sm:$0xff]
        %v2289 = vld [vmem:[%s3 + $0x1d0] sm:$0xff]
        %v2290 = vld [vmem:[%s3 + $0x1d8] sm:$0xff]
        %v2291 = vld [vmem:[%s3 + $0x1e0] sm:$0xff]
        %v2292 = vld [vmem:[%s3 + $0x1e8] sm:$0xff]
        %v2293 = vld [vmem:[%s3 + $0x1f0] sm:$0xff]
        %v2294 = vld [vmem:[%s3 + $0x1f8] sm:$0xff]
        %v2295 = vld [vmem:[%s3 + $0x200] sm:$0xff]
        %v2296 = vld [vmem:[%s3 + $0x208] sm:$0xff]
        %v2297 = vld [vmem:[%s3 + $0x210] sm:$0xff]
        %v2298 = vld [vmem:[%s3 + $0x218] sm:$0xff]
        %v2299 = vld [vmem:[%s3 + $0x220] sm:$0xff]
        %v2300 = vld [vmem:[%s3 + $0x228] sm:$0xff]
        %v2301 = vld [vmem:[%s3 + $0x230] sm:$0xff]
        %v2302 = vld [vmem:[%s3 + $0x238] sm:$0xff]
        %v2303 = vld [vmem:[%s3 + $0x240] sm:$0xff]
        %v2304 = vld [vmem:[%s3 + $0x248] sm:$0xff]
        %v2305 = vld [vmem:[%s3 + $0x250] sm:$0xff]
        %v2306 = vld [vmem:[%s3 + $0x258] sm:$0xff]
        %v2307 = vld [vmem:[%s3 + $0x260] sm:$0xff]
        %v2308 = vld [vmem:[%s3 + $0x268] sm:$0xff]
        %v2309 = vld [vmem:[%s3 + $0x270] sm:$0xff]
        %v2310 = vld [vmem:[%s3 + $0x278] sm:$0xff]
        %v2311 = vld [vmem:[%s3 + $0x280] sm:$0xff]
        %v2312 = vld [vmem:[%s3 + $0x288] sm:$0xff]
        %v2313 = vld [vmem:[%s3 + $0x290] sm:$0xff]
        %v2314 = vld [vmem:[%s3 + $0x298] sm:$0xff]
        %v2315 = vld [vmem:[%s3 + $0x2a0] sm:$0xff]
        %v2316 = vld [vmem:[%s3 + $0x2a8] sm:$0xff]
        %v2317 = vld [vmem:[%s3 + $0x2b0] sm:$0xff]
        %v2318 = vld [vmem:[%s3 + $0x2b8] sm:$0xff]
        %v2319 = vld [vmem:[%s3 + $0x2c0] sm:$0xff]
        %v2320 = vld [vmem:[%s3 + $0x2c8] sm:$0xff]
        %v2321 = vld [vmem:[%s3 + $0x2d0] sm:$0xff]
        %v2322 = vld [vmem:[%s3 + $0x2d8] sm:$0xff]
        %v2323 = vld [vmem:[%s3 + $0x2e0] sm:$0xff]
        %v2324 = vld [vmem:[%s3 + $0x2e8] sm:$0xff]
        %v2325 = vld [vmem:[%s3 + $0x2f0] sm:$0xff]
        %v2326 = vld [vmem:[%s3 + $0x2f8] sm:$0xff]
        %v2327 = vld [vmem:[%s3 + $0x300] sm:$0xff]
        %v2328 = vld [vmem:[%s3 + $0x308] sm:$0xff]
        %v2329 = vld [vmem:[%s3 + $0x310] sm:$0xff]
        %v2330 = vld [vmem:[%s3 + $0x318] sm:$0xff]
        %v2331 = vld [vmem:[%s3 + $0x320] sm:$0xff]
        %v2332 = vld [vmem:[%s3 + $0x328] sm:$0xff]
        %v2333 = vld [vmem:[%s3 + $0x330] sm:$0xff]
        %v2334 = vld [vmem:[%s3 + $0x338] sm:$0xff]
        %v2335 = vld [vmem:[%s3 + $0x340] sm:$0xff]
        %v2336 = vld [vmem:[%s3 + $0x348] sm:$0xff]
        %v2337 = vld [vmem:[%s3 + $0x350] sm:$0xff]
        %v2338 = vld [vmem:[%s3 + $0x358] sm:$0xff]
        %v2339 = vld [vmem:[%s3 + $0x360] sm:$0xff]
        %v2340 = vld [vmem:[%s3 + $0x368] sm:$0xff]
        %v2341 = vld [vmem:[%s3 + $0x370] sm:$0xff]
        %v2342 = vld [vmem:[%s3 + $0x378] sm:$0xff]
        %v2343 = vld [vmem:[%s3 + $0x380] sm:$0xff]
        %v2344 = vld [vmem:[%s3 + $0x388] sm:$0xff]
        %v2345 = vld [vmem:[%s3 + $0x390] sm:$0xff]
        %v2346 = vld [vmem:[%s3 + $0x398] sm:$0xff]
        %v2347 = vld [vmem:[%s3 + $0x3a0] sm:$0xff]
        %v2348 = vld [vmem:[%s3 + $0x3a8] sm:$0xff]
        %v2349 = vld [vmem:[%s3 + $0x3b0] sm:$0xff]
        %v2350 = vld [vmem:[%s3 + $0x3b8] sm:$0xff]
        %v2351 = vld [vmem:[%s3 + $0x3c0] sm:$0xff]
        %v2352 = vld [vmem:[%s3 + $0x3c8] sm:$0xff]
        %v2353 = vld [vmem:[%s3 + $0x3d0] sm:$0xff]
        %v2354 = vld [vmem:[%s3 + $0x3d8] sm:$0xff]
        %v2355 = vld [vmem:[%s3 + $0x3e0] sm:$0xff]
        %v2356 = vld [vmem:[%s3 + $0x3e8] sm:$0xff]
        %v2357 = vld [vmem:[%s3 + $0x3f0] sm:$0xff]
        %v2358 = vld [vmem:[%s3 + $0x3f8] sm:$0xff]
        %v2359 = vld [vmem:[%s3 + $0x400] sm:$0xff]
        %v2360 = vld [vmem:[%s3 + $0x408] sm:$0xff]
        %v2361 = vld [vmem:[%s3 + $0x410] sm:$0xff]
        %v2362 = vld [vmem:[%s3 + $0x418] sm:$0xff]
        %v2363 = vld [vmem:[%s3 + $0x420] sm:$0xff]
        %v2364 = vld [vmem:[%s3 + $0x428] sm:$0xff]
        %v2365 = vld [vmem:[%s3 + $0x430] sm:$0xff]
        %v2366 = vld [vmem:[%s3 + $0x438] sm:$0xff]
        %v2367 = vld [vmem:[%s3 + $0x440] sm:$0xff]
        %v2368 = vld [vmem:[%s3 + $0x448] sm:$0xff]
        %v2369 = vld [vmem:[%s3 + $0x450] sm:$0xff]
        %v2370 = vld [vmem:[%s3 + $0x458] sm:$0xff]
        %v2371 = vld [vmem:[%s3 + $0x460] sm:$0xff]
        %v2372 = vld [vmem:[%s3 + $0x468] sm:$0xff]
        %v2373 = vld [vmem:[%s3 + $0x470] sm:$0xff]
        %v2374 = vld [vmem:[%s3 + $0x478] sm:$0xff]
        %2375 = vmatprep.subr.mxu0 0.0
        %2376 = vmatpush1.msra.mxu0 %v2231
        %2377 = vmatprep.subr.mxu0 0.0
        %2378 = vmatpush1.msra.mxu0 %v2232
        %2379 = vmatprep.subr.mxu0 0.0
        %2380 = vmatpush1.msra.mxu0 %v2233
        %2381 = vmatprep.subr.mxu0 0.0
        %2382 = vmatpush1.msra.mxu0 %v2234
        %2383 = vmatprep.subr.mxu0 0.0
        %2384 = vmatpush1.msra.mxu0 %v2235
        %2385 = vmatprep.subr.mxu0 0.0
        %2386 = vmatpush1.msra.mxu0 %v2236
        %2387 = vmatprep.subr.mxu0 0.0
        %2388 = vmatpush1.msra.mxu0 %v2237
        %2389 = vmatprep.subr.mxu0 0.0
        %2390 = vmatpush1.msra.mxu0 %v2238
        %2391 = vmatprep.subr.mxu0 0.0
        %2392 = vmatpush1.msra.mxu0 %v2239
        %2393 = vmatprep.subr.mxu0 0.0
        %2394 = vmatpush1.msra.mxu0 %v2240
        %2395 = vmatprep.subr.mxu0 0.0
        %2396 = vmatpush1.msra.mxu0 %v2241
        %2397 = vmatprep.subr.mxu0 0.0
        %2398 = vmatpush1.msra.mxu0 %v2242
        %2399 = vmatprep.subr.mxu0 0.0
        %2400 = vmatpush1.msra.mxu0 %v2243
        %2401 = vmatprep.subr.mxu0 0.0
        %2402 = vmatpush1.msra.mxu0 %v2244
        %2403 = vmatprep.subr.mxu0 0.0
        %2404 = vmatpush1.msra.mxu0 %v2245
        %2405 = vmatprep.subr.mxu0 0.0
        %2406 = vmatpush1.msra.mxu0 %v2246
        %2407 = vmatprep.subr.mxu0 0.0
        %2408 = vmatpush1.msra.mxu0 %v2247
        %2409 = vmatprep.subr.mxu0 0.0
        %2410 = vmatpush1.msra.mxu0 %v2248
        %2411 = vmatprep.subr.mxu0 0.0
        %2412 = vmatpush1.msra.mxu0 %v2249
        %2413 = vmatprep.subr.mxu0 0.0
        %2414 = vmatpush1.msra.mxu0 %v2250
        %2415 = vmatprep.subr.mxu0 0.0
        %2416 = vmatpush1.msra.mxu0 %v2251
        %2417 = vmatprep.subr.mxu0 0.0
        %2418 = vmatpush1.msra.mxu0 %v2252
        %2419 = vmatprep.subr.mxu0 0.0
        %2420 = vmatpush1.msra.mxu0 %v2253
        %2421 = vmatprep.subr.mxu0 0.0
        %2422 = vmatpush1.msra.mxu0 %v2254
        %2423 = vmatprep.subr.mxu0 0.0
        %2424 = vmatpush1.msra.mxu0 %v2255
        %2425 = vmatprep.subr.mxu0 0.0
        %2426 = vmatpush1.msra.mxu0 %v2256
        %2427 = vmatprep.subr.mxu0 0.0
        %2428 = vmatpush1.msra.mxu0 %v2257
        %2429 = vmatprep.subr.mxu0 0.0
        %2430 = vmatpush1.msra.mxu0 %v2258
        %2431 = vmatprep.subr.mxu0 0.0
        %2432 = vmatpush1.msra.mxu0 %v2259
        %2433 = vmatprep.subr.mxu0 0.0
        %2434 = vmatpush1.msra.mxu0 %v2260
        %2435 = vmatprep.subr.mxu0 0.0
        %2436 = vmatpush1.msra.mxu0 %v2261
        %2437 = vmatprep.subr.mxu0 0.0
        %2438 = vmatpush1.msra.mxu0 %v2262
        %2439 = vmatprep.mubr.f32.mxu0 %v2044
        %2440 = vmatmul.mubr.f32.gmra.mrb[0].mxu0 %v1969
        %v2441 = vpop.f32.mrb[0].mxu0
        %v2442 = vadd.f32 0.0, %v2441
        %v2443 = vpop.f32.mrb[0].mxu0
        %2444 = vmatprep.mubr.f32.mxu0 %v2046
        %2445 = vmatmul.mubr.f32.gmra.mrb[0].mxu0 %v1970
        %v2446 = vpop.f32.mrb[0].mxu0
        %v2447 = vadd.f32 0.0, %v2446
        %v2448 = vpop.f32.mrb[0].mxu0
        %2449 = vmatprep.mubr.f32.mxu0 %v2049
        %2450 = vmatmul.mubr.f32.gmra.mrb[0].mxu0 %v1972
        %v2451 = vpop.f32.mrb[0].mxu0
        %v2452 = vadd.f32 0.0, %v2451
        %v2453 = vpop.f32.mrb[0].mxu0
        %2454 = vmatprep.mubr.f32.mxu0 %v2051
        %2455 = vmatmul.mubr.f32.gmra.mrb[0].mxu0 %v1973
        %v2456 = vpop.f32.mrb[0].mxu0
        %v2457 = vadd.f32 0.0, %v2456
        %v2458 = vpop.f32.mrb[0].mxu0
        %2459 = vmatprep.mubr.f32.mxu0 %v2054
        %2460 = vmatmul.mubr.f32.gmra.mrb[0].mxu0 %v1975
        %v2461 = vpop.f32.mrb[0].mxu0
        %v2462 = vadd.f32 0.0, %v2461
        %v2463 = vpop.f32.mrb[0].mxu0
        %2464 = vmatprep.mubr.f32.mxu0 %v2056
        %2465 = vmatmul.mubr.f32.gmra.mrb[0].mxu0 %v1976
        %v2466 = vpop.f32.mrb[0].mxu0
        %v2467 = vadd.f32 0.0, %v2466
        %v2468 = vpop.f32.mrb[0].mxu0
        %2469 = vmatprep.mubr.f32.mxu0 %v2059
        %2470 = vmatmul.mubr.f32.gmra.mrb[0].mxu0 %v1978
        %v2471 = vpop.f32.mrb[0].mxu0
        %v2472 = vadd.f32 0.0, %v2471
        %v2473 = vpop.f32.mrb[0].mxu0
        %2474 = vmatprep.mubr.f32.mxu0 %v2061
        %2475 = vmatmul.mubr.f32.gmra.mrb[0].mxu0 %v1979
        %v2476 = vpop.f32.mrb[0].mxu0
        %v2477 = vadd.f32 0.0, %v2476
        %v2478 = vpop.f32.mrb[0].mxu0
        %2479 = vmatprep.mubr.f32.mxu0 %v2064
        %2480 = vmatmul.mubr.f32.gmra.mrb[0].mxu0 %v1981
        %v2481 = vpop.f32.mrb[0].mxu0
        %v2482 = vadd.f32 0.0, %v2481
        %v2483 = vpop.f32.mrb[0].mxu0
        %2484 = vmatprep.mubr.f32.mxu0 %v2066
        %2485 = vmatmul.mubr.f32.gmra.mrb[0].mxu0 %v1982
        %v2486 = vpop.f32.mrb[0].mxu0
        %v2487 = vadd.f32 0.0, %v2486
        %v2488 = vpop.f32.mrb[0].mxu0
        %2489 = vmatprep.mubr.f32.mxu0 %v2069
        %2490 = vmatmul.mubr.f32.gmra.mrb[0].mxu0 %v1984
        %v2491 = vpop.f32.mrb[0].mxu0
        %v2492 = vadd.f32 0.0, %v2491
        %v2493 = vpop.f32.mrb[0].mxu0
        %2494 = vmatprep.mubr.f32.mxu0 %v2071
        %2495 = vmatmul.mubr.f32.gmra.mrb[0].mxu0 %v1985
        %v2496 = vpop.f32.mrb[0].mxu0
        %v2497 = vadd.f32 0.0, %v2496
        %v2498 = vpop.f32.mrb[0].mxu0
        %2499 = vmatprep.mubr.f32.mxu0 %v2074
        %2500 = vmatmul.mubr.f32.gmra.mrb[0].mxu0 %v1987
        %v2501 = vpop.f32.mrb[0].mxu0
        %v2502 = vadd.f32 0.0, %v2501
        %v2503 = vpop.f32.mrb[0].mxu0
        %2504 = vmatprep.mubr.f32.mxu0 %v2076
        %2505 = vmatmul.mubr.f32.gmra.mrb[0].mxu0 %v1988
        %v2506 = vpop.f32.mrb[0].mxu0
        %v2507 = vadd.f32 0.0, %v2506
        %v2508 = vpop.f32.mrb[0].mxu0
        %2509 = vmatprep.mubr.f32.mxu0 %v2079
        %2510 = vmatmul.mubr.f32.gmra.mrb[0].mxu0 %v1990
        %v2511 = vpop.f32.mrb[0].mxu0
        %v2512 = vadd.f32 0.0, %v2511
        %v2513 = vpop.f32.mrb[0].mxu0
        %2514 = vmatprep.mubr.f32.mxu0 %v2081
        %2515 = vmatmul.mubr.f32.gmra.mrb[0].mxu0 %v1991
        %v2516 = vpop.f32.mrb[0].mxu0
        %v2517 = vadd.f32 0.0, %v2516
        %v2518 = vpop.f32.mrb[0].mxu0
        %2519 = vmatprep.mubr.f32.mxu0 %v2084
        %2520 = vmatmul.mubr.f32.gmra.mrb[0].mxu0 %v1993
        %v2521 = vpop.f32.mrb[0].mxu0
        %v2522 = vadd.f32 0.0, %v2521
        %v2523 = vpop.f32.mrb[0].mxu0
        %2524 = vmatprep.mubr.f32.mxu0 %v2086
        %2525 = vmatmul.mubr.f32.gmra.mrb[0].mxu0 %v1994
        %v2526 = vpop.f32.mrb[0].mxu0
        %v2527 = vadd.f32 0.0, %v2526
        %v2528 = vpop.f32.mrb[0].mxu0
        %2529 = vmatprep.mubr.f32.mxu0 %v2089
        %2530 = vmatmul.mubr.f32.gmra.mrb[0].mxu0 %v1996
        %v2531 = vpop.f32.mrb[0].mxu0
        %v2532 = vadd.f32 0.0, %v2531
        %v2533 = vpop.f32.mrb[0].mxu0
        %2534 = vmatprep.mubr.f32.mxu0 %v2091
        %2535 = vmatmul.mubr.f32.gmra.mrb[0].mxu0 %v1997
        %v2536 = vpop.f32.mrb[0].mxu0
        %v2537 = vadd.f32 0.0, %v2536
        %v2538 = vpop.f32.mrb[0].mxu0
        %2539 = vmatprep.mubr.f32.mxu0 %v2094
        %2540 = vmatmul.mubr.f32.gmra.mrb[0].mxu0 %v1999
        %v2541 = vpop.f32.mrb[0].mxu0
        %v2542 = vpop.f32.mrb[0].mxu0
        %2543 = vmatprep.mubr.f32.mxu0 %v2096
        %2544 = vmatmul.mubr.f32.gmra.mrb[0].mxu0 %v2000
        %v2545 = vpop.f32.mrb[0].mxu0
        %v2546 = vpop.f32.mrb[0].mxu0
        %2547 = vdwg.mxu0
        %2548 = vmatprep.subr.mxu0 0.0
        %2549 = vmatpush1.msra.mxu0 %v2263
        %2550 = vmatprep.subr.mxu0 0.0
        %2551 = vmatpush1.msra.mxu0 %v2264
        %2552 = vmatprep.subr.mxu0 0.0
        %2553 = vmatpush1.msra.mxu0 %v2265
        %2554 = vmatprep.subr.mxu0 0.0
        %2555 = vmatpush1.msra.mxu0 %v2266
        %2556 = vmatprep.subr.mxu0 0.0
        %2557 = vmatpush1.msra.mxu0 %v2267
        %2558 = vmatprep.subr.mxu0 0.0
        %2559 = vmatpush1.msra.mxu0 %v2268
        %2560 = vmatprep.subr.mxu0 0.0
        %2561 = vmatpush1.msra.mxu0 %v2269
        %2562 = vmatprep.subr.mxu0 0.0
        %2563 = vmatpush1.msra.mxu0 %v2270
        %2564 = vmatprep.subr.mxu0 0.0
        %2565 = vmatpush1.msra.mxu0 %v2271
        %2566 = vmatprep.subr.mxu0 0.0
        %2567 = vmatpush1.msra.mxu0 %v2272
        %2568 = vmatprep.subr.mxu0 0.0
        %2569 = vmatpush1.msra.mxu0 %v2273
        %2570 = vmatprep.subr.mxu0 0.0
        %2571 = vmatpush1.msra.mxu0 %v2274
        %2572 = vmatprep.subr.mxu0 0.0
        %2573 = vmatpush1.msra.mxu0 %v2275
        %2574 = vmatprep.subr.mxu0 0.0
        %2575 = vmatpush1.msra.mxu0 %v2276
        %2576 = vmatprep.subr.mxu0 0.0
        %2577 = vmatpush1.msra.mxu0 %v2277
        %2578 = vmatprep.subr.mxu0 0.0
        %2579 = vmatpush1.msra.mxu0 %v2278
        %2580 = vmatprep.subr.mxu0 0.0
        %2581 = vmatpush1.msra.mxu0 %v2279
        %2582 = vmatprep.subr.mxu0 0.0
        %2583 = vmatpush1.msra.mxu0 %v2280
        %2584 = vmatprep.subr.mxu0 0.0
        %2585 = vmatpush1.msra.mxu0 %v2281
        %2586 = vmatprep.subr.mxu0 0.0
        %2587 = vmatpush1.msra.mxu0 %v2282
        %2588 = vmatprep.subr.mxu0 0.0
        %2589 = vmatpush1.msra.mxu0 %v2283
        %2590 = vmatprep.subr.mxu0 0.0
        %2591 = vmatpush1.msra.mxu0 %v2284
        %2592 = vmatprep.subr.mxu0 0.0
        %2593 = vmatpush1.msra.mxu0 %v2285
        %2594 = vmatprep.subr.mxu0 0.0
        %2595 = vmatpush1.msra.mxu0 %v2286
        %2596 = vmatprep.subr.mxu0 0.0
        %2597 = vmatpush1.msra.mxu0 %v2287
        %2598 = vmatprep.subr.mxu0 0.0
        %2599 = vmatpush1.msra.mxu0 %v2288
        %2600 = vmatprep.subr.mxu0 0.0
        %2601 = vmatpush1.msra.mxu0 %v2289
        %2602 = vmatprep.subr.mxu0 0.0
        %2603 = vmatpush1.msra.mxu0 %v2290
        %2604 = vmatprep.subr.mxu0 0.0
        %2605 = vmatpush1.msra.mxu0 %v2291
        %2606 = vmatprep.subr.mxu0 0.0
        %2607 = vmatpush1.msra.mxu0 %v2292
        %2608 = vmatprep.subr.mxu0 0.0
        %2609 = vmatpush1.msra.mxu0 %v2293
        %2610 = vmatprep.subr.mxu0 0.0
        %2611 = vmatpush1.msra.mxu0 %v2294
        %2612 = vmatprep.mubr.f32.mxu0 %v1972
        %2613 = vmatmul.mubr.f32.gmra.mrb[0].mxu0 %v2122
        %v2614 = vpop.f32.mrb[0].mxu0
        %v2615 = vadd.f32 %v2442, %v2614
        %v2616 = vpop.f32.mrb[0].mxu0
        %2617 = vmatprep.mubr.f32.mxu0 %v1973
        %2618 = vmatmul.mubr.f32.gmra.mrb[0].mxu0 %v2124
        %v2619 = vpop.f32.mrb[0].mxu0
        %v2620 = vadd.f32 %v2447, %v2619
        %v2621 = vpop.f32.mrb[0].mxu0
        %2622 = vmatprep.mubr.f32.mxu0 %v1975
        %2623 = vmatmul.mubr.f32.gmra.mrb[0].mxu0 %v2127
        %v2624 = vpop.f32.mrb[0].mxu0
        %v2625 = vadd.f32 %v2452, %v2624
        %v2626 = vpop.f32.mrb[0].mxu0
        %2627 = vmatprep.mubr.f32.mxu0 %v1976
        %2628 = vmatmul.mubr.f32.gmra.mrb[0].mxu0 %v2129
        %v2629 = vpop.f32.mrb[0].mxu0
        %v2630 = vadd.f32 %v2457, %v2629
        %v2631 = vpop.f32.mrb[0].mxu0
        %2632 = vmatprep.mubr.f32.mxu0 %v1978
        %2633 = vmatmul.mubr.f32.gmra.mrb[0].mxu0 %v2132
        %v2634 = vpop.f32.mrb[0].mxu0
        %v2635 = vadd.f32 %v2462, %v2634
        %v2636 = vpop.f32.mrb[0].mxu0
        %2637 = vmatprep.mubr.f32.mxu0 %v1979
        %2638 = vmatmul.mubr.f32.gmra.mrb[0].mxu0 %v2134
        %v2639 = vpop.f32.mrb[0].mxu0
        %v2640 = vadd.f32 %v2467, %v2639
        %v2641 = vpop.f32.mrb[0].mxu0
        %2642 = vmatprep.mubr.f32.mxu0 %v1981
        %2643 = vmatmul.mubr.f32.gmra.mrb[0].mxu0 %v2137
        %v2644 = vpop.f32.mrb[0].mxu0
        %v2645 = vadd.f32 %v2472, %v2644
        %v2646 = vpop.f32.mrb[0].mxu0
        %2647 = vmatprep.mubr.f32.mxu0 %v1982
        %2648 = vmatmul.mubr.f32.gmra.mrb[0].mxu0 %v2139
        %v2649 = vpop.f32.mrb[0].mxu0
        %v2650 = vadd.f32 %v2477, %v2649
        %v2651 = vpop.f32.mrb[0].mxu0
        %2652 = vmatprep.mubr.f32.mxu0 %v1984
        %2653 = vmatmul.mubr.f32.gmra.mrb[0].mxu0 %v2142
        %v2654 = vpop.f32.mrb[0].mxu0
        %v2655 = vadd.f32 %v2482, %v2654
        %v2656 = vpop.f32.mrb[0].mxu0
        %2657 = vmatprep.mubr.f32.mxu0 %v1985
        %2658 = vmatmul.mubr.f32.gmra.mrb[0].mxu0 %v2144
        %v2659 = vpop.f32.mrb[0].mxu0
        %v2660 = vadd.f32 %v2487, %v2659
        %v2661 = vpop.f32.mrb[0].mxu0
        %2662 = vmatprep.mubr.f32.mxu0 %v1987
        %2663 = vmatmul.mubr.f32.gmra.mrb[0].mxu0 %v2147
        %v2664 = vpop.f32.mrb[0].mxu0
        %v2665 = vadd.f32 %v2492, %v2664
        %v2666 = vpop.f32.mrb[0].mxu0
        %2667 = vmatprep.mubr.f32.mxu0 %v1988
        %2668 = vmatmul.mubr.f32.gmra.mrb[0].mxu0 %v2149
        %v2669 = vpop.f32.mrb[0].mxu0
        %v2670 = vadd.f32 %v2497, %v2669
        %v2671 = vpop.f32.mrb[0].mxu0
        %2672 = vmatprep.mubr.f32.mxu0 %v1990
        %2673 = vmatmul.mubr.f32.gmra.mrb[0].mxu0 %v2152
        %v2674 = vpop.f32.mrb[0].mxu0
        %v2675 = vadd.f32 %v2502, %v2674
        %v2676 = vpop.f32.mrb[0].mxu0
        %2677 = vmatprep.mubr.f32.mxu0 %v1991
        %2678 = vmatmul.mubr.f32.gmra.mrb[0].mxu0 %v2154
        %v2679 = vpop.f32.mrb[0].mxu0
        %v2680 = vadd.f32 %v2507, %v2679
        %v2681 = vpop.f32.mrb[0].mxu0
        %2682 = vmatprep.mubr.f32.mxu0 %v1993
        %2683 = vmatmul.mubr.f32.gmra.mrb[0].mxu0 %v2157
        %v2684 = vpop.f32.mrb[0].mxu0
        %v2685 = vadd.f32 %v2512, %v2684
        %v2686 = vpop.f32.mrb[0].mxu0
        %2687 = vmatprep.mubr.f32.mxu0 %v1994
        %2688 = vmatmul.mubr.f32.gmra.mrb[0].mxu0 %v2159
        %v2689 = vpop.f32.mrb[0].mxu0
        %v2690 = vadd.f32 %v2517, %v2689
        %v2691 = vpop.f32.mrb[0].mxu0
        %2692 = vmatprep.mubr.f32.mxu0 %v1996
        %2693 = vmatmul.mubr.f32.gmra.mrb[0].mxu0 %v2162
        %v2694 = vpop.f32.mrb[0].mxu0
        %v2695 = vadd.f32 %v2522, %v2694
        %v2696 = vpop.f32.mrb[0].mxu0
        %2697 = vmatprep.mubr.f32.mxu0 %v1997
        %2698 = vmatmul.mubr.f32.gmra.mrb[0].mxu0 %v2164
        %v2699 = vpop.f32.mrb[0].mxu0
        %v2700 = vadd.f32 %v2527, %v2699
        %v2701 = vpop.f32.mrb[0].mxu0
        %2702 = vmatprep.mubr.f32.mxu0 %v1999
        %2703 = vmatmul.mubr.f32.gmra.mrb[0].mxu0 %v2167
        %v2704 = vpop.f32.mrb[0].mxu0
        %v2705 = vadd.f32 %v2532, %v2704
        %v2706 = vpop.f32.mrb[0].mxu0
        %2707 = vmatprep.mubr.f32.mxu0 %v2000
        %2708 = vmatmul.mubr.f32.gmra.mrb[0].mxu0 %v2169
        %v2709 = vpop.f32.mrb[0].mxu0
        %v2710 = vadd.f32 %v2537, %v2709
        %v2711 = vpop.f32.mrb[0].mxu0
        %2712 = vmatprep.mubr.f32.mxu0 %v2002
        %2713 = vmatmul.mubr.f32.gmra.mrb[0].mxu0 %v2172
        %v2714 = vpop.f32.mrb[0].mxu0
        %v2715 = vpop.f32.mrb[0].mxu0
        %2716 = vmatprep.mubr.f32.mxu0 %v2003
        %2717 = vmatmul.mubr.f32.gmra.mrb[0].mxu0 %v2174
        %v2718 = vpop.f32.mrb[0].mxu0
        %v2719 = vpop.f32.mrb[0].mxu0
        %2720 = vdwg.mxu0
        %2721 = vmatprep.subr.mxu0 0.0
        %2722 = vmatpush1.msra.mxu0 %v2295
        %2723 = vmatprep.subr.mxu0 0.0
        %2724 = vmatpush1.msra.mxu0 %v2296
        %2725 = vmatprep.subr.mxu0 0.0
        %2726 = vmatpush1.msra.mxu0 %v2297
        %2727 = vmatprep.subr.mxu0 0.0
        %2728 = vmatpush1.msra.mxu0 %v2298
        %2729 = vmatprep.subr.mxu0 0.0
        %2730 = vmatpush1.msra.mxu0 %v2299
        %2731 = vmatprep.subr.mxu0 0.0
        %2732 = vmatpush1.msra.mxu0 %v2300
        %2733 = vmatprep.subr.mxu0 0.0
        %2734 = vmatpush1.msra.mxu0 %v2301
        %2735 = vmatprep.subr.mxu0 0.0
        %2736 = vmatpush1.msra.mxu0 %v2302
        %2737 = vmatprep.subr.mxu0 0.0
        %2738 = vmatpush1.msra.mxu0 %v2303
        %2739 = vmatprep.subr.mxu0 0.0
        %2740 = vmatpush1.msra.mxu0 %v2304
        %2741 = vmatprep.subr.mxu0 0.0
        %2742 = vmatpush1.msra.mxu0 %v2305
        %2743 = vmatprep.subr.mxu0 0.0
        %2744 = vmatpush1.msra.mxu0 %v2306
        %2745 = vmatprep.subr.mxu0 0.0
        %2746 = vmatpush1.msra.mxu0 %v2307
        %2747 = vmatprep.subr.mxu0 0.0
        %2748 = vmatpush1.msra.mxu0 %v2308
        %2749 = vmatprep.subr.mxu0 0.0
        %2750 = vmatpush1.msra.mxu0 %v2309
        %2751 = vmatprep.subr.mxu0 0.0
        %2752 = vmatpush1.msra.mxu0 %v2310
        %2753 = vmatprep.subr.mxu0 0.0
        %2754 = vmatpush1.msra.mxu0 %v2311
        %2755 = vmatprep.subr.mxu0 0.0
        %2756 = vmatpush1.msra.mxu0 %v2312
        %2757 = vmatprep.subr.mxu0 0.0
        %2758 = vmatpush1.msra.mxu0 %v2313
        %2759 = vmatprep.subr.mxu0 0.0
        %2760 = vmatpush1.msra.mxu0 %v2314
        %2761 = vmatprep.subr.mxu0 0.0
        %2762 = vmatpush1.msra.mxu0 %v2315
        %2763 = vmatprep.subr.mxu0 0.0
        %2764 = vmatpush1.msra.mxu0 %v2316
        %2765 = vmatprep.subr.mxu0 0.0
        %2766 = vmatpush1.msra.mxu0 %v2317
        %2767 = vmatprep.subr.mxu0 0.0
        %2768 = vmatpush1.msra.mxu0 %v2318
        %2769 = vmatprep.subr.mxu0 0.0
        %2770 = vmatpush1.msra.mxu0 %v2319
        %2771 = vmatprep.subr.mxu0 0.0
        %2772 = vmatpush1.msra.mxu0 %v2320
        %2773 = vmatprep.subr.mxu0 0.0
        %2774 = vmatpush1.msra.mxu0 %v2321
        %2775 = vmatprep.subr.mxu0 0.0
        %2776 = vmatpush1.msra.mxu0 %v2322
        %2777 = vmatprep.subr.mxu0 0.0
        %2778 = vmatpush1.msra.mxu0 %v2323
        %2779 = vmatprep.subr.mxu0 0.0
        %2780 = vmatpush1.msra.mxu0 %v2324
        %2781 = vmatprep.subr.mxu0 0.0
        %2782 = vmatpush1.msra.mxu0 %v2325
        %2783 = vmatprep.subr.mxu0 0.0
        %2784 = vmatpush1.msra.mxu0 %v2326
        %2785 = vmatprep.mubr.f32.mxu0 %v2127
        %2786 = vmatmul.mubr.f32.gmra.mrb[0].mxu0 %v2049
        %v2787 = vpop.f32.mrb[0].mxu0
        %v2788 = vadd.f32 %v2615, %v2787
        %v2789 = vpop.f32.mrb[0].mxu0
        %2790 = vmatprep.mubr.f32.mxu0 %v2129
        %2791 = vmatmul.mubr.f32.gmra.mrb[0].mxu0 %v2051
        %v2792 = vpop.f32.mrb[0].mxu0
        %v2793 = vadd.f32 %v2620, %v2792
        %v2794 = vpop.f32.mrb[0].mxu0
        %2795 = vmatprep.mubr.f32.mxu0 %v2132
        %2796 = vmatmul.mubr.f32.gmra.mrb[0].mxu0 %v2054
        %v2797 = vpop.f32.mrb[0].mxu0
        %v2798 = vadd.f32 %v2625, %v2797
        %v2799 = vpop.f32.mrb[0].mxu0
        %2800 = vmatprep.mubr.f32.mxu0 %v2134
        %2801 = vmatmul.mubr.f32.gmra.mrb[0].mxu0 %v2056
        %v2802 = vpop.f32.mrb[0].mxu0
        %v2803 = vadd.f32 %v2630, %v2802
        %v2804 = vpop.f32.mrb[0].mxu0
        %2805 = vmatprep.mubr.f32.mxu0 %v2137
        %2806 = vmatmul.mubr.f32.gmra.mrb[0].mxu0 %v2059
        %v2807 = vpop.f32.mrb[0].mxu0
        %v2808 = vadd.f32 %v2635, %v2807
        %v2809 = vpop.f32.mrb[0].mxu0
        %2810 = vmatprep.mubr.f32.mxu0 %v2139
        %2811 = vmatmul.mubr.f32.gmra.mrb[0].mxu0 %v2061
        %v2812 = vpop.f32.mrb[0].mxu0
        %v2813 = vadd.f32 %v2640, %v2812
        %v2814 = vpop.f32.mrb[0].mxu0
        %2815 = vmatprep.mubr.f32.mxu0 %v2142
        %2816 = vmatmul.mubr.f32.gmra.mrb[0].mxu0 %v2064
        %v2817 = vpop.f32.mrb[0].mxu0
        %v2818 = vadd.f32 %v2645, %v2817
        %v2819 = vpop.f32.mrb[0].mxu0
        %2820 = vmatprep.mubr.f32.mxu0 %v2144
        %2821 = vmatmul.mubr.f32.gmra.mrb[0].mxu0 %v2066
        %v2822 = vpop.f32.mrb[0].mxu0
        %v2823 = vadd.f32 %v2650, %v2822
        %v2824 = vpop.f32.mrb[0].mxu0
        %2825 = vmatprep.mubr.f32.mxu0 %v2147
        %2826 = vmatmul.mubr.f32.gmra.mrb[0].mxu0 %v2069
        %v2827 = vpop.f32.mrb[0].mxu0
        %v2828 = vadd.f32 %v2655, %v2827
        %v2829 = vpop.f32.mrb[0].mxu0
        %2830 = vmatprep.mubr.f32.mxu0 %v2149
        %2831 = vmatmul.mubr.f32.gmra.mrb[0].mxu0 %v2071
        %v2832 = vpop.f32.mrb[0].mxu0
        %v2833 = vadd.f32 %v2660, %v2832
        %v2834 = vpop.f32.mrb[0].mxu0
        %2835 = vmatprep.mubr.f32.mxu0 %v2152
        %2836 = vmatmul.mubr.f32.gmra.mrb[0].mxu0 %v2074
        %v2837 = vpop.f32.mrb[0].mxu0
        %v2838 = vadd.f32 %v2665, %v2837
        %v2839 = vpop.f32.mrb[0].mxu0
        %2840 = vmatprep.mubr.f32.mxu0 %v2154
        %2841 = vmatmul.mubr.f32.gmra.mrb[0].mxu0 %v2076
        %v2842 = vpop.f32.mrb[0].mxu0
        %v2843 = vadd.f32 %v2670, %v2842
        %v2844 = vpop.f32.mrb[0].mxu0
        %2845 = vmatprep.mubr.f32.mxu0 %v2157
        %2846 = vmatmul.mubr.f32.gmra.mrb[0].mxu0 %v2079
        %v2847 = vpop.f32.mrb[0].mxu0
        %v2848 = vadd.f32 %v2675, %v2847
        %v2849 = vpop.f32.mrb[0].mxu0
        %2850 = vmatprep.mubr.f32.mxu0 %v2159
        %2851 = vmatmul.mubr.f32.gmra.mrb[0].mxu0 %v2081
        %v2852 = vpop.f32.mrb[0].mxu0
        %v2853 = vadd.f32 %v2680, %v2852
        %v2854 = vpop.f32.mrb[0].mxu0
        %2855 = vmatprep.mubr.f32.mxu0 %v2162
        %2856 = vmatmul.mubr.f32.gmra.mrb[0].mxu0 %v2084
        %v2857 = vpop.f32.mrb[0].mxu0
        %v2858 = vadd.f32 %v2685, %v2857
        %v2859 = vpop.f32.mrb[0].mxu0
        %2860 = vmatprep.mubr.f32.mxu0 %v2164
        %2861 = vmatmul.mubr.f32.gmra.mrb[0].mxu0 %v2086
        %v2862 = vpop.f32.mrb[0].mxu0
        %v2863 = vadd.f32 %v2690, %v2862
        %v2864 = vpop.f32.mrb[0].mxu0
        %2865 = vmatprep.mubr.f32.mxu0 %v2167
        %2866 = vmatmul.mubr.f32.gmra.mrb[0].mxu0 %v2089
        %v2867 = vpop.f32.mrb[0].mxu0
        %v2868 = vadd.f32 %v2695, %v2867
        %v2869 = vpop.f32.mrb[0].mxu0
        %2870 = vmatprep.mubr.f32.mxu0 %v2169
        %2871 = vmatmul.mubr.f32.gmra.mrb[0].mxu0 %v2091
        %v2872 = vpop.f32.mrb[0].mxu0
        %v2873 = vadd.f32 %v2700, %v2872
        %v2874 = vpop.f32.mrb[0].mxu0
        %2875 = vmatprep.mubr.f32.mxu0 %v2172
        %2876 = vmatmul.mubr.f32.gmra.mrb[0].mxu0 %v2094
        %v2877 = vpop.f32.mrb[0].mxu0
        %v2878 = vadd.f32 %v2705, %v2877
        %v2879 = vpop.f32.mrb[0].mxu0
        %2880 = vmatprep.mubr.f32.mxu0 %v2174
        %2881 = vmatmul.mubr.f32.gmra.mrb[0].mxu0 %v2096
        %v2882 = vpop.f32.mrb[0].mxu0
        %v2883 = vadd.f32 %v2710, %v2882
        %v2884 = vpop.f32.mrb[0].mxu0
        %2885 = vmatprep.mubr.f32.mxu0 %v2209
        %2886 = vmatmul.mubr.f32.gmra.mrb[0].mxu0 %v2202
        %v2887 = vpop.f32.mrb[0].mxu0
        %v2888 = vpop.f32.mrb[0].mxu0
        %2889 = vmatprep.mubr.f32.mxu0 %v2211
        %2890 = vmatmul.mubr.f32.gmra.mrb[0].mxu0 %v2204
        %v2891 = vpop.f32.mrb[0].mxu0
        %v2892 = vpop.f32.mrb[0].mxu0
        %2893 = vdwg.mxu0
        %2894 = vmatprep.subr.mxu0 0.0
        %2895 = vmatpush1.msra.mxu0 %v2327
        %2896 = vmatprep.subr.mxu0 0.0
        %2897 = vmatpush1.msra.mxu0 %v2328
        %2898 = vmatprep.subr.mxu0 0.0
        %2899 = vmatpush1.msra.mxu0 %v2329
        %2900 = vmatprep.subr.mxu0 0.0
        %2901 = vmatpush1.msra.mxu0 %v2330
        %2902 = vmatprep.subr.mxu0 0.0
        %2903 = vmatpush1.msra.mxu0 %v2331
        %2904 = vmatprep.subr.mxu0 0.0
        %2905 = vmatpush1.msra.mxu0 %v2332
        %2906 = vmatprep.subr.mxu0 0.0
        %2907 = vmatpush1.msra.mxu0 %v2333
        %2908 = vmatprep.subr.mxu0 0.0
        %2909 = vmatpush1.msra.mxu0 %v2334
        %2910 = vmatprep.subr.mxu0 0.0
        %2911 = vmatpush1.msra.mxu0 %v2335
        %2912 = vmatprep.subr.mxu0 0.0
        %2913 = vmatpush1.msra.mxu0 %v2336
        %2914 = vmatprep.subr.mxu0 0.0
        %2915 = vmatpush1.msra.mxu0 %v2337
        %2916 = vmatprep.subr.mxu0 0.0
        %2917 = vmatpush1.msra.mxu0 %v2338
        %2918 = vmatprep.subr.mxu0 0.0
        %2919 = vmatpush1.msra.mxu0 %v2339
        %2920 = vmatprep.subr.mxu0 0.0
        %2921 = vmatpush1.msra.mxu0 %v2340
        %2922 = vmatprep.subr.mxu0 0.0
        %2923 = vmatpush1.msra.mxu0 %v2341
        %2924 = vmatprep.subr.mxu0 0.0
        %2925 = vmatpush1.msra.mxu0 %v2342
        %2926 = vmatprep.subr.mxu0 0.0
        %2927 = vmatpush1.msra.mxu0 %v2343
        %2928 = vmatprep.subr.mxu0 0.0
        %2929 = vmatpush1.msra.mxu0 %v2344
        %2930 = vmatprep.subr.mxu0 0.0
        %2931 = vmatpush1.msra.mxu0 %v2345
        %2932 = vmatprep.subr.mxu0 0.0
        %2933 = vmatpush1.msra.mxu0 %v2346
        %2934 = vmatprep.subr.mxu0 0.0
        %2935 = vmatpush1.msra.mxu0 %v2347
        %2936 = vmatprep.subr.mxu0 0.0
        %2937 = vmatpush1.msra.mxu0 %v2348
        %2938 = vmatprep.subr.mxu0 0.0
        %2939 = vmatpush1.msra.mxu0 %v2349
        %2940 = vmatprep.subr.mxu0 0.0
        %2941 = vmatpush1.msra.mxu0 %v2350
        %2942 = vmatprep.subr.mxu0 0.0
        %2943 = vmatpush1.msra.mxu0 %v2351
        %2944 = vmatprep.subr.mxu0 0.0
        %2945 = vmatpush1.msra.mxu0 %v2352
        %2946 = vmatprep.subr.mxu0 0.0
        %2947 = vmatpush1.msra.mxu0 %v2353
        %2948 = vmatprep.subr.mxu0 0.0
        %2949 = vmatpush1.msra.mxu0 %v2354
        %2950 = vmatprep.subr.mxu0 0.0
        %2951 = vmatpush1.msra.mxu0 %v2355
        %2952 = vmatprep.subr.mxu0 0.0
        %2953 = vmatpush1.msra.mxu0 %v2356
        %2954 = vmatprep.subr.mxu0 0.0
        %2955 = vmatpush1.msra.mxu0 %v2357
        %2956 = vmatprep.subr.mxu0 0.0
        %2957 = vmatpush1.msra.mxu0 %v2358
        %2958 = vmatprep.mubr.f32.mxu0 %v2054
        %2959 = vmatmul.mubr.f32.gmra.mrb[0].mxu0 %v1975
        %v2960 = vpop.f32.mrb[0].mxu0
        %v2961 = vadd.f32 %v2788, %v2960
        %v2962 = vpop.f32.mrb[0].mxu0
        %2963 = vmatprep.mubr.f32.mxu0 %v2056
        %2964 = vmatmul.mubr.f32.gmra.mrb[0].mxu0 %v1976
        %v2965 = vpop.f32.mrb[0].mxu0
        %v2966 = vadd.f32 %v2793, %v2965
        %v2967 = vpop.f32.mrb[0].mxu0
        %2968 = vmatprep.mubr.f32.mxu0 %v2059
        %2969 = vmatmul.mubr.f32.gmra.mrb[0].mxu0 %v1978
        %v2970 = vpop.f32.mrb[0].mxu0
        %v2971 = vadd.f32 %v2798, %v2970
        %v2972 = vpop.f32.mrb[0].mxu0
        %2973 = vmatprep.mubr.f32.mxu0 %v2061
        %2974 = vmatmul.mubr.f32.gmra.mrb[0].mxu0 %v1979
        %v2975 = vpop.f32.mrb[0].mxu0
        %v2976 = vadd.f32 %v2803, %v2975
        %v2977 = vpop.f32.mrb[0].mxu0
        %2978 = vmatprep.mubr.f32.mxu0 %v2064
        %2979 = vmatmul.mubr.f32.gmra.mrb[0].mxu0 %v1981
        %v2980 = vpop.f32.mrb[0].mxu0
        %v2981 = vadd.f32 %v2808, %v2980
        %v2982 = vpop.f32.mrb[0].mxu0
        %2983 = vmatprep.mubr.f32.mxu0 %v2066
        %2984 = vmatmul.mubr.f32.gmra.mrb[0].mxu0 %v1982
        %v2985 = vpop.f32.mrb[0].mxu0
        %v2986 = vadd.f32 %v2813, %v2985
        %v2987 = vpop.f32.mrb[0].mxu0
        %2988 = vmatprep.mubr.f32.mxu0 %v2069
        %2989 = vmatmul.mubr.f32.gmra.mrb[0].mxu0 %v1984
        %v2990 = vpop.f32.mrb[0].mxu0
        %v2991 = vadd.f32 %v2818, %v2990
        %v2992 = vpop.f32.mrb[0].mxu0
        %2993 = vmatprep.mubr.f32.mxu0 %v2071
        %2994 = vmatmul.mubr.f32.gmra.mrb[0].mxu0 %v1985
        %v2995 = vpop.f32.mrb[0].mxu0
        %v2996 = vadd.f32 %v2823, %v2995
        %v2997 = vpop.f32.mrb[0].mxu0
        %2998 = vmatprep.mubr.f32.mxu0 %v2074
        %2999 = vmatmul.mubr.f32.gmra.mrb[0].mxu0 %v1987
        %v3000 = vpop.f32.mrb[0].mxu0
        %v3001 = vadd.f32 %v2828, %v3000
        %v3002 = vpop.f32.mrb[0].mxu0
        %3003 = vmatprep.mubr.f32.mxu0 %v2076
        %3004 = vmatmul.mubr.f32.gmra.mrb[0].mxu0 %v1988
        %v3005 = vpop.f32.mrb[0].mxu0
        %v3006 = vadd.f32 %v2833, %v3005
        %v3007 = vpop.f32.mrb[0].mxu0
        %3008 = vmatprep.mubr.f32.mxu0 %v2079
        %3009 = vmatmul.mubr.f32.gmra.mrb[0].mxu0 %v1990
        %v3010 = vpop.f32.mrb[0].mxu0
        %v3011 = vadd.f32 %v2838, %v3010
        %v3012 = vpop.f32.mrb[0].mxu0
        %3013 = vmatprep.mubr.f32.mxu0 %v2081
        %3014 = vmatmul.mubr.f32.gmra.mrb[0].mxu0 %v1991
        %v3015 = vpop.f32.mrb[0].mxu0
        %v3016 = vadd.f32 %v2843, %v3015
        %v3017 = vpop.f32.mrb[0].mxu0
        %3018 = vmatprep.mubr.f32.mxu0 %v2084
        %3019 = vmatmul.mubr.f32.gmra.mrb[0].mxu0 %v1993
        %v3020 = vpop.f32.mrb[0].mxu0
        %v3021 = vadd.f32 %v2848, %v3020
        %v3022 = vpop.f32.mrb[0].mxu0
        %3023 = vmatprep.mubr.f32.mxu0 %v2086
        %3024 = vmatmul.mubr.f32.gmra.mrb[0].mxu0 %v1994
        %v3025 = vpop.f32.mrb[0].mxu0
        %v3026 = vadd.f32 %v2853, %v3025
        %v3027 = vpop.f32.mrb[0].mxu0
        %3028 = vmatprep.mubr.f32.mxu0 %v2089
        %3029 = vmatmul.mubr.f32.gmra.mrb[0].mxu0 %v1996
        %v3030 = vpop.f32.mrb[0].mxu0
        %v3031 = vadd.f32 %v2858, %v3030
        %v3032 = vpop.f32.mrb[0].mxu0
        %3033 = vmatprep.mubr.f32.mxu0 %v2091
        %3034 = vmatmul.mubr.f32.gmra.mrb[0].mxu0 %v1997
        %v3035 = vpop.f32.mrb[0].mxu0
        %v3036 = vadd.f32 %v2863, %v3035
        %v3037 = vpop.f32.mrb[0].mxu0
        %3038 = vmatprep.mubr.f32.mxu0 %v2094
        %3039 = vmatmul.mubr.f32.gmra.mrb[0].mxu0 %v1999
        %v3040 = vpop.f32.mrb[0].mxu0
        %v3041 = vadd.f32 %v2868, %v3040
        %v3042 = vpop.f32.mrb[0].mxu0
        %3043 = vmatprep.mubr.f32.mxu0 %v2096
        %3044 = vmatmul.mubr.f32.gmra.mrb[0].mxu0 %v2000
        %v3045 = vpop.f32.mrb[0].mxu0
        %v3046 = vadd.f32 %v2873, %v3045
        %v3047 = vpop.f32.mrb[0].mxu0
        %3048 = vmatprep.mubr.f32.mxu0 %v2202
        %3049 = vmatmul.mubr.f32.gmra.mrb[0].mxu0 %v2002
        %v3050 = vpop.f32.mrb[0].mxu0
        %v3051 = vadd.f32 %v2878, %v3050
        %v3052 = vpop.f32.mrb[0].mxu0
        %3053 = vmatprep.mubr.f32.mxu0 %v2204
        %3054 = vmatmul.mubr.f32.gmra.mrb[0].mxu0 %v2003
        %v3055 = vpop.f32.mrb[0].mxu0
        %v3056 = vadd.f32 %v2883, %v3055
        %v3057 = vpop.f32.mrb[0].mxu0
        %3058 = vmatprep.mubr.f32.mxu0 %v2219
        %3059 = vmatmul.mubr.f32.gmra.mrb[0].mxu0 %v2005
        %v3060 = vpop.f32.mrb[0].mxu0
        %v3061 = vpop.f32.mrb[0].mxu0
        %3062 = vmatprep.mubr.f32.mxu0 %v2221
        %3063 = vmatmul.mubr.f32.gmra.mrb[0].mxu0 %v2006
        %v3064 = vpop.f32.mrb[0].mxu0
        %v3065 = vpop.f32.mrb[0].mxu0
        %3066 = vdwg.mxu0
        %3067 = vmatprep.subr.mxu0 0.0
        %3068 = vmatpush1.msra.mxu0 %v2359
        %3069 = vmatprep.subr.mxu0 0.0
        %3070 = vmatpush1.msra.mxu0 %v2360
        %3071 = vmatprep.subr.mxu0 0.0
        %3072 = vmatpush1.msra.mxu0 %v2361
        %3073 = vmatprep.subr.mxu0 0.0
        %3074 = vmatpush1.msra.mxu0 %v2362
        %3075 = vmatprep.subr.mxu0 0.0
        %3076 = vmatpush1.msra.mxu0 %v2363
        %3077 = vmatprep.subr.mxu0 0.0
        %3078 = vmatpush1.msra.mxu0 %v2364
        %3079 = vmatprep.subr.mxu0 0.0
        %3080 = vmatpush1.msra.mxu0 %v2365
        %3081 = vmatprep.subr.mxu0 0.0
        %3082 = vmatpush1.msra.mxu0 %v2366
        %3083 = vmatprep.subr.mxu0 0.0
        %3084 = vmatpush1.msra.mxu0 %v2367
        %3085 = vmatprep.subr.mxu0 0.0
        %3086 = vmatpush1.msra.mxu0 %v2368
        %3087 = vmatprep.subr.mxu0 0.0
        %3088 = vmatpush1.msra.mxu0 %v2369
        %3089 = vmatprep.subr.mxu0 0.0
        %3090 = vmatpush1.msra.mxu0 %v2370
        %3091 = vmatprep.subr.mxu0 0.0
        %3092 = vmatpush1.msra.mxu0 %v2371
        %3093 = vmatprep.subr.mxu0 0.0
        %3094 = vmatpush1.msra.mxu0 %v2372
        %3095 = vmatprep.subr.mxu0 0.0
        %3096 = vmatpush1.msra.mxu0 %v2373
        %3097 = vmatprep.subr.mxu0 0.0
        %3098 = vmatpush1.msra.mxu0 %v2374
        %3099 = vmatprep.subr.mxu0 0.0
        %3100 = vmatpush1.msra.mxu0 0.0
        %3101 = vmatprep.subr.mxu0 0.0
        %3102 = vmatpush1.msra.mxu0 0.0
        %3103 = vmatprep.subr.mxu0 0.0
        %3104 = vmatpush1.msra.mxu0 0.0
        %3105 = vmatprep.subr.mxu0 0.0
        %3106 = vmatpush1.msra.mxu0 0.0
        %3107 = vmatprep.subr.mxu0 0.0
        %3108 = vmatpush1.msra.mxu0 0.0
        %3109 = vmatprep.subr.mxu0 0.0
        %3110 = vmatpush1.msra.mxu0 0.0
        %3111 = vmatprep.subr.mxu0 0.0
        %3112 = vmatpush1.msra.mxu0 0.0
        %3113 = vmatprep.subr.mxu0 0.0
        %3114 = vmatpush1.msra.mxu0 0.0
        %3115 = vmatprep.subr.mxu0 0.0
        %3116 = vmatpush1.msra.mxu0 0.0
        %3117 = vmatprep.subr.mxu0 0.0
        %3118 = vmatpush1.msra.mxu0 0.0
        %3119 = vmatprep.subr.mxu0 0.0
        %3120 = vmatpush1.msra.mxu0 0.0
        %3121 = vmatprep.subr.mxu0 0.0
        %3122 = vmatpush1.msra.mxu0 0.0
        %3123 = vmatprep.subr.mxu0 0.0
        %3124 = vmatpush1.msra.mxu0 0.0
        %3125 = vmatprep.subr.mxu0 0.0
        %3126 = vmatpush1.msra.mxu0 0.0
        %3127 = vmatprep.subr.mxu0 0.0
        %3128 = vmatpush1.msra.mxu0 0.0
        %3129 = vmatprep.subr.mxu0 0.0
        %3130 = vmatpush1.msra.mxu0 0.0
        %3131 = vmatprep.mubr.f32.mxu0 0.0
        %3132 = vmatmul.mubr.f32.gmra.mrb[0].mxu0 %v2132
        %v3133 = vpop.f32.mrb[0].mxu0
        %v3134 = vadd.f32 %v2961, %v3133
        %v3135 = vpop.f32.mrb[0].mxu0
        %3136 = vmatprep.mubr.f32.mxu0 0.0
        %3137 = vmatmul.mubr.f32.gmra.mrb[0].mxu0 %v2134
        %v3138 = vpop.f32.mrb[0].mxu0
        %v3139 = vadd.f32 %v2966, %v3138
        %v3140 = vpop.f32.mrb[0].mxu0
        %3141 = vmatprep.mubr.f32.mxu0 0.0
        %3142 = vmatmul.mubr.f32.gmra.mrb[0].mxu0 %v2137
        %v3143 = vpop.f32.mrb[0].mxu0
        %v3144 = vadd.f32 %v2971, %v3143
        %v3145 = vpop.f32.mrb[0].mxu0
        %3146 = vmatprep.mubr.f32.mxu0 0.0
        %3147 = vmatmul.mubr.f32.gmra.mrb[0].mxu0 %v2139
        %v3148 = vpop.f32.mrb[0].mxu0
        %v3149 = vadd.f32 %v2976, %v3148
        %v3150 = vpop.f32.mrb[0].mxu0
        %3151 = vmatprep.mubr.f32.mxu0 0.0
        %3152 = vmatmul.mubr.f32.gmra.mrb[0].mxu0 %v2142
        %v3153 = vpop.f32.mrb[0].mxu0
        %v3154 = vadd.f32 %v2981, %v3153
        %v3155 = vpop.f32.mrb[0].mxu0
        %3156 = vmatprep.mubr.f32.mxu0 0.0
        %3157 = vmatmul.mubr.f32.gmra.mrb[0].mxu0 %v2144
        %v3158 = vpop.f32.mrb[0].mxu0
        %v3159 = vadd.f32 %v2986, %v3158
        %v3160 = vpop.f32.mrb[0].mxu0
        %3161 = vmatprep.mubr.f32.mxu0 0.0
        %3162 = vmatmul.mubr.f32.gmra.mrb[0].mxu0 %v2147
        %v3163 = vpop.f32.mrb[0].mxu0
        %v3164 = vadd.f32 %v2991, %v3163
        %v3165 = vpop.f32.mrb[0].mxu0
        %3166 = vmatprep.mubr.f32.mxu0 0.0
        %3167 = vmatmul.mubr.f32.gmra.mrb[0].mxu0 %v2149
        %v3168 = vpop.f32.mrb[0].mxu0
        %v3169 = vadd.f32 %v2996, %v3168
        %v3170 = vpop.f32.mrb[0].mxu0
        %3171 = vmatprep.mubr.f32.mxu0 0.0
        %3172 = vmatmul.mubr.f32.gmra.mrb[0].mxu0 %v2152
        %v3173 = vpop.f32.mrb[0].mxu0
        %v3174 = vadd.f32 %v3001, %v3173
        %v3175 = vpop.f32.mrb[0].mxu0
        %3176 = vmatprep.mubr.f32.mxu0 0.0
        %3177 = vmatmul.mubr.f32.gmra.mrb[0].mxu0 %v2154
        %v3178 = vpop.f32.mrb[0].mxu0
        %v3179 = vadd.f32 %v3006, %v3178
        %v3180 = vpop.f32.mrb[0].mxu0
        %3181 = vmatprep.mubr.f32.mxu0 0.0
        %3182 = vmatmul.mubr.f32.gmra.mrb[0].mxu0 %v2157
        %v3183 = vpop.f32.mrb[0].mxu0
        %v3184 = vadd.f32 %v3011, %v3183
        %v3185 = vpop.f32.mrb[0].mxu0
        %3186 = vmatprep.mubr.f32.mxu0 0.0
        %3187 = vmatmul.mubr.f32.gmra.mrb[0].mxu0 %v2159
        %v3188 = vpop.f32.mrb[0].mxu0
        %v3189 = vadd.f32 %v3016, %v3188
        %v3190 = vpop.f32.mrb[0].mxu0
        %3191 = vmatprep.mubr.f32.mxu0 0.0
        %3192 = vmatmul.mubr.f32.gmra.mrb[0].mxu0 %v2162
        %v3193 = vpop.f32.mrb[0].mxu0
        %v3194 = vadd.f32 %v3021, %v3193
        %v3195 = vpop.f32.mrb[0].mxu0
        %3196 = vmatprep.mubr.f32.mxu0 0.0
        %3197 = vmatmul.mubr.f32.gmra.mrb[0].mxu0 %v2164
        %v3198 = vpop.f32.mrb[0].mxu0
        %v3199 = vadd.f32 %v3026, %v3198
        %v3200 = vpop.f32.mrb[0].mxu0
        %3201 = vmatprep.mubr.f32.mxu0 0.0
        %3202 = vmatmul.mubr.f32.gmra.mrb[0].mxu0 %v2167
        %v3203 = vpop.f32.mrb[0].mxu0
        %v3204 = vadd.f32 %v3031, %v3203
        %v3205 = vpop.f32.mrb[0].mxu0
        %3206 = vmatprep.mubr.f32.mxu0 0.0
        %3207 = vmatmul.mubr.f32.gmra.mrb[0].mxu0 %v2169
        %v3208 = vpop.f32.mrb[0].mxu0
        %v3209 = vadd.f32 %v3036, %v3208
        %v3210 = vpop.f32.mrb[0].mxu0
        %3211 = vmatprep.mubr.f32.mxu0 0.0
        %3212 = vmatmul.mubr.f32.gmra.mrb[0].mxu0 %v2172
        %v3213 = vpop.f32.mrb[0].mxu0
        %v3214 = vadd.f32 %v3041, %v3213
        %v3215 = vpop.f32.mrb[0].mxu0
        %3216 = vmatprep.mubr.f32.mxu0 0.0
        %3217 = vmatmul.mubr.f32.gmra.mrb[0].mxu0 %v2174
        %v3218 = vpop.f32.mrb[0].mxu0
        %v3219 = vadd.f32 %v3046, %v3218
        %v3220 = vpop.f32.mrb[0].mxu0
        %3221 = vmatprep.mubr.f32.mxu0 0.0
        %3222 = vmatmul.mubr.f32.gmra.mrb[0].mxu0 %v2209
        %v3223 = vpop.f32.mrb[0].mxu0
        %v3224 = vadd.f32 %v3051, %v3223
        %v3225 = vpop.f32.mrb[0].mxu0
        %3226 = vmatprep.mubr.f32.mxu0 0.0
        %3227 = vmatmul.mubr.f32.gmra.mrb[0].mxu0 %v2211
        %v3228 = vpop.f32.mrb[0].mxu0
        %v3229 = vadd.f32 %v3056, %v3228
        %v3230 = vpop.f32.mrb[0].mxu0
        %3231 = vmatprep.mubr.f32.mxu0 0.0
        %3232 = vmatmul.mubr.f32.gmra.mrb[0].mxu0 %v2226
        %v3233 = vpop.f32.mrb[0].mxu0
        %v3234 = vpop.f32.mrb[0].mxu0
        %3235 = vmatprep.mubr.f32.mxu0 0.0
        %3236 = vmatmul.mubr.f32.gmra.mrb[0].mxu0 %v2228
        %v3237 = vpop.f32.mrb[0].mxu0
        %v3238 = vpop.f32.mrb[0].mxu0
        %3239 = vdwg.mxu0
        %v3240 = vmax.f32 %v3134, %v3144
        %v3241 = vmax.f32 %v3139, %v3149
        %v3242 = vmax.f32 %v3154, %v3164
        %v3243 = vmax.f32 %v3159, %v3169
        %v3244 = vmax.f32 %v3174, %v3184
        %v3245 = vmax.f32 %v3179, %v3189
        %v3246 = vmax.f32 %v3194, %v3204
        %v3247 = vmax.f32 %v3199, %v3209
        %v3248 = vmax.f32 %v3214, %v3224
        %v3249 = vmax.f32 %v3219, %v3229
        %v3250 = vld [vmem:[%s4] sm:$0x1]
        %v3252 = vrot.slane %v3240, 1
        %v3254 = vmax.f32 %v3240, %v3252
        %v3255 = vadd.f32 %v3254, %v3250
        %v3256 = vmax.f32 %v3255, 0.0
        %v3258 = vlaneseq
        %v3259 = vshrl.u32 %v3258, 7
        %v3260 = vsub.s32 0, %v3259
        %v3261 = vrot.slane %v3250, %v3260
        %v3263 = vadd.f32 %v3254, %v3261
        %v3264 = vmax.f32 %v3263, 0.0
        %v3266 = vrot.slane %v3241, 1
        %v3268 = vmax.f32 %v3241, %v3266
        %v3269 = vadd.f32 %v3268, %v3250
        %v3270 = vmax.f32 %v3269, 0.0
        %v3272 = vrot.slane %v3242, 1
        %v3274 = vmax.f32 %v3242, %v3272
        %v3275 = vadd.f32 %v3274, %v3250
        %v3276 = vmax.f32 %v3275, 0.0
        %v3277 = vadd.f32 %v3274, %v3261
        %v3278 = vmax.f32 %v3277, 0.0
        %v3280 = vrot.slane %v3243, 1
        %v3282 = vmax.f32 %v3243, %v3280
        %v3283 = vadd.f32 %v3282, %v3250
        %v3284 = vmax.f32 %v3283, 0.0
        %v3286 = vrot.slane %v3244, 1
        %v3288 = vmax.f32 %v3244, %v3286
        %v3289 = vadd.f32 %v3288, %v3250
        %v3290 = vmax.f32 %v3289, 0.0
        %v3291 = vadd.f32 %v3288, %v3261
        %v3292 = vmax.f32 %v3291, 0.0
        %v3294 = vrot.slane %v3245, 1
        %v3296 = vmax.f32 %v3245, %v3294
        %v3297 = vadd.f32 %v3296, %v3250
        %v3298 = vmax.f32 %v3297, 0.0
        %v3300 = vrot.slane %v3246, 1
        %v3302 = vmax.f32 %v3246, %v3300
        %v3303 = vadd.f32 %v3302, %v3250
        %v3304 = vmax.f32 %v3303, 0.0
        %v3305 = vadd.f32 %v3302, %v3261
        %v3306 = vmax.f32 %v3305, 0.0
        %v3308 = vrot.slane %v3247, 1
        %v3310 = vmax.f32 %v3247, %v3308
        %v3311 = vadd.f32 %v3310, %v3250
        %v3312 = vmax.f32 %v3311, 0.0
        %v3314 = vrot.slane %v3248, 1
        %v3316 = vmax.f32 %v3248, %v3314
        %v3317 = vadd.f32 %v3316, %v3250
        %v3318 = vmax.f32 %v3317, 0.0
        %v3319 = vadd.f32 %v3316, %v3261
        %v3320 = vmax.f32 %v3319, 0.0
        %v3322 = vrot.slane %v3249, 1
        %v3324 = vmax.f32 %v3249, %v3322
        %v3325 = vadd.f32 %v3324, %v3250
        %v3326 = vmax.f32 %v3325, 0.0
        %v3328 = vrot.slane %v3264, 2
        %v3330 = vrot.slane %v3264, 4
        %v3332 = vrot.slane %v3264, 6
        %v3335 = vrot.slane %v3278, 2
        %v3337 = vrot.slane %v3278, 4
        %v3339 = vrot.slane %v3278, 6
        %v3342 = vrot.slane %v3292, 2
        %v3344 = vrot.slane %v3292, 4
        %v3346 = vrot.slane %v3292, 6
        %v3349 = vrot.slane %v3306, 2
        %v3350 = vrot.slane %v3306, 4
        %v3352 = vrot.slane %v3312, 6
        %v3354 = vrot.slane %v3318, 6
        %v3356 = vrot.slane %v3320, 2
        %v3357 = vrot.slane %v3320, 4
        %v3359 = vrot.slane %v3326, 6
        %v3360 = vrot.slane %v3349, 2
        %v3361 = vrot.slane %v3350, 2
        %v3362 = vrot.slane %v3352, 2
        %v3363 = vrot.slane %v3354, 2
        %v3364 = vrot.slane %v3356, 2
        %v3365 = vrot.slane %v3357, 2
        %v3366 = vrot.slane %v3359, 2
        %v3376 = vld [vmem:[%s5] sm:$0xff]
        %v3377 = vld [vmem:[%s5 + $0x8] sm:$0xff]
        %v3378 = vld [vmem:[%s5 + $0x10] sm:$0xff]
        %v3379 = vld [vmem:[%s5 + $0x18] sm:$0xff]
        %v3380 = vld [vmem:[%s5 + $0x20] sm:$0xff]
        %v3381 = vld [vmem:[%s5 + $0x28] sm:$0xff]
        %v3382 = vld [vmem:[%s5 + $0x30] sm:$0xff]
        %v3383 = vld [vmem:[%s5 + $0x38] sm:$0xff]
        %v3384 = vld [vmem:[%s5 + $0x40] sm:$0xff]
        %v3385 = vld [vmem:[%s5 + $0x48] sm:$0xff]
        %v3386 = vld [vmem:[%s5 + $0x50] sm:$0xff]
        %v3387 = vld [vmem:[%s5 + $0x58] sm:$0xff]
        %v3388 = vld [vmem:[%s5 + $0x60] sm:$0xff]
        %v3389 = vld [vmem:[%s5 + $0x68] sm:$0xff]
        %v3390 = vld [vmem:[%s5 + $0x70] sm:$0xff]
        %v3391 = vld [vmem:[%s5 + $0x78] sm:$0xff]
        %v3392 = vld [vmem:[%s5 + $0x80] sm:$0xff]
        %v3393 = vld [vmem:[%s5 + $0x88] sm:$0xff]
        %v3394 = vld [vmem:[%s5 + $0x90] sm:$0xff]
        %v3395 = vld [vmem:[%s5 + $0x98] sm:$0xff]
        %v3396 = vld [vmem:[%s5 + $0xa0] sm:$0xff]
        %v3397 = vld [vmem:[%s5 + $0xa8] sm:$0xff]
        %v3398 = vld [vmem:[%s5 + $0xb0] sm:$0xff]
        %v3399 = vld [vmem:[%s5 + $0xb8] sm:$0xff]
        %v3400 = vld [vmem:[%s5 + $0xc0] sm:$0xff]
        %v3401 = vld [vmem:[%s5 + $0xc8] sm:$0xff]
        %v3402 = vld [vmem:[%s5 + $0xd0] sm:$0xff]
        %v3403 = vld [vmem:[%s5 + $0xd8] sm:$0xff]
        %v3404 = vld [vmem:[%s5 + $0xe0] sm:$0xff]
        %v3405 = vld [vmem:[%s5 + $0xe8] sm:$0xff]
        %v3406 = vld [vmem:[%s5 + $0xf0] sm:$0xff]
        %v3407 = vld [vmem:[%s5 + $0xf8] sm:$0xff]
        %v3408 = vld [vmem:[%s5 + $0x100] sm:$0xff]
        %v3409 = vld [vmem:[%s5 + $0x108] sm:$0xff]
        %v3410 = vld [vmem:[%s5 + $0x110] sm:$0xff]
        %v3411 = vld [vmem:[%s5 + $0x118] sm:$0xff]
        %v3412 = vld [vmem:[%s5 + $0x120] sm:$0xff]
        %v3413 = vld [vmem:[%s5 + $0x128] sm:$0xff]
        %v3414 = vld [vmem:[%s5 + $0x130] sm:$0xff]
        %v3415 = vld [vmem:[%s5 + $0x138] sm:$0xff]
        %v3416 = vld [vmem:[%s5 + $0x140] sm:$0xff]
        %v3417 = vld [vmem:[%s5 + $0x148] sm:$0xff]
        %v3418 = vld [vmem:[%s5 + $0x150] sm:$0xff]
        %v3419 = vld [vmem:[%s5 + $0x158] sm:$0xff]
        %v3420 = vld [vmem:[%s5 + $0x160] sm:$0xff]
        %v3421 = vld [vmem:[%s5 + $0x168] sm:$0xff]
        %v3422 = vld [vmem:[%s5 + $0x170] sm:$0xff]
        %v3423 = vld [vmem:[%s5 + $0x178] sm:$0xff]
        %v3424 = vld [vmem:[%s5 + $0x180] sm:$0xff]
        %v3425 = vld [vmem:[%s5 + $0x188] sm:$0xff]
        %v3426 = vld [vmem:[%s5 + $0x190] sm:$0xff]
        %v3427 = vld [vmem:[%s5 + $0x198] sm:$0xff]
        %v3428 = vld [vmem:[%s5 + $0x1a0] sm:$0xff]
        %v3429 = vld [vmem:[%s5 + $0x1a8] sm:$0xff]
        %v3430 = vld [vmem:[%s5 + $0x1b0] sm:$0xff]
        %v3431 = vld [vmem:[%s5 + $0x1b8] sm:$0xff]
        %v3432 = vld [vmem:[%s5 + $0x1c0] sm:$0xff]
        %v3433 = vld [vmem:[%s5 + $0x1c8] sm:$0xff]
        %v3434 = vld [vmem:[%s5 + $0x1d0] sm:$0xff]
        %v3435 = vld [vmem:[%s5 + $0x1d8] sm:$0xff]
        %v3436 = vld [vmem:[%s5 + $0x1e0] sm:$0xff]
        %v3437 = vld [vmem:[%s5 + $0x1e8] sm:$0xff]
        %v3438 = vld [vmem:[%s5 + $0x1f0] sm:$0xff]
        %v3439 = vld [vmem:[%s5 + $0x1f8] sm:$0xff]
        %v3440 = vld [vmem:[%s5 + $0x200] sm:$0xff]
        %v3441 = vld [vmem:[%s5 + $0x208] sm:$0xff]
        %v3442 = vld [vmem:[%s5 + $0x210] sm:$0xff]
        %v3443 = vld [vmem:[%s5 + $0x218] sm:$0xff]
        %v3444 = vld [vmem:[%s5 + $0x220] sm:$0xff]
        %v3445 = vld [vmem:[%s5 + $0x228] sm:$0xff]
        %v3446 = vld [vmem:[%s5 + $0x230] sm:$0xff]
        %v3447 = vld [vmem:[%s5 + $0x238] sm:$0xff]
        %v3448 = vld [vmem:[%s5 + $0x240] sm:$0xff]
        %v3449 = vld [vmem:[%s5 + $0x248] sm:$0xff]
        %v3450 = vld [vmem:[%s5 + $0x250] sm:$0xff]
        %v3451 = vld [vmem:[%s5 + $0x258] sm:$0xff]
        %v3452 = vld [vmem:[%s5 + $0x260] sm:$0xff]
        %v3453 = vld [vmem:[%s5 + $0x268] sm:$0xff]
        %v3454 = vld [vmem:[%s5 + $0x270] sm:$0xff]
        %v3455 = vld [vmem:[%s5 + $0x278] sm:$0xff]
        %v3456 = vld [vmem:[%s5 + $0x280] sm:$0xff]
        %v3457 = vld [vmem:[%s5 + $0x288] sm:$0xff]
        %v3458 = vld [vmem:[%s5 + $0x290] sm:$0xff]
        %v3459 = vld [vmem:[%s5 + $0x298] sm:$0xff]
        %v3460 = vld [vmem:[%s5 + $0x2a0] sm:$0xff]
        %v3461 = vld [vmem:[%s5 + $0x2a8] sm:$0xff]
        %v3462 = vld [vmem:[%s5 + $0x2b0] sm:$0xff]
        %v3463 = vld [vmem:[%s5 + $0x2b8] sm:$0xff]
        %v3464 = vld [vmem:[%s5 + $0x2c0] sm:$0xff]
        %v3465 = vld [vmem:[%s5 + $0x2c8] sm:$0xff]
        %v3466 = vld [vmem:[%s5 + $0x2d0] sm:$0xff]
        %v3467 = vld [vmem:[%s5 + $0x2d8] sm:$0xff]
        %v3468 = vld [vmem:[%s5 + $0x2e0] sm:$0xff]
        %v3469 = vld [vmem:[%s5 + $0x2e8] sm:$0xff]
        %v3470 = vld [vmem:[%s5 + $0x2f0] sm:$0xff]
        %v3471 = vld [vmem:[%s5 + $0x2f8] sm:$0xff]
        %v3472 = vld [vmem:[%s5 + $0x300] sm:$0xff]
        %v3473 = vld [vmem:[%s5 + $0x308] sm:$0xff]
        %v3474 = vld [vmem:[%s5 + $0x310] sm:$0xff]
        %v3475 = vld [vmem:[%s5 + $0x318] sm:$0xff]
        %v3476 = vld [vmem:[%s5 + $0x320] sm:$0xff]
        %v3477 = vld [vmem:[%s5 + $0x328] sm:$0xff]
        %v3478 = vld [vmem:[%s5 + $0x330] sm:$0xff]
        %v3479 = vld [vmem:[%s5 + $0x338] sm:$0xff]
        %v3480 = vld [vmem:[%s5 + $0x340] sm:$0xff]
        %v3481 = vld [vmem:[%s5 + $0x348] sm:$0xff]
        %v3482 = vld [vmem:[%s5 + $0x350] sm:$0xff]
        %v3483 = vld [vmem:[%s5 + $0x358] sm:$0xff]
        %v3484 = vld [vmem:[%s5 + $0x360] sm:$0xff]
        %v3485 = vld [vmem:[%s5 + $0x368] sm:$0xff]
        %v3486 = vld [vmem:[%s5 + $0x370] sm:$0xff]
        %v3487 = vld [vmem:[%s5 + $0x378] sm:$0xff]
        %v3488 = vld [vmem:[%s5 + $0x380] sm:$0xff]
        %v3489 = vld [vmem:[%s5 + $0x388] sm:$0xff]
        %v3490 = vld [vmem:[%s5 + $0x390] sm:$0xff]
        %v3491 = vld [vmem:[%s5 + $0x398] sm:$0xff]
        %v3492 = vld [vmem:[%s5 + $0x3a0] sm:$0xff]
        %v3493 = vld [vmem:[%s5 + $0x3a8] sm:$0xff]
        %v3494 = vld [vmem:[%s5 + $0x3b0] sm:$0xff]
        %v3495 = vld [vmem:[%s5 + $0x3b8] sm:$0xff]
        %v3496 = vld [vmem:[%s5 + $0x3c0] sm:$0xff]
        %v3497 = vld [vmem:[%s5 + $0x3c8] sm:$0xff]
        %v3498 = vld [vmem:[%s5 + $0x3d0] sm:$0xff]
        %v3499 = vld [vmem:[%s5 + $0x3d8] sm:$0xff]
        %v3500 = vld [vmem:[%s5 + $0x3e0] sm:$0xff]
        %v3501 = vld [vmem:[%s5 + $0x3e8] sm:$0xff]
        %v3502 = vld [vmem:[%s5 + $0x3f0] sm:$0xff]
        %v3503 = vld [vmem:[%s5 + $0x3f8] sm:$0xff]
        %v3504 = vld [vmem:[%s5 + $0x400] sm:$0xff]
        %v3505 = vld [vmem:[%s5 + $0x408] sm:$0xff]
        %v3506 = vld [vmem:[%s5 + $0x410] sm:$0xff]
        %v3507 = vld [vmem:[%s5 + $0x418] sm:$0xff]
        %v3508 = vld [vmem:[%s5 + $0x420] sm:$0xff]
        %v3509 = vld [vmem:[%s5 + $0x428] sm:$0xff]
        %v3510 = vld [vmem:[%s5 + $0x430] sm:$0xff]
        %v3511 = vld [vmem:[%s5 + $0x438] sm:$0xff]
        %v3512 = vld [vmem:[%s5 + $0x440] sm:$0xff]
        %v3513 = vld [vmem:[%s5 + $0x448] sm:$0xff]
        %v3514 = vld [vmem:[%s5 + $0x450] sm:$0xff]
        %v3515 = vld [vmem:[%s5 + $0x458] sm:$0xff]
        %v3516 = vld [vmem:[%s5 + $0x460] sm:$0xff]
        %v3517 = vld [vmem:[%s5 + $0x468] sm:$0xff]
        %v3518 = vld [vmem:[%s5 + $0x470] sm:$0xff]
        %v3519 = vld [vmem:[%s5 + $0x478] sm:$0xff]
        %v3520 = vld [vmem:[%s5 + $0x480] sm:$0xff]
        %v3521 = vld [vmem:[%s5 + $0x488] sm:$0xff]
        %v3522 = vld [vmem:[%s5 + $0x490] sm:$0xff]
        %v3523 = vld [vmem:[%s5 + $0x498] sm:$0xff]
        %v3524 = vld [vmem:[%s5 + $0x4a0] sm:$0xff]
        %v3525 = vld [vmem:[%s5 + $0x4a8] sm:$0xff]
        %v3526 = vld [vmem:[%s5 + $0x4b0] sm:$0xff]
        %v3527 = vld [vmem:[%s5 + $0x4b8] sm:$0xff]
        %v3528 = vld [vmem:[%s5 + $0x4c0] sm:$0xff]
        %v3529 = vld [vmem:[%s5 + $0x4c8] sm:$0xff]
        %v3530 = vld [vmem:[%s5 + $0x4d0] sm:$0xff]
        %v3531 = vld [vmem:[%s5 + $0x4d8] sm:$0xff]
        %v3532 = vld [vmem:[%s5 + $0x4e0] sm:$0xff]
        %v3533 = vld [vmem:[%s5 + $0x4e8] sm:$0xff]
        %v3534 = vld [vmem:[%s5 + $0x4f0] sm:$0xff]
        %v3535 = vld [vmem:[%s5 + $0x4f8] sm:$0xff]
        %v3536 = vld [vmem:[%s5 + $0x500] sm:$0xff]
        %v3537 = vld [vmem:[%s5 + $0x508] sm:$0xff]
        %v3538 = vld [vmem:[%s5 + $0x510] sm:$0xff]
        %v3539 = vld [vmem:[%s5 + $0x518] sm:$0xff]
        %v3540 = vld [vmem:[%s5 + $0x520] sm:$0xff]
        %v3541 = vld [vmem:[%s5 + $0x528] sm:$0xff]
        %v3542 = vld [vmem:[%s5 + $0x530] sm:$0xff]
        %v3543 = vld [vmem:[%s5 + $0x538] sm:$0xff]
        %v3544 = vld [vmem:[%s5 + $0x540] sm:$0xff]
        %v3545 = vld [vmem:[%s5 + $0x548] sm:$0xff]
        %v3546 = vld [vmem:[%s5 + $0x550] sm:$0xff]
        %v3547 = vld [vmem:[%s5 + $0x558] sm:$0xff]
        %v3548 = vld [vmem:[%s5 + $0x560] sm:$0xff]
        %v3549 = vld [vmem:[%s5 + $0x568] sm:$0xff]
        %v3550 = vld [vmem:[%s5 + $0x570] sm:$0xff]
        %v3551 = vld [vmem:[%s5 + $0x578] sm:$0xff]
        %v3552 = vld [vmem:[%s5 + $0x580] sm:$0xff]
        %v3553 = vld [vmem:[%s5 + $0x588] sm:$0xff]
        %v3554 = vld [vmem:[%s5 + $0x590] sm:$0xff]
        %v3555 = vld [vmem:[%s5 + $0x598] sm:$0xff]
        %v3556 = vld [vmem:[%s5 + $0x5a0] sm:$0xff]
        %v3557 = vld [vmem:[%s5 + $0x5a8] sm:$0xff]
        %v3558 = vld [vmem:[%s5 + $0x5b0] sm:$0xff]
        %v3559 = vld [vmem:[%s5 + $0x5b8] sm:$0xff]
        %v3560 = vld [vmem:[%s5 + $0x5c0] sm:$0xff]
        %v3561 = vld [vmem:[%s5 + $0x5c8] sm:$0xff]
        %v3562 = vld [vmem:[%s5 + $0x5d0] sm:$0xff]
        %v3563 = vld [vmem:[%s5 + $0x5d8] sm:$0xff]
        %v3564 = vld [vmem:[%s5 + $0x5e0] sm:$0xff]
        %v3565 = vld [vmem:[%s5 + $0x5e8] sm:$0xff]
        %v3566 = vld [vmem:[%s5 + $0x5f0] sm:$0xff]
        %v3567 = vld [vmem:[%s5 + $0x5f8] sm:$0xff]
        %v3568 = vld [vmem:[%s5 + $0x600] sm:$0xff]
        %v3569 = vld [vmem:[%s5 + $0x608] sm:$0xff]
        %v3570 = vld [vmem:[%s5 + $0x610] sm:$0xff]
        %v3571 = vld [vmem:[%s5 + $0x618] sm:$0xff]
        %v3572 = vld [vmem:[%s5 + $0x620] sm:$0xff]
        %v3573 = vld [vmem:[%s5 + $0x628] sm:$0xff]
        %v3574 = vld [vmem:[%s5 + $0x630] sm:$0xff]
        %v3575 = vld [vmem:[%s5 + $0x638] sm:$0xff]
        %v3576 = vld [vmem:[%s5 + $0x640] sm:$0xff]
        %v3577 = vld [vmem:[%s5 + $0x648] sm:$0xff]
        %v3578 = vld [vmem:[%s5 + $0x650] sm:$0xff]
        %v3579 = vld [vmem:[%s5 + $0x658] sm:$0xff]
        %v3580 = vld [vmem:[%s5 + $0x660] sm:$0xff]
        %v3581 = vld [vmem:[%s5 + $0x668] sm:$0xff]
        %v3582 = vld [vmem:[%s5 + $0x670] sm:$0xff]
        %v3583 = vld [vmem:[%s5 + $0x678] sm:$0xff]
        %v3584 = vld [vmem:[%s5 + $0x680] sm:$0xff]
        %v3585 = vld [vmem:[%s5 + $0x688] sm:$0xff]
        %v3586 = vld [vmem:[%s5 + $0x690] sm:$0xff]
        %v3587 = vld [vmem:[%s5 + $0x698] sm:$0xff]
        %v3588 = vld [vmem:[%s5 + $0x6a0] sm:$0xff]
        %v3589 = vld [vmem:[%s5 + $0x6a8] sm:$0xff]
        %v3590 = vld [vmem:[%s5 + $0x6b0] sm:$0xff]
        %v3591 = vld [vmem:[%s5 + $0x6b8] sm:$0xff]
        %v3592 = vld [vmem:[%s5 + $0x6c0] sm:$0xff]
        %v3593 = vld [vmem:[%s5 + $0x6c8] sm:$0xff]
        %v3594 = vld [vmem:[%s5 + $0x6d0] sm:$0xff]
        %v3595 = vld [vmem:[%s5 + $0x6d8] sm:$0xff]
        %v3596 = vld [vmem:[%s5 + $0x6e0] sm:$0xff]
        %v3597 = vld [vmem:[%s5 + $0x6e8] sm:$0xff]
        %v3598 = vld [vmem:[%s5 + $0x6f0] sm:$0xff]
        %v3599 = vld [vmem:[%s5 + $0x6f8] sm:$0xff]
        %v3600 = vld [vmem:[%s5 + $0x700] sm:$0xff]
        %v3601 = vld [vmem:[%s5 + $0x708] sm:$0xff]
        %v3602 = vld [vmem:[%s5 + $0x710] sm:$0xff]
        %v3603 = vld [vmem:[%s5 + $0x718] sm:$0xff]
        %v3604 = vld [vmem:[%s5 + $0x720] sm:$0xff]
        %v3605 = vld [vmem:[%s5 + $0x728] sm:$0xff]
        %v3606 = vld [vmem:[%s5 + $0x730] sm:$0xff]
        %v3607 = vld [vmem:[%s5 + $0x738] sm:$0xff]
        %v3608 = vld [vmem:[%s5 + $0x740] sm:$0xff]
        %v3609 = vld [vmem:[%s5 + $0x748] sm:$0xff]
        %v3610 = vld [vmem:[%s5 + $0x750] sm:$0xff]
        %v3611 = vld [vmem:[%s5 + $0x758] sm:$0xff]
        %v3612 = vld [vmem:[%s5 + $0x760] sm:$0xff]
        %v3613 = vld [vmem:[%s5 + $0x768] sm:$0xff]
        %v3614 = vld [vmem:[%s5 + $0x770] sm:$0xff]
        %v3615 = vld [vmem:[%s5 + $0x778] sm:$0xff]
        %v3616 = vld [vmem:[%s5 + $0x780] sm:$0xff]
        %v3617 = vld [vmem:[%s5 + $0x788] sm:$0xff]
        %v3618 = vld [vmem:[%s5 + $0x790] sm:$0xff]
        %v3619 = vld [vmem:[%s5 + $0x798] sm:$0xff]
        %v3620 = vld [vmem:[%s5 + $0x7a0] sm:$0xff]
        %v3621 = vld [vmem:[%s5 + $0x7a8] sm:$0xff]
        %v3622 = vld [vmem:[%s5 + $0x7b0] sm:$0xff]
        %v3623 = vld [vmem:[%s5 + $0x7b8] sm:$0xff]
        %v3624 = vld [vmem:[%s5 + $0x7c0] sm:$0xff]
        %v3625 = vld [vmem:[%s5 + $0x7c8] sm:$0xff]
        %v3626 = vld [vmem:[%s5 + $0x7d0] sm:$0xff]
        %v3627 = vld [vmem:[%s5 + $0x7d8] sm:$0xff]
        %v3628 = vld [vmem:[%s5 + $0x7e0] sm:$0xff]
        %v3629 = vld [vmem:[%s5 + $0x7e8] sm:$0xff]
        %v3630 = vld [vmem:[%s5 + $0x7f0] sm:$0xff]
        %v3631 = vld [vmem:[%s5 + $0x7f8] sm:$0xff]
        %v3632 = vld [vmem:[%s5 + $0x800] sm:$0xff]
        %v3633 = vld [vmem:[%s5 + $0x808] sm:$0xff]
        %v3634 = vld [vmem:[%s5 + $0x810] sm:$0xff]
        %v3635 = vld [vmem:[%s5 + $0x818] sm:$0xff]
        %v3636 = vld [vmem:[%s5 + $0x820] sm:$0xff]
        %v3637 = vld [vmem:[%s5 + $0x828] sm:$0xff]
        %v3638 = vld [vmem:[%s5 + $0x830] sm:$0xff]
        %v3639 = vld [vmem:[%s5 + $0x838] sm:$0xff]
        %v3640 = vld [vmem:[%s5 + $0x840] sm:$0xff]
        %v3641 = vld [vmem:[%s5 + $0x848] sm:$0xff]
        %v3642 = vld [vmem:[%s5 + $0x850] sm:$0xff]
        %v3643 = vld [vmem:[%s5 + $0x858] sm:$0xff]
        %v3644 = vld [vmem:[%s5 + $0x860] sm:$0xff]
        %v3645 = vld [vmem:[%s5 + $0x868] sm:$0xff]
        %v3646 = vld [vmem:[%s5 + $0x870] sm:$0xff]
        %v3647 = vld [vmem:[%s5 + $0x878] sm:$0xff]
        %v3648 = vld [vmem:[%s5 + $0x880] sm:$0xff]
        %v3649 = vld [vmem:[%s5 + $0x888] sm:$0xff]
        %v3650 = vld [vmem:[%s5 + $0x890] sm:$0xff]
        %v3651 = vld [vmem:[%s5 + $0x898] sm:$0xff]
        %v3652 = vld [vmem:[%s5 + $0x8a0] sm:$0xff]
        %v3653 = vld [vmem:[%s5 + $0x8a8] sm:$0xff]
        %v3654 = vld [vmem:[%s5 + $0x8b0] sm:$0xff]
        %v3655 = vld [vmem:[%s5 + $0x8b8] sm:$0xff]
        %v3656 = vld [vmem:[%s5 + $0x8c0] sm:$0xff]
        %v3657 = vld [vmem:[%s5 + $0x8c8] sm:$0xff]
        %v3658 = vld [vmem:[%s5 + $0x8d0] sm:$0xff]
        %v3659 = vld [vmem:[%s5 + $0x8d8] sm:$0xff]
        %v3660 = vld [vmem:[%s5 + $0x8e0] sm:$0xff]
        %v3661 = vld [vmem:[%s5 + $0x8e8] sm:$0xff]
        %v3662 = vld [vmem:[%s5 + $0x8f0] sm:$0xff]
        %v3663 = vld [vmem:[%s5 + $0x8f8] sm:$0xff]
        %v3664 = vld [vmem:[%s5 + $0x900] sm:$0xff]
        %v3665 = vld [vmem:[%s5 + $0x908] sm:$0xff]
        %v3666 = vld [vmem:[%s5 + $0x910] sm:$0xff]
        %v3667 = vld [vmem:[%s5 + $0x918] sm:$0xff]
        %v3668 = vld [vmem:[%s5 + $0x920] sm:$0xff]
        %v3669 = vld [vmem:[%s5 + $0x928] sm:$0xff]
        %v3670 = vld [vmem:[%s5 + $0x930] sm:$0xff]
        %v3671 = vld [vmem:[%s5 + $0x938] sm:$0xff]
        %v3672 = vld [vmem:[%s5 + $0x940] sm:$0xff]
        %v3673 = vld [vmem:[%s5 + $0x948] sm:$0xff]
        %v3674 = vld [vmem:[%s5 + $0x950] sm:$0xff]
        %v3675 = vld [vmem:[%s5 + $0x958] sm:$0xff]
        %v3676 = vld [vmem:[%s5 + $0x960] sm:$0xff]
        %v3677 = vld [vmem:[%s5 + $0x968] sm:$0xff]
        %v3678 = vld [vmem:[%s5 + $0x970] sm:$0xff]
        %v3679 = vld [vmem:[%s5 + $0x978] sm:$0xff]
        %v3680 = vld [vmem:[%s5 + $0x980] sm:$0xff]
        %v3681 = vld [vmem:[%s5 + $0x988] sm:$0xff]
        %v3682 = vld [vmem:[%s5 + $0x990] sm:$0xff]
        %v3683 = vld [vmem:[%s5 + $0x998] sm:$0xff]
        %v3684 = vld [vmem:[%s5 + $0x9a0] sm:$0xff]
        %v3685 = vld [vmem:[%s5 + $0x9a8] sm:$0xff]
        %v3686 = vld [vmem:[%s5 + $0x9b0] sm:$0xff]
        %v3687 = vld [vmem:[%s5 + $0x9b8] sm:$0xff]
        %v3688 = vld [vmem:[%s5 + $0x9c0] sm:$0xff]
        %v3689 = vld [vmem:[%s5 + $0x9c8] sm:$0xff]
        %v3690 = vld [vmem:[%s5 + $0x9d0] sm:$0xff]
        %v3691 = vld [vmem:[%s5 + $0x9d8] sm:$0xff]
        %v3692 = vld [vmem:[%s5 + $0x9e0] sm:$0xff]
        %v3693 = vld [vmem:[%s5 + $0x9e8] sm:$0xff]
        %v3694 = vld [vmem:[%s5 + $0x9f0] sm:$0xff]
        %v3695 = vld [vmem:[%s5 + $0x9f8] sm:$0xff]
        %v3696 = vld [vmem:[%s5 + $0xa00] sm:$0xff]
        %v3697 = vld [vmem:[%s5 + $0xa08] sm:$0xff]
        %v3698 = vld [vmem:[%s5 + $0xa10] sm:$0xff]
        %v3699 = vld [vmem:[%s5 + $0xa18] sm:$0xff]
        %v3700 = vld [vmem:[%s5 + $0xa20] sm:$0xff]
        %v3701 = vld [vmem:[%s5 + $0xa28] sm:$0xff]
        %v3702 = vld [vmem:[%s5 + $0xa30] sm:$0xff]
        %v3703 = vld [vmem:[%s5 + $0xa38] sm:$0xff]
        %v3704 = vld [vmem:[%s5 + $0xa40] sm:$0xff]
        %v3705 = vld [vmem:[%s5 + $0xa48] sm:$0xff]
        %v3706 = vld [vmem:[%s5 + $0xa50] sm:$0xff]
        %v3707 = vld [vmem:[%s5 + $0xa58] sm:$0xff]
        %v3708 = vld [vmem:[%s5 + $0xa60] sm:$0xff]
        %v3709 = vld [vmem:[%s5 + $0xa68] sm:$0xff]
        %v3710 = vld [vmem:[%s5 + $0xa70] sm:$0xff]
        %v3711 = vld [vmem:[%s5 + $0xa78] sm:$0xff]
        %v3712 = vld [vmem:[%s5 + $0xa80] sm:$0xff]
        %v3713 = vld [vmem:[%s5 + $0xa88] sm:$0xff]
        %v3714 = vld [vmem:[%s5 + $0xa90] sm:$0xff]
        %v3715 = vld [vmem:[%s5 + $0xa98] sm:$0xff]
        %v3716 = vld [vmem:[%s5 + $0xaa0] sm:$0xff]
        %v3717 = vld [vmem:[%s5 + $0xaa8] sm:$0xff]
        %v3718 = vld [vmem:[%s5 + $0xab0] sm:$0xff]
        %v3719 = vld [vmem:[%s5 + $0xab8] sm:$0xff]
        %v3720 = vld [vmem:[%s5 + $0xac0] sm:$0xff]
        %v3721 = vld [vmem:[%s5 + $0xac8] sm:$0xff]
        %v3722 = vld [vmem:[%s5 + $0xad0] sm:$0xff]
        %v3723 = vld [vmem:[%s5 + $0xad8] sm:$0xff]
        %v3724 = vld [vmem:[%s5 + $0xae0] sm:$0xff]
        %v3725 = vld [vmem:[%s5 + $0xae8] sm:$0xff]
        %v3726 = vld [vmem:[%s5 + $0xaf0] sm:$0xff]
        %v3727 = vld [vmem:[%s5 + $0xaf8] sm:$0xff]
        %v3728 = vld [vmem:[%s5 + $0xb00] sm:$0xff]
        %v3729 = vld [vmem:[%s5 + $0xb08] sm:$0xff]
        %v3730 = vld [vmem:[%s5 + $0xb10] sm:$0xff]
        %v3731 = vld [vmem:[%s5 + $0xb18] sm:$0xff]
        %v3732 = vld [vmem:[%s5 + $0xb20] sm:$0xff]
        %v3733 = vld [vmem:[%s5 + $0xb28] sm:$0xff]
        %v3734 = vld [vmem:[%s5 + $0xb30] sm:$0xff]
        %v3735 = vld [vmem:[%s5 + $0xb38] sm:$0xff]
        %v3736 = vld [vmem:[%s5 + $0xb40] sm:$0xff]
        %v3737 = vld [vmem:[%s5 + $0xb48] sm:$0xff]
        %v3738 = vld [vmem:[%s5 + $0xb50] sm:$0xff]
        %v3739 = vld [vmem:[%s5 + $0xb58] sm:$0xff]
        %v3740 = vld [vmem:[%s5 + $0xb60] sm:$0xff]
        %v3741 = vld [vmem:[%s5 + $0xb68] sm:$0xff]
        %v3742 = vld [vmem:[%s5 + $0xb70] sm:$0xff]
        %v3743 = vld [vmem:[%s5 + $0xb78] sm:$0xff]
        %v3744 = vld [vmem:[%s5 + $0xb80] sm:$0xff]
        %v3745 = vld [vmem:[%s5 + $0xb88] sm:$0xff]
        %v3746 = vld [vmem:[%s5 + $0xb90] sm:$0xff]
        %v3747 = vld [vmem:[%s5 + $0xb98] sm:$0xff]
        %v3748 = vld [vmem:[%s5 + $0xba0] sm:$0xff]
        %v3749 = vld [vmem:[%s5 + $0xba8] sm:$0xff]
        %v3750 = vld [vmem:[%s5 + $0xbb0] sm:$0xff]
        %v3751 = vld [vmem:[%s5 + $0xbb8] sm:$0xff]
        %v3752 = vld [vmem:[%s5 + $0xbc0] sm:$0xff]
        %v3753 = vld [vmem:[%s5 + $0xbc8] sm:$0xff]
        %v3754 = vld [vmem:[%s5 + $0xbd0] sm:$0xff]
        %v3755 = vld [vmem:[%s5 + $0xbd8] sm:$0xff]
        %v3756 = vld [vmem:[%s5 + $0xbe0] sm:$0xff]
        %v3757 = vld [vmem:[%s5 + $0xbe8] sm:$0xff]
        %v3758 = vld [vmem:[%s5 + $0xbf0] sm:$0xff]
        %v3759 = vld [vmem:[%s5 + $0xbf8] sm:$0xff]
        %v3760 = vld [vmem:[%s5 + $0xc00] sm:$0xff]
        %v3761 = vld [vmem:[%s5 + $0xc08] sm:$0xff]
        %v3762 = vld [vmem:[%s5 + $0xc10] sm:$0xff]
        %v3763 = vld [vmem:[%s5 + $0xc18] sm:$0xff]
        %v3764 = vld [vmem:[%s5 + $0xc20] sm:$0xff]
        %v3765 = vld [vmem:[%s5 + $0xc28] sm:$0xff]
        %v3766 = vld [vmem:[%s5 + $0xc30] sm:$0xff]
        %v3767 = vld [vmem:[%s5 + $0xc38] sm:$0xff]
        %v3768 = vld [vmem:[%s5 + $0xc40] sm:$0xff]
        %v3769 = vld [vmem:[%s5 + $0xc48] sm:$0xff]
        %v3770 = vld [vmem:[%s5 + $0xc50] sm:$0xff]
        %v3771 = vld [vmem:[%s5 + $0xc58] sm:$0xff]
        %v3772 = vld [vmem:[%s5 + $0xc60] sm:$0xff]
        %v3773 = vld [vmem:[%s5 + $0xc68] sm:$0xff]
        %v3774 = vld [vmem:[%s5 + $0xc70] sm:$0xff]
        %v3775 = vld [vmem:[%s5 + $0xc78] sm:$0xff]
        %v3776 = vld [vmem:[%s6] sm:$0x1]
        %3777 = vmatprep.subr.mxu0 0.0
        %3778 = vmatpush1.msra.mxu0 %v3376
        %3779 = vmatprep.subr.mxu0 0.0
        %3780 = vmatpush1.msra.mxu0 %v3377
        %3781 = vmatprep.subr.mxu0 0.0
        %3782 = vmatpush1.msra.mxu0 %v3378
        %3783 = vmatprep.subr.mxu0 0.0
        %3784 = vmatpush1.msra.mxu0 %v3379
        %3785 = vmatprep.subr.mxu0 0.0
        %3786 = vmatpush1.msra.mxu0 %v3380
        %3787 = vmatprep.subr.mxu0 0.0
        %3788 = vmatpush1.msra.mxu0 %v3381
        %3789 = vmatprep.subr.mxu0 0.0
        %3790 = vmatpush1.msra.mxu0 %v3382
        %3791 = vmatprep.subr.mxu0 0.0
        %3792 = vmatpush1.msra.mxu0 %v3383
        %3793 = vmatprep.subr.mxu0 0.0
        %3794 = vmatpush1.msra.mxu0 %v3384
        %3795 = vmatprep.subr.mxu0 0.0
        %3796 = vmatpush1.msra.mxu0 %v3385
        %3797 = vmatprep.subr.mxu0 0.0
        %3798 = vmatpush1.msra.mxu0 %v3386
        %3799 = vmatprep.subr.mxu0 0.0
        %3800 = vmatpush1.msra.mxu0 %v3387
        %3801 = vmatprep.subr.mxu0 0.0
        %3802 = vmatpush1.msra.mxu0 %v3388
        %3803 = vmatprep.subr.mxu0 0.0
        %3804 = vmatpush1.msra.mxu0 %v3389
        %3805 = vmatprep.subr.mxu0 0.0
        %3806 = vmatpush1.msra.mxu0 %v3390
        %3807 = vmatprep.subr.mxu0 0.0
        %3808 = vmatpush1.msra.mxu0 %v3391
        %3809 = vmatprep.subr.mxu0 0.0
        %3810 = vmatpush1.msra.mxu0 %v3392
        %3811 = vmatprep.subr.mxu0 0.0
        %3812 = vmatpush1.msra.mxu0 %v3393
        %3813 = vmatprep.subr.mxu0 0.0
        %3814 = vmatpush1.msra.mxu0 %v3394
        %3815 = vmatprep.subr.mxu0 0.0
        %3816 = vmatpush1.msra.mxu0 %v3395
        %3817 = vmatprep.subr.mxu0 0.0
        %3818 = vmatpush1.msra.mxu0 %v3396
        %3819 = vmatprep.subr.mxu0 0.0
        %3820 = vmatpush1.msra.mxu0 %v3397
        %3821 = vmatprep.subr.mxu0 0.0
        %3822 = vmatpush1.msra.mxu0 %v3398
        %3823 = vmatprep.subr.mxu0 0.0
        %3824 = vmatpush1.msra.mxu0 %v3399
        %3825 = vmatprep.subr.mxu0 0.0
        %3826 = vmatpush1.msra.mxu0 %v3400
        %3827 = vmatprep.subr.mxu0 0.0
        %3828 = vmatpush1.msra.mxu0 %v3401
        %3829 = vmatprep.subr.mxu0 0.0
        %3830 = vmatpush1.msra.mxu0 %v3402
        %3831 = vmatprep.subr.mxu0 0.0
        %3832 = vmatpush1.msra.mxu0 %v3403
        %3833 = vmatprep.subr.mxu0 0.0
        %3834 = vmatpush1.msra.mxu0 %v3404
        %3835 = vmatprep.subr.mxu0 0.0
        %3836 = vmatpush1.msra.mxu0 %v3405
        %3837 = vmatprep.subr.mxu0 0.0
        %3838 = vmatpush1.msra.mxu0 %v3406
        %3839 = vmatprep.subr.mxu0 0.0
        %3840 = vmatpush1.msra.mxu0 %v3407
        %3841 = vmatprep.mubr.f32.mxu0 %v3328
        %3842 = vmatmul.mubr.f32.gmra.mrb[0].mxu0 %v3256
        %v3843 = vpop.f32.mrb[0].mxu0
        %v3844 = vadd.f32 %v3776, %v3843
        %v3845 = vpop.f32.mrb[0].mxu0
        %3846 = vdwg.mxu0
        %3847 = vmatprep.subr.mxu0 0.0
        %3848 = vmatpush1.msra.mxu0 %v3408
        %3849 = vmatprep.subr.mxu0 0.0
        %3850 = vmatpush1.msra.mxu0 %v3409
        %3851 = vmatprep.subr.mxu0 0.0
        %3852 = vmatpush1.msra.mxu0 %v3410
        %3853 = vmatprep.subr.mxu0 0.0
        %3854 = vmatpush1.msra.mxu0 %v3411
        %3855 = vmatprep.subr.mxu0 0.0
        %3856 = vmatpush1.msra.mxu0 %v3412
        %3857 = vmatprep.subr.mxu0 0.0
        %3858 = vmatpush1.msra.mxu0 %v3413
        %3859 = vmatprep.subr.mxu0 0.0
        %3860 = vmatpush1.msra.mxu0 %v3414
        %3861 = vmatprep.subr.mxu0 0.0
        %3862 = vmatpush1.msra.mxu0 %v3415
        %3863 = vmatprep.subr.mxu0 0.0
        %3864 = vmatpush1.msra.mxu0 %v3416
        %3865 = vmatprep.subr.mxu0 0.0
        %3866 = vmatpush1.msra.mxu0 %v3417
        %3867 = vmatprep.subr.mxu0 0.0
        %3868 = vmatpush1.msra.mxu0 %v3418
        %3869 = vmatprep.subr.mxu0 0.0
        %3870 = vmatpush1.msra.mxu0 %v3419
        %3871 = vmatprep.subr.mxu0 0.0
        %3872 = vmatpush1.msra.mxu0 %v3420
        %3873 = vmatprep.subr.mxu0 0.0
        %3874 = vmatpush1.msra.mxu0 %v3421
        %3875 = vmatprep.subr.mxu0 0.0
        %3876 = vmatpush1.msra.mxu0 %v3422
        %3877 = vmatprep.subr.mxu0 0.0
        %3878 = vmatpush1.msra.mxu0 %v3423
        %3879 = vmatprep.subr.mxu0 0.0
        %3880 = vmatpush1.msra.mxu0 %v3424
        %3881 = vmatprep.subr.mxu0 0.0
        %3882 = vmatpush1.msra.mxu0 %v3425
        %3883 = vmatprep.subr.mxu0 0.0
        %3884 = vmatpush1.msra.mxu0 %v3426
        %3885 = vmatprep.subr.mxu0 0.0
        %3886 = vmatpush1.msra.mxu0 %v3427
        %3887 = vmatprep.subr.mxu0 0.0
        %3888 = vmatpush1.msra.mxu0 %v3428
        %3889 = vmatprep.subr.mxu0 0.0
        %3890 = vmatpush1.msra.mxu0 %v3429
        %3891 = vmatprep.subr.mxu0 0.0
        %3892 = vmatpush1.msra.mxu0 %v3430
        %3893 = vmatprep.subr.mxu0 0.0
        %3894 = vmatpush1.msra.mxu0 %v3431
        %3895 = vmatprep.subr.mxu0 0.0
        %3896 = vmatpush1.msra.mxu0 %v3432
        %3897 = vmatprep.subr.mxu0 0.0
        %3898 = vmatpush1.msra.mxu0 %v3433
        %3899 = vmatprep.subr.mxu0 0.0
        %3900 = vmatpush1.msra.mxu0 %v3434
        %3901 = vmatprep.subr.mxu0 0.0
        %3902 = vmatpush1.msra.mxu0 %v3435
        %3903 = vmatprep.subr.mxu0 0.0
        %3904 = vmatpush1.msra.mxu0 %v3436
        %3905 = vmatprep.subr.mxu0 0.0
        %3906 = vmatpush1.msra.mxu0 %v3437
        %3907 = vmatprep.subr.mxu0 0.0
        %3908 = vmatpush1.msra.mxu0 %v3438
        %3909 = vmatprep.subr.mxu0 0.0
        %3910 = vmatpush1.msra.mxu0 %v3439
        %3911 = vmatprep.mubr.f32.mxu0 %v3332
        %3912 = vmatmul.mubr.f32.gmra.mrb[0].mxu0 %v3330
        %v3913 = vpop.f32.mrb[0].mxu0
        %v3914 = vadd.f32 %v3844, %v3913
        %v3915 = vpop.f32.mrb[0].mxu0
        %3916 = vdwg.mxu0
        %3917 = vmatprep.subr.mxu0 0.0
        %3918 = vmatpush1.msra.mxu0 %v3440
        %3919 = vmatprep.subr.mxu0 0.0
        %3920 = vmatpush1.msra.mxu0 %v3441
        %3921 = vmatprep.subr.mxu0 0.0
        %3922 = vmatpush1.msra.mxu0 %v3442
        %3923 = vmatprep.subr.mxu0 0.0
        %3924 = vmatpush1.msra.mxu0 %v3443
        %3925 = vmatprep.subr.mxu0 0.0
        %3926 = vmatpush1.msra.mxu0 %v3444
        %3927 = vmatprep.subr.mxu0 0.0
        %3928 = vmatpush1.msra.mxu0 %v3445
        %3929 = vmatprep.subr.mxu0 0.0
        %3930 = vmatpush1.msra.mxu0 %v3446
        %3931 = vmatprep.subr.mxu0 0.0
        %3932 = vmatpush1.msra.mxu0 %v3447
        %3933 = vmatprep.subr.mxu0 0.0
        %3934 = vmatpush1.msra.mxu0 %v3448
        %3935 = vmatprep.subr.mxu0 0.0
        %3936 = vmatpush1.msra.mxu0 %v3449
        %3937 = vmatprep.subr.mxu0 0.0
        %3938 = vmatpush1.msra.mxu0 %v3450
        %3939 = vmatprep.subr.mxu0 0.0
        %3940 = vmatpush1.msra.mxu0 %v3451
        %3941 = vmatprep.subr.mxu0 0.0
        %3942 = vmatpush1.msra.mxu0 %v3452
        %3943 = vmatprep.subr.mxu0 0.0
        %3944 = vmatpush1.msra.mxu0 %v3453
        %3945 = vmatprep.subr.mxu0 0.0
        %3946 = vmatpush1.msra.mxu0 %v3454
        %3947 = vmatprep.subr.mxu0 0.0
        %3948 = vmatpush1.msra.mxu0 %v3455
        %3949 = vmatprep.subr.mxu0 0.0
        %3950 = vmatpush1.msra.mxu0 %v3456
        %3951 = vmatprep.subr.mxu0 0.0
        %3952 = vmatpush1.msra.mxu0 %v3457
        %3953 = vmatprep.subr.mxu0 0.0
        %3954 = vmatpush1.msra.mxu0 %v3458
        %3955 = vmatprep.subr.mxu0 0.0
        %3956 = vmatpush1.msra.mxu0 %v3459
        %3957 = vmatprep.subr.mxu0 0.0
        %3958 = vmatpush1.msra.mxu0 %v3460
        %3959 = vmatprep.subr.mxu0 0.0
        %3960 = vmatpush1.msra.mxu0 %v3461
        %3961 = vmatprep.subr.mxu0 0.0
        %3962 = vmatpush1.msra.mxu0 %v3462
        %3963 = vmatprep.subr.mxu0 0.0
        %3964 = vmatpush1.msra.mxu0 %v3463
        %3965 = vmatprep.subr.mxu0 0.0
        %3966 = vmatpush1.msra.mxu0 %v3464
        %3967 = vmatprep.subr.mxu0 0.0
        %3968 = vmatpush1.msra.mxu0 %v3465
        %3969 = vmatprep.subr.mxu0 0.0
        %3970 = vmatpush1.msra.mxu0 %v3466
        %3971 = vmatprep.subr.mxu0 0.0
        %3972 = vmatpush1.msra.mxu0 %v3467
        %3973 = vmatprep.subr.mxu0 0.0
        %3974 = vmatpush1.msra.mxu0 %v3468
        %3975 = vmatprep.subr.mxu0 0.0
        %3976 = vmatpush1.msra.mxu0 %v3469
        %3977 = vmatprep.subr.mxu0 0.0
        %3978 = vmatpush1.msra.mxu0 %v3470
        %3979 = vmatprep.subr.mxu0 0.0
        %3980 = vmatpush1.msra.mxu0 %v3471
        %3981 = vmatprep.mubr.f32.mxu0 %v3276
        %3982 = vmatmul.mubr.f32.gmra.mrb[0].mxu0 %v3270
        %v3983 = vpop.f32.mrb[0].mxu0
        %v3984 = vadd.f32 %v3914, %v3983
        %v3985 = vpop.f32.mrb[0].mxu0
        %3986 = vdwg.mxu0
        %3987 = vmatprep.subr.mxu0 0.0
        %3988 = vmatpush1.msra.mxu0 %v3472
        %3989 = vmatprep.subr.mxu0 0.0
        %3990 = vmatpush1.msra.mxu0 %v3473
        %3991 = vmatprep.subr.mxu0 0.0
        %3992 = vmatpush1.msra.mxu0 %v3474
        %3993 = vmatprep.subr.mxu0 0.0
        %3994 = vmatpush1.msra.mxu0 %v3475
        %3995 = vmatprep.subr.mxu0 0.0
        %3996 = vmatpush1.msra.mxu0 %v3476
        %3997 = vmatprep.subr.mxu0 0.0
        %3998 = vmatpush1.msra.mxu0 %v3477
        %3999 = vmatprep.subr.mxu0 0.0
        %4000 = vmatpush1.msra.mxu0 %v3478
        %4001 = vmatprep.subr.mxu0 0.0
        %4002 = vmatpush1.msra.mxu0 %v3479
        %4003 = vmatprep.subr.mxu0 0.0
        %4004 = vmatpush1.msra.mxu0 %v3480
        %4005 = vmatprep.subr.mxu0 0.0
        %4006 = vmatpush1.msra.mxu0 %v3481
        %4007 = vmatprep.subr.mxu0 0.0
        %4008 = vmatpush1.msra.mxu0 %v3482
        %4009 = vmatprep.subr.mxu0 0.0
        %4010 = vmatpush1.msra.mxu0 %v3483
        %4011 = vmatprep.subr.mxu0 0.0
        %4012 = vmatpush1.msra.mxu0 %v3484
        %4013 = vmatprep.subr.mxu0 0.0
        %4014 = vmatpush1.msra.mxu0 %v3485
        %4015 = vmatprep.subr.mxu0 0.0
        %4016 = vmatpush1.msra.mxu0 %v3486
        %4017 = vmatprep.subr.mxu0 0.0
        %4018 = vmatpush1.msra.mxu0 %v3487
        %4019 = vmatprep.subr.mxu0 0.0
        %4020 = vmatpush1.msra.mxu0 %v3488
        %4021 = vmatprep.subr.mxu0 0.0
        %4022 = vmatpush1.msra.mxu0 %v3489
        %4023 = vmatprep.subr.mxu0 0.0
        %4024 = vmatpush1.msra.mxu0 %v3490
        %4025 = vmatprep.subr.mxu0 0.0
        %4026 = vmatpush1.msra.mxu0 %v3491
        %4027 = vmatprep.subr.mxu0 0.0
        %4028 = vmatpush1.msra.mxu0 %v3492
        %4029 = vmatprep.subr.mxu0 0.0
        %4030 = vmatpush1.msra.mxu0 %v3493
        %4031 = vmatprep.subr.mxu0 0.0
        %4032 = vmatpush1.msra.mxu0 %v3494
        %4033 = vmatprep.subr.mxu0 0.0
        %4034 = vmatpush1.msra.mxu0 %v3495
        %4035 = vmatprep.subr.mxu0 0.0
        %4036 = vmatpush1.msra.mxu0 %v3496
        %4037 = vmatprep.subr.mxu0 0.0
        %4038 = vmatpush1.msra.mxu0 %v3497
        %4039 = vmatprep.subr.mxu0 0.0
        %4040 = vmatpush1.msra.mxu0 %v3498
        %4041 = vmatprep.subr.mxu0 0.0
        %4042 = vmatpush1.msra.mxu0 %v3499
        %4043 = vmatprep.subr.mxu0 0.0
        %4044 = vmatpush1.msra.mxu0 %v3500
        %4045 = vmatprep.subr.mxu0 0.0
        %4046 = vmatpush1.msra.mxu0 %v3501
        %4047 = vmatprep.subr.mxu0 0.0
        %4048 = vmatpush1.msra.mxu0 %v3502
        %4049 = vmatprep.subr.mxu0 0.0
        %4050 = vmatpush1.msra.mxu0 %v3503
        %4051 = vmatprep.mubr.f32.mxu0 %v3337
        %4052 = vmatmul.mubr.f32.gmra.mrb[0].mxu0 %v3335
        %v4053 = vpop.f32.mrb[0].mxu0
        %v4054 = vadd.f32 %v3984, %v4053
        %v4055 = vpop.f32.mrb[0].mxu0
        %4056 = vdwg.mxu0
        %4057 = vmatprep.subr.mxu0 0.0
        %4058 = vmatpush1.msra.mxu0 %v3504
        %4059 = vmatprep.subr.mxu0 0.0
        %4060 = vmatpush1.msra.mxu0 %v3505
        %4061 = vmatprep.subr.mxu0 0.0
        %4062 = vmatpush1.msra.mxu0 %v3506
        %4063 = vmatprep.subr.mxu0 0.0
        %4064 = vmatpush1.msra.mxu0 %v3507
        %4065 = vmatprep.subr.mxu0 0.0
        %4066 = vmatpush1.msra.mxu0 %v3508
        %4067 = vmatprep.subr.mxu0 0.0
        %4068 = vmatpush1.msra.mxu0 %v3509
        %4069 = vmatprep.subr.mxu0 0.0
        %4070 = vmatpush1.msra.mxu0 %v3510
        %4071 = vmatprep.subr.mxu0 0.0
        %4072 = vmatpush1.msra.mxu0 %v3511
        %4073 = vmatprep.subr.mxu0 0.0
        %4074 = vmatpush1.msra.mxu0 %v3512
        %4075 = vmatprep.subr.mxu0 0.0
        %4076 = vmatpush1.msra.mxu0 %v3513
        %4077 = vmatprep.subr.mxu0 0.0
        %4078 = vmatpush1.msra.mxu0 %v3514
        %4079 = vmatprep.subr.mxu0 0.0
        %4080 = vmatpush1.msra.mxu0 %v3515
        %4081 = vmatprep.subr.mxu0 0.0
        %4082 = vmatpush1.msra.mxu0 %v3516
        %4083 = vmatprep.subr.mxu0 0.0
        %4084 = vmatpush1.msra.mxu0 %v3517
        %4085 = vmatprep.subr.mxu0 0.0
        %4086 = vmatpush1.msra.mxu0 %v3518
        %4087 = vmatprep.subr.mxu0 0.0
        %4088 = vmatpush1.msra.mxu0 %v3519
        %4089 = vmatprep.subr.mxu0 0.0
        %4090 = vmatpush1.msra.mxu0 %v3520
        %4091 = vmatprep.subr.mxu0 0.0
        %4092 = vmatpush1.msra.mxu0 %v3521
        %4093 = vmatprep.subr.mxu0 0.0
        %4094 = vmatpush1.msra.mxu0 %v3522
        %4095 = vmatprep.subr.mxu0 0.0
        %4096 = vmatpush1.msra.mxu0 %v3523
        %4097 = vmatprep.subr.mxu0 0.0
        %4098 = vmatpush1.msra.mxu0 %v3524
        %4099 = vmatprep.subr.mxu0 0.0
        %4100 = vmatpush1.msra.mxu0 %v3525
        %4101 = vmatprep.subr.mxu0 0.0
        %4102 = vmatpush1.msra.mxu0 %v3526
        %4103 = vmatprep.subr.mxu0 0.0
        %4104 = vmatpush1.msra.mxu0 %v3527
        %4105 = vmatprep.subr.mxu0 0.0
        %4106 = vmatpush1.msra.mxu0 %v3528
        %4107 = vmatprep.subr.mxu0 0.0
        %4108 = vmatpush1.msra.mxu0 %v3529
        %4109 = vmatprep.subr.mxu0 0.0
        %4110 = vmatpush1.msra.mxu0 %v3530
        %4111 = vmatprep.subr.mxu0 0.0
        %4112 = vmatpush1.msra.mxu0 %v3531
        %4113 = vmatprep.subr.mxu0 0.0
        %4114 = vmatpush1.msra.mxu0 %v3532
        %4115 = vmatprep.subr.mxu0 0.0
        %4116 = vmatpush1.msra.mxu0 %v3533
        %4117 = vmatprep.subr.mxu0 0.0
        %4118 = vmatpush1.msra.mxu0 %v3534
        %4119 = vmatprep.subr.mxu0 0.0
        %4120 = vmatpush1.msra.mxu0 %v3535
        %4121 = vmatprep.mubr.f32.mxu0 %v3284
        %4122 = vmatmul.mubr.f32.gmra.mrb[0].mxu0 %v3339
        %v4123 = vpop.f32.mrb[0].mxu0
        %v4124 = vadd.f32 %v4054, %v4123
        %v4125 = vpop.f32.mrb[0].mxu0
        %4126 = vdwg.mxu0
        %4127 = vmatprep.subr.mxu0 0.0
        %4128 = vmatpush1.msra.mxu0 %v3536
        %4129 = vmatprep.subr.mxu0 0.0
        %4130 = vmatpush1.msra.mxu0 %v3537
        %4131 = vmatprep.subr.mxu0 0.0
        %4132 = vmatpush1.msra.mxu0 %v3538
        %4133 = vmatprep.subr.mxu0 0.0
        %4134 = vmatpush1.msra.mxu0 %v3539
        %4135 = vmatprep.subr.mxu0 0.0
        %4136 = vmatpush1.msra.mxu0 %v3540
        %4137 = vmatprep.subr.mxu0 0.0
        %4138 = vmatpush1.msra.mxu0 %v3541
        %4139 = vmatprep.subr.mxu0 0.0
        %4140 = vmatpush1.msra.mxu0 %v3542
        %4141 = vmatprep.subr.mxu0 0.0
        %4142 = vmatpush1.msra.mxu0 %v3543
        %4143 = vmatprep.subr.mxu0 0.0
        %4144 = vmatpush1.msra.mxu0 %v3544
        %4145 = vmatprep.subr.mxu0 0.0
        %4146 = vmatpush1.msra.mxu0 %v3545
        %4147 = vmatprep.subr.mxu0 0.0
        %4148 = vmatpush1.msra.mxu0 %v3546
        %4149 = vmatprep.subr.mxu0 0.0
        %4150 = vmatpush1.msra.mxu0 %v3547
        %4151 = vmatprep.subr.mxu0 0.0
        %4152 = vmatpush1.msra.mxu0 %v3548
        %4153 = vmatprep.subr.mxu0 0.0
        %4154 = vmatpush1.msra.mxu0 %v3549
        %4155 = vmatprep.subr.mxu0 0.0
        %4156 = vmatpush1.msra.mxu0 %v3550
        %4157 = vmatprep.subr.mxu0 0.0
        %4158 = vmatpush1.msra.mxu0 %v3551
        %4159 = vmatprep.subr.mxu0 0.0
        %4160 = vmatpush1.msra.mxu0 %v3552
        %4161 = vmatprep.subr.mxu0 0.0
        %4162 = vmatpush1.msra.mxu0 %v3553
        %4163 = vmatprep.subr.mxu0 0.0
        %4164 = vmatpush1.msra.mxu0 %v3554
        %4165 = vmatprep.subr.mxu0 0.0
        %4166 = vmatpush1.msra.mxu0 %v3555
        %4167 = vmatprep.subr.mxu0 0.0
        %4168 = vmatpush1.msra.mxu0 %v3556
        %4169 = vmatprep.subr.mxu0 0.0
        %4170 = vmatpush1.msra.mxu0 %v3557
        %4171 = vmatprep.subr.mxu0 0.0
        %4172 = vmatpush1.msra.mxu0 %v3558
        %4173 = vmatprep.subr.mxu0 0.0
        %4174 = vmatpush1.msra.mxu0 %v3559
        %4175 = vmatprep.subr.mxu0 0.0
        %4176 = vmatpush1.msra.mxu0 %v3560
        %4177 = vmatprep.subr.mxu0 0.0
        %4178 = vmatpush1.msra.mxu0 %v3561
        %4179 = vmatprep.subr.mxu0 0.0
        %4180 = vmatpush1.msra.mxu0 %v3562
        %4181 = vmatprep.subr.mxu0 0.0
        %4182 = vmatpush1.msra.mxu0 %v3563
        %4183 = vmatprep.subr.mxu0 0.0
        %4184 = vmatpush1.msra.mxu0 %v3564
        %4185 = vmatprep.subr.mxu0 0.0
        %4186 = vmatpush1.msra.mxu0 %v3565
        %4187 = vmatprep.subr.mxu0 0.0
        %4188 = vmatpush1.msra.mxu0 %v3566
        %4189 = vmatprep.subr.mxu0 0.0
        %4190 = vmatpush1.msra.mxu0 %v3567
        %4191 = vmatprep.mubr.f32.mxu0 %v3342
        %4192 = vmatmul.mubr.f32.gmra.mrb[0].mxu0 %v3290
        %v4193 = vpop.f32.mrb[0].mxu0
        %v4194 = vadd.f32 %v4124, %v4193
        %v4195 = vpop.f32.mrb[0].mxu0
        %4196 = vdwg.mxu0
        %4197 = vmatprep.subr.mxu0 0.0
        %4198 = vmatpush1.msra.mxu0 %v3568
        %4199 = vmatprep.subr.mxu0 0.0
        %4200 = vmatpush1.msra.mxu0 %v3569
        %4201 = vmatprep.subr.mxu0 0.0
        %4202 = vmatpush1.msra.mxu0 %v3570
        %4203 = vmatprep.subr.mxu0 0.0
        %4204 = vmatpush1.msra.mxu0 %v3571
        %4205 = vmatprep.subr.mxu0 0.0
        %4206 = vmatpush1.msra.mxu0 %v3572
        %4207 = vmatprep.subr.mxu0 0.0
        %4208 = vmatpush1.msra.mxu0 %v3573
        %4209 = vmatprep.subr.mxu0 0.0
        %4210 = vmatpush1.msra.mxu0 %v3574
        %4211 = vmatprep.subr.mxu0 0.0
        %4212 = vmatpush1.msra.mxu0 %v3575
        %4213 = vmatprep.subr.mxu0 0.0
        %4214 = vmatpush1.msra.mxu0 %v3576
        %4215 = vmatprep.subr.mxu0 0.0
        %4216 = vmatpush1.msra.mxu0 %v3577
        %4217 = vmatprep.subr.mxu0 0.0
        %4218 = vmatpush1.msra.mxu0 %v3578
        %4219 = vmatprep.subr.mxu0 0.0
        %4220 = vmatpush1.msra.mxu0 %v3579
        %4221 = vmatprep.subr.mxu0 0.0
        %4222 = vmatpush1.msra.mxu0 %v3580
        %4223 = vmatprep.subr.mxu0 0.0
        %4224 = vmatpush1.msra.mxu0 %v3581
        %4225 = vmatprep.subr.mxu0 0.0
        %4226 = vmatpush1.msra.mxu0 %v3582
        %4227 = vmatprep.subr.mxu0 0.0
        %4228 = vmatpush1.msra.mxu0 %v3583
        %4229 = vmatprep.subr.mxu0 0.0
        %4230 = vmatpush1.msra.mxu0 %v3584
        %4231 = vmatprep.subr.mxu0 0.0
        %4232 = vmatpush1.msra.mxu0 %v3585
        %4233 = vmatprep.subr.mxu0 0.0
        %4234 = vmatpush1.msra.mxu0 %v3586
        %4235 = vmatprep.subr.mxu0 0.0
        %4236 = vmatpush1.msra.mxu0 %v3587
        %4237 = vmatprep.subr.mxu0 0.0
        %4238 = vmatpush1.msra.mxu0 %v3588
        %4239 = vmatprep.subr.mxu0 0.0
        %4240 = vmatpush1.msra.mxu0 %v3589
        %4241 = vmatprep.subr.mxu0 0.0
        %4242 = vmatpush1.msra.mxu0 %v3590
        %4243 = vmatprep.subr.mxu0 0.0
        %4244 = vmatpush1.msra.mxu0 %v3591
        %4245 = vmatprep.subr.mxu0 0.0
        %4246 = vmatpush1.msra.mxu0 %v3592
        %4247 = vmatprep.subr.mxu0 0.0
        %4248 = vmatpush1.msra.mxu0 %v3593
        %4249 = vmatprep.subr.mxu0 0.0
        %4250 = vmatpush1.msra.mxu0 %v3594
        %4251 = vmatprep.subr.mxu0 0.0
        %4252 = vmatpush1.msra.mxu0 %v3595
        %4253 = vmatprep.subr.mxu0 0.0
        %4254 = vmatpush1.msra.mxu0 %v3596
        %4255 = vmatprep.subr.mxu0 0.0
        %4256 = vmatpush1.msra.mxu0 %v3597
        %4257 = vmatprep.subr.mxu0 0.0
        %4258 = vmatpush1.msra.mxu0 %v3598
        %4259 = vmatprep.subr.mxu0 0.0
        %4260 = vmatpush1.msra.mxu0 %v3599
        %4261 = vmatprep.mubr.f32.mxu0 %v3346
        %4262 = vmatmul.mubr.f32.gmra.mrb[0].mxu0 %v3344
        %v4263 = vpop.f32.mrb[0].mxu0
        %v4264 = vadd.f32 %v4194, %v4263
        %v4265 = vpop.f32.mrb[0].mxu0
        %4266 = vdwg.mxu0
        %4267 = vmatprep.subr.mxu0 0.0
        %4268 = vmatpush1.msra.mxu0 %v3600
        %4269 = vmatprep.subr.mxu0 0.0
        %4270 = vmatpush1.msra.mxu0 %v3601
        %4271 = vmatprep.subr.mxu0 0.0
        %4272 = vmatpush1.msra.mxu0 %v3602
        %4273 = vmatprep.subr.mxu0 0.0
        %4274 = vmatpush1.msra.mxu0 %v3603
        %4275 = vmatprep.subr.mxu0 0.0
        %4276 = vmatpush1.msra.mxu0 %v3604
        %4277 = vmatprep.subr.mxu0 0.0
        %4278 = vmatpush1.msra.mxu0 %v3605
        %4279 = vmatprep.subr.mxu0 0.0
        %4280 = vmatpush1.msra.mxu0 %v3606
        %4281 = vmatprep.subr.mxu0 0.0
        %4282 = vmatpush1.msra.mxu0 %v3607
        %4283 = vmatprep.subr.mxu0 0.0
        %4284 = vmatpush1.msra.mxu0 %v3608
        %4285 = vmatprep.subr.mxu0 0.0
        %4286 = vmatpush1.msra.mxu0 %v3609
        %4287 = vmatprep.subr.mxu0 0.0
        %4288 = vmatpush1.msra.mxu0 %v3610
        %4289 = vmatprep.subr.mxu0 0.0
        %4290 = vmatpush1.msra.mxu0 %v3611
        %4291 = vmatprep.subr.mxu0 0.0
        %4292 = vmatpush1.msra.mxu0 %v3612
        %4293 = vmatprep.subr.mxu0 0.0
        %4294 = vmatpush1.msra.mxu0 %v3613
        %4295 = vmatprep.subr.mxu0 0.0
        %4296 = vmatpush1.msra.mxu0 %v3614
        %4297 = vmatprep.subr.mxu0 0.0
        %4298 = vmatpush1.msra.mxu0 %v3615
        %4299 = vmatprep.subr.mxu0 0.0
        %4300 = vmatpush1.msra.mxu0 %v3616
        %4301 = vmatprep.subr.mxu0 0.0
        %4302 = vmatpush1.msra.mxu0 %v3617
        %4303 = vmatprep.subr.mxu0 0.0
        %4304 = vmatpush1.msra.mxu0 %v3618
        %4305 = vmatprep.subr.mxu0 0.0
        %4306 = vmatpush1.msra.mxu0 %v3619
        %4307 = vmatprep.subr.mxu0 0.0
        %4308 = vmatpush1.msra.mxu0 %v3620
        %4309 = vmatprep.subr.mxu0 0.0
        %4310 = vmatpush1.msra.mxu0 %v3621
        %4311 = vmatprep.subr.mxu0 0.0
        %4312 = vmatpush1.msra.mxu0 %v3622
        %4313 = vmatprep.subr.mxu0 0.0
        %4314 = vmatpush1.msra.mxu0 %v3623
        %4315 = vmatprep.subr.mxu0 0.0
        %4316 = vmatpush1.msra.mxu0 %v3624
        %4317 = vmatprep.subr.mxu0 0.0
        %4318 = vmatpush1.msra.mxu0 %v3625
        %4319 = vmatprep.subr.mxu0 0.0
        %4320 = vmatpush1.msra.mxu0 %v3626
        %4321 = vmatprep.subr.mxu0 0.0
        %4322 = vmatpush1.msra.mxu0 %v3627
        %4323 = vmatprep.subr.mxu0 0.0
        %4324 = vmatpush1.msra.mxu0 %v3628
        %4325 = vmatprep.subr.mxu0 0.0
        %4326 = vmatpush1.msra.mxu0 %v3629
        %4327 = vmatprep.subr.mxu0 0.0
        %4328 = vmatpush1.msra.mxu0 %v3630
        %4329 = vmatprep.subr.mxu0 0.0
        %4330 = vmatpush1.msra.mxu0 %v3631
        %4331 = vmatprep.mubr.f32.mxu0 %v3304
        %4332 = vmatmul.mubr.f32.gmra.mrb[0].mxu0 %v3298
        %v4333 = vpop.f32.mrb[0].mxu0
        %v4334 = vadd.f32 %v4264, %v4333
        %v4335 = vpop.f32.mrb[0].mxu0
        %4336 = vdwg.mxu0
        %4337 = vmatprep.subr.mxu0 0.0
        %4338 = vmatpush1.msra.mxu0 %v3632
        %4339 = vmatprep.subr.mxu0 0.0
        %4340 = vmatpush1.msra.mxu0 %v3633
        %4341 = vmatprep.subr.mxu0 0.0
        %4342 = vmatpush1.msra.mxu0 %v3634
        %4343 = vmatprep.subr.mxu0 0.0
        %4344 = vmatpush1.msra.mxu0 %v3635
        %4345 = vmatprep.subr.mxu0 0.0
        %4346 = vmatpush1.msra.mxu0 %v3636
        %4347 = vmatprep.subr.mxu0 0.0
        %4348 = vmatpush1.msra.mxu0 %v3637
        %4349 = vmatprep.subr.mxu0 0.0
        %4350 = vmatpush1.msra.mxu0 %v3638
        %4351 = vmatprep.subr.mxu0 0.0
        %4352 = vmatpush1.msra.mxu0 %v3639
        %4353 = vmatprep.subr.mxu0 0.0
        %4354 = vmatpush1.msra.mxu0 %v3640
        %4355 = vmatprep.subr.mxu0 0.0
        %4356 = vmatpush1.msra.mxu0 %v3641
        %4357 = vmatprep.subr.mxu0 0.0
        %4358 = vmatpush1.msra.mxu0 %v3642
        %4359 = vmatprep.subr.mxu0 0.0
        %4360 = vmatpush1.msra.mxu0 %v3643
        %4361 = vmatprep.subr.mxu0 0.0
        %4362 = vmatpush1.msra.mxu0 %v3644
        %4363 = vmatprep.subr.mxu0 0.0
        %4364 = vmatpush1.msra.mxu0 %v3645
        %4365 = vmatprep.subr.mxu0 0.0
        %4366 = vmatpush1.msra.mxu0 %v3646
        %4367 = vmatprep.subr.mxu0 0.0
        %4368 = vmatpush1.msra.mxu0 %v3647
        %4369 = vmatprep.subr.mxu0 0.0
        %4370 = vmatpush1.msra.mxu0 %v3648
        %4371 = vmatprep.subr.mxu0 0.0
        %4372 = vmatpush1.msra.mxu0 %v3649
        %4373 = vmatprep.subr.mxu0 0.0
        %4374 = vmatpush1.msra.mxu0 %v3650
        %4375 = vmatprep.subr.mxu0 0.0
        %4376 = vmatpush1.msra.mxu0 %v3651
        %4377 = vmatprep.subr.mxu0 0.0
        %4378 = vmatpush1.msra.mxu0 %v3652
        %4379 = vmatprep.subr.mxu0 0.0
        %4380 = vmatpush1.msra.mxu0 %v3653
        %4381 = vmatprep.subr.mxu0 0.0
        %4382 = vmatpush1.msra.mxu0 %v3654
        %4383 = vmatprep.subr.mxu0 0.0
        %4384 = vmatpush1.msra.mxu0 %v3655
        %4385 = vmatprep.subr.mxu0 0.0
        %4386 = vmatpush1.msra.mxu0 %v3656
        %4387 = vmatprep.subr.mxu0 0.0
        %4388 = vmatpush1.msra.mxu0 %v3657
        %4389 = vmatprep.subr.mxu0 0.0
        %4390 = vmatpush1.msra.mxu0 %v3658
        %4391 = vmatprep.subr.mxu0 0.0
        %4392 = vmatpush1.msra.mxu0 %v3659
        %4393 = vmatprep.subr.mxu0 0.0
        %4394 = vmatpush1.msra.mxu0 %v3660
        %4395 = vmatprep.subr.mxu0 0.0
        %4396 = vmatpush1.msra.mxu0 %v3661
        %4397 = vmatprep.subr.mxu0 0.0
        %4398 = vmatpush1.msra.mxu0 %v3662
        %4399 = vmatprep.subr.mxu0 0.0
        %4400 = vmatpush1.msra.mxu0 %v3663
        %4401 = vmatprep.mubr.f32.mxu0 %v3360
        %4402 = vmatmul.mubr.f32.gmra.mrb[0].mxu0 %v3349
        %v4403 = vpop.f32.mrb[0].mxu0
        %v4404 = vadd.f32 %v4334, %v4403
        %v4405 = vpop.f32.mrb[0].mxu0
        %4406 = vdwg.mxu0
        %4407 = vmatprep.subr.mxu0 0.0
        %4408 = vmatpush1.msra.mxu0 %v3664
        %4409 = vmatprep.subr.mxu0 0.0
        %4410 = vmatpush1.msra.mxu0 %v3665
        %4411 = vmatprep.subr.mxu0 0.0
        %4412 = vmatpush1.msra.mxu0 %v3666
        %4413 = vmatprep.subr.mxu0 0.0
        %4414 = vmatpush1.msra.mxu0 %v3667
        %4415 = vmatprep.subr.mxu0 0.0
        %4416 = vmatpush1.msra.mxu0 %v3668
        %4417 = vmatprep.subr.mxu0 0.0
        %4418 = vmatpush1.msra.mxu0 %v3669
        %4419 = vmatprep.subr.mxu0 0.0
        %4420 = vmatpush1.msra.mxu0 %v3670
        %4421 = vmatprep.subr.mxu0 0.0
        %4422 = vmatpush1.msra.mxu0 %v3671
        %4423 = vmatprep.subr.mxu0 0.0
        %4424 = vmatpush1.msra.mxu0 %v3672
        %4425 = vmatprep.subr.mxu0 0.0
        %4426 = vmatpush1.msra.mxu0 %v3673
        %4427 = vmatprep.subr.mxu0 0.0
        %4428 = vmatpush1.msra.mxu0 %v3674
        %4429 = vmatprep.subr.mxu0 0.0
        %4430 = vmatpush1.msra.mxu0 %v3675
        %4431 = vmatprep.subr.mxu0 0.0
        %4432 = vmatpush1.msra.mxu0 %v3676
        %4433 = vmatprep.subr.mxu0 0.0
        %4434 = vmatpush1.msra.mxu0 %v3677
        %4435 = vmatprep.subr.mxu0 0.0
        %4436 = vmatpush1.msra.mxu0 %v3678
        %4437 = vmatprep.subr.mxu0 0.0
        %4438 = vmatpush1.msra.mxu0 %v3679
        %4439 = vmatprep.subr.mxu0 0.0
        %4440 = vmatpush1.msra.mxu0 %v3680
        %4441 = vmatprep.subr.mxu0 0.0
        %4442 = vmatpush1.msra.mxu0 %v3681
        %4443 = vmatprep.subr.mxu0 0.0
        %4444 = vmatpush1.msra.mxu0 %v3682
        %4445 = vmatprep.subr.mxu0 0.0
        %4446 = vmatpush1.msra.mxu0 %v3683
        %4447 = vmatprep.subr.mxu0 0.0
        %4448 = vmatpush1.msra.mxu0 %v3684
        %4449 = vmatprep.subr.mxu0 0.0
        %4450 = vmatpush1.msra.mxu0 %v3685
        %4451 = vmatprep.subr.mxu0 0.0
        %4452 = vmatpush1.msra.mxu0 %v3686
        %4453 = vmatprep.subr.mxu0 0.0
        %4454 = vmatpush1.msra.mxu0 %v3687
        %4455 = vmatprep.subr.mxu0 0.0
        %4456 = vmatpush1.msra.mxu0 %v3688
        %4457 = vmatprep.subr.mxu0 0.0
        %4458 = vmatpush1.msra.mxu0 %v3689
        %4459 = vmatprep.subr.mxu0 0.0
        %4460 = vmatpush1.msra.mxu0 %v3690
        %4461 = vmatprep.subr.mxu0 0.0
        %4462 = vmatpush1.msra.mxu0 %v3691
        %4463 = vmatprep.subr.mxu0 0.0
        %4464 = vmatpush1.msra.mxu0 %v3692
        %4465 = vmatprep.subr.mxu0 0.0
        %4466 = vmatpush1.msra.mxu0 %v3693
        %4467 = vmatprep.subr.mxu0 0.0
        %4468 = vmatpush1.msra.mxu0 %v3694
        %4469 = vmatprep.subr.mxu0 0.0
        %4470 = vmatpush1.msra.mxu0 %v3695
        %4471 = vmatprep.mubr.f32.mxu0 %v3362
        %4472 = vmatmul.mubr.f32.gmra.mrb[0].mxu0 %v3361
        %v4473 = vpop.f32.mrb[0].mxu0
        %v4474 = vadd.f32 %v4404, %v4473
        %v4475 = vpop.f32.mrb[0].mxu0
        %4476 = vdwg.mxu0
        %4477 = vmatprep.subr.mxu0 0.0
        %4478 = vmatpush1.msra.mxu0 %v3696
        %4479 = vmatprep.subr.mxu0 0.0
        %4480 = vmatpush1.msra.mxu0 %v3697
        %4481 = vmatprep.subr.mxu0 0.0
        %4482 = vmatpush1.msra.mxu0 %v3698
        %4483 = vmatprep.subr.mxu0 0.0
        %4484 = vmatpush1.msra.mxu0 %v3699
        %4485 = vmatprep.subr.mxu0 0.0
        %4486 = vmatpush1.msra.mxu0 %v3700
        %4487 = vmatprep.subr.mxu0 0.0
        %4488 = vmatpush1.msra.mxu0 %v3701
        %4489 = vmatprep.subr.mxu0 0.0
        %4490 = vmatpush1.msra.mxu0 %v3702
        %4491 = vmatprep.subr.mxu0 0.0
        %4492 = vmatpush1.msra.mxu0 %v3703
        %4493 = vmatprep.subr.mxu0 0.0
        %4494 = vmatpush1.msra.mxu0 %v3704
        %4495 = vmatprep.subr.mxu0 0.0
        %4496 = vmatpush1.msra.mxu0 %v3705
        %4497 = vmatprep.subr.mxu0 0.0
        %4498 = vmatpush1.msra.mxu0 %v3706
        %4499 = vmatprep.subr.mxu0 0.0
        %4500 = vmatpush1.msra.mxu0 %v3707
        %4501 = vmatprep.subr.mxu0 0.0
        %4502 = vmatpush1.msra.mxu0 %v3708
        %4503 = vmatprep.subr.mxu0 0.0
        %4504 = vmatpush1.msra.mxu0 %v3709
        %4505 = vmatprep.subr.mxu0 0.0
        %4506 = vmatpush1.msra.mxu0 %v3710
        %4507 = vmatprep.subr.mxu0 0.0
        %4508 = vmatpush1.msra.mxu0 %v3711
        %4509 = vmatprep.subr.mxu0 0.0
        %4510 = vmatpush1.msra.mxu0 %v3712
        %4511 = vmatprep.subr.mxu0 0.0
        %4512 = vmatpush1.msra.mxu0 %v3713
        %4513 = vmatprep.subr.mxu0 0.0
        %4514 = vmatpush1.msra.mxu0 %v3714
        %4515 = vmatprep.subr.mxu0 0.0
        %4516 = vmatpush1.msra.mxu0 %v3715
        %4517 = vmatprep.subr.mxu0 0.0
        %4518 = vmatpush1.msra.mxu0 %v3716
        %4519 = vmatprep.subr.mxu0 0.0
        %4520 = vmatpush1.msra.mxu0 %v3717
        %4521 = vmatprep.subr.mxu0 0.0
        %4522 = vmatpush1.msra.mxu0 %v3718
        %4523 = vmatprep.subr.mxu0 0.0
        %4524 = vmatpush1.msra.mxu0 %v3719
        %4525 = vmatprep.subr.mxu0 0.0
        %4526 = vmatpush1.msra.mxu0 %v3720
        %4527 = vmatprep.subr.mxu0 0.0
        %4528 = vmatpush1.msra.mxu0 %v3721
        %4529 = vmatprep.subr.mxu0 0.0
        %4530 = vmatpush1.msra.mxu0 %v3722
        %4531 = vmatprep.subr.mxu0 0.0
        %4532 = vmatpush1.msra.mxu0 %v3723
        %4533 = vmatprep.subr.mxu0 0.0
        %4534 = vmatpush1.msra.mxu0 %v3724
        %4535 = vmatprep.subr.mxu0 0.0
        %4536 = vmatpush1.msra.mxu0 %v3725
        %4537 = vmatprep.subr.mxu0 0.0
        %4538 = vmatpush1.msra.mxu0 %v3726
        %4539 = vmatprep.subr.mxu0 0.0
        %4540 = vmatpush1.msra.mxu0 %v3727
        %4541 = vmatprep.mubr.f32.mxu0 %v3356
        %4542 = vmatmul.mubr.f32.gmra.mrb[0].mxu0 %v3363
        %v4543 = vpop.f32.mrb[0].mxu0
        %v4544 = vadd.f32 %v4474, %v4543
        %v4545 = vpop.f32.mrb[0].mxu0
        %4546 = vdwg.mxu0
        %4547 = vmatprep.subr.mxu0 0.0
        %4548 = vmatpush1.msra.mxu0 %v3728
        %4549 = vmatprep.subr.mxu0 0.0
        %4550 = vmatpush1.msra.mxu0 %v3729
        %4551 = vmatprep.subr.mxu0 0.0
        %4552 = vmatpush1.msra.mxu0 %v3730
        %4553 = vmatprep.subr.mxu0 0.0
        %4554 = vmatpush1.msra.mxu0 %v3731
        %4555 = vmatprep.subr.mxu0 0.0
        %4556 = vmatpush1.msra.mxu0 %v3732
        %4557 = vmatprep.subr.mxu0 0.0
        %4558 = vmatpush1.msra.mxu0 %v3733
        %4559 = vmatprep.subr.mxu0 0.0
        %4560 = vmatpush1.msra.mxu0 %v3734
        %4561 = vmatprep.subr.mxu0 0.0
        %4562 = vmatpush1.msra.mxu0 %v3735
        %4563 = vmatprep.subr.mxu0 0.0
        %4564 = vmatpush1.msra.mxu0 %v3736
        %4565 = vmatprep.subr.mxu0 0.0
        %4566 = vmatpush1.msra.mxu0 %v3737
        %4567 = vmatprep.subr.mxu0 0.0
        %4568 = vmatpush1.msra.mxu0 %v3738
        %4569 = vmatprep.subr.mxu0 0.0
        %4570 = vmatpush1.msra.mxu0 %v3739
        %4571 = vmatprep.subr.mxu0 0.0
        %4572 = vmatpush1.msra.mxu0 %v3740
        %4573 = vmatprep.subr.mxu0 0.0
        %4574 = vmatpush1.msra.mxu0 %v3741
        %4575 = vmatprep.subr.mxu0 0.0
        %4576 = vmatpush1.msra.mxu0 %v3742
        %4577 = vmatprep.subr.mxu0 0.0
        %4578 = vmatpush1.msra.mxu0 %v3743
        %4579 = vmatprep.subr.mxu0 0.0
        %4580 = vmatpush1.msra.mxu0 %v3744
        %4581 = vmatprep.subr.mxu0 0.0
        %4582 = vmatpush1.msra.mxu0 %v3745
        %4583 = vmatprep.subr.mxu0 0.0
        %4584 = vmatpush1.msra.mxu0 %v3746
        %4585 = vmatprep.subr.mxu0 0.0
        %4586 = vmatpush1.msra.mxu0 %v3747
        %4587 = vmatprep.subr.mxu0 0.0
        %4588 = vmatpush1.msra.mxu0 %v3748
        %4589 = vmatprep.subr.mxu0 0.0
        %4590 = vmatpush1.msra.mxu0 %v3749
        %4591 = vmatprep.subr.mxu0 0.0
        %4592 = vmatpush1.msra.mxu0 %v3750
        %4593 = vmatprep.subr.mxu0 0.0
        %4594 = vmatpush1.msra.mxu0 %v3751
        %4595 = vmatprep.subr.mxu0 0.0
        %4596 = vmatpush1.msra.mxu0 %v3752
        %4597 = vmatprep.subr.mxu0 0.0
        %4598 = vmatpush1.msra.mxu0 %v3753
        %4599 = vmatprep.subr.mxu0 0.0
        %4600 = vmatpush1.msra.mxu0 %v3754
        %4601 = vmatprep.subr.mxu0 0.0
        %4602 = vmatpush1.msra.mxu0 %v3755
        %4603 = vmatprep.subr.mxu0 0.0
        %4604 = vmatpush1.msra.mxu0 %v3756
        %4605 = vmatprep.subr.mxu0 0.0
        %4606 = vmatpush1.msra.mxu0 %v3757
        %4607 = vmatprep.subr.mxu0 0.0
        %4608 = vmatpush1.msra.mxu0 %v3758
        %4609 = vmatprep.subr.mxu0 0.0
        %4610 = vmatpush1.msra.mxu0 %v3759
        %4611 = vmatprep.mubr.f32.mxu0 %v3365
        %4612 = vmatmul.mubr.f32.gmra.mrb[0].mxu0 %v3364
        %v4613 = vpop.f32.mrb[0].mxu0
        %v4614 = vadd.f32 %v4544, %v4613
        %v4615 = vpop.f32.mrb[0].mxu0
        %4616 = vdwg.mxu0
        %4617 = vmatprep.subr.mxu0 0.0
        %4618 = vmatpush1.msra.mxu0 %v3760
        %4619 = vmatprep.subr.mxu0 0.0
        %4620 = vmatpush1.msra.mxu0 %v3761
        %4621 = vmatprep.subr.mxu0 0.0
        %4622 = vmatpush1.msra.mxu0 %v3762
        %4623 = vmatprep.subr.mxu0 0.0
        %4624 = vmatpush1.msra.mxu0 %v3763
        %4625 = vmatprep.subr.mxu0 0.0
        %4626 = vmatpush1.msra.mxu0 %v3764
        %4627 = vmatprep.subr.mxu0 0.0
        %4628 = vmatpush1.msra.mxu0 %v3765
        %4629 = vmatprep.subr.mxu0 0.0
        %4630 = vmatpush1.msra.mxu0 %v3766
        %4631 = vmatprep.subr.mxu0 0.0
        %4632 = vmatpush1.msra.mxu0 %v3767
        %4633 = vmatprep.subr.mxu0 0.0
        %4634 = vmatpush1.msra.mxu0 %v3768
        %4635 = vmatprep.subr.mxu0 0.0
        %4636 = vmatpush1.msra.mxu0 %v3769
        %4637 = vmatprep.subr.mxu0 0.0
        %4638 = vmatpush1.msra.mxu0 %v3770
        %4639 = vmatprep.subr.mxu0 0.0
        %4640 = vmatpush1.msra.mxu0 %v3771
        %4641 = vmatprep.subr.mxu0 0.0
        %4642 = vmatpush1.msra.mxu0 %v3772
        %4643 = vmatprep.subr.mxu0 0.0
        %4644 = vmatpush1.msra.mxu0 %v3773
        %4645 = vmatprep.subr.mxu0 0.0
        %4646 = vmatpush1.msra.mxu0 %v3774
        %4647 = vmatprep.subr.mxu0 0.0
        %4648 = vmatpush1.msra.mxu0 %v3775
        %4649 = vmatprep.subr.mxu0 0.0
        %4650 = vmatpush1.msra.mxu0 0.0
        %4651 = vmatprep.subr.mxu0 0.0
        %4652 = vmatpush1.msra.mxu0 0.0
        %4653 = vmatprep.subr.mxu0 0.0
        %4654 = vmatpush1.msra.mxu0 0.0
        %4655 = vmatprep.subr.mxu0 0.0
        %4656 = vmatpush1.msra.mxu0 0.0
        %4657 = vmatprep.subr.mxu0 0.0
        %4658 = vmatpush1.msra.mxu0 0.0
        %4659 = vmatprep.subr.mxu0 0.0
        %4660 = vmatpush1.msra.mxu0 0.0
        %4661 = vmatprep.subr.mxu0 0.0
        %4662 = vmatpush1.msra.mxu0 0.0
        %4663 = vmatprep.subr.mxu0 0.0
        %4664 = vmatpush1.msra.mxu0 0.0
        %4665 = vmatprep.subr.mxu0 0.0
        %4666 = vmatpush1.msra.mxu0 0.0
        %4667 = vmatprep.subr.mxu0 0.0
        %4668 = vmatpush1.msra.mxu0 0.0
        %4669 = vmatprep.subr.mxu0 0.0
        %4670 = vmatpush1.msra.mxu0 0.0
        %4671 = vmatprep.subr.mxu0 0.0
        %4672 = vmatpush1.msra.mxu0 0.0
        %4673 = vmatprep.subr.mxu0 0.0
        %4674 = vmatpush1.msra.mxu0 0.0
        %4675 = vmatprep.subr.mxu0 0.0
        %4676 = vmatpush1.msra.mxu0 0.0
        %4677 = vmatprep.subr.mxu0 0.0
        %4678 = vmatpush1.msra.mxu0 0.0
        %4679 = vmatprep.subr.mxu0 0.0
        %4680 = vmatpush1.msra.mxu0 0.0
        %4681 = vmatprep.mubr.f32.mxu0 0.0
        %4682 = vmatmul.mubr.f32.gmra.mrb[0].mxu0 %v3366
        %v4683 = vpop.f32.mrb[0].mxu0
        %v4684 = vadd.f32 %v4614, %v4683
        %v4685 = vpop.f32.mrb[0].mxu0
        %4686 = vdwg.mxu0
        %v4687 = vmax.f32 %v4684, 0.0
        %v4688 = vld [vmem:[%s7] sm:$0xff]
        %v4689 = vld [vmem:[%s7 + $0x8] sm:$0xff]
        %v4690 = vld [vmem:[%s7 + $0x10] sm:$0xff]
        %v4691 = vld [vmem:[%s7 + $0x18] sm:$0xff]
        %v4692 = vld [vmem:[%s7 + $0x20] sm:$0xff]
        %v4693 = vld [vmem:[%s7 + $0x28] sm:$0xff]
        %v4694 = vld [vmem:[%s7 + $0x30] sm:$0xff]
        %v4695 = vld [vmem:[%s7 + $0x38] sm:$0xff]
        %v4696 = vld [vmem:[%s7 + $0x40] sm:$0xff]
        %v4697 = vld [vmem:[%s7 + $0x48] sm:$0xff]
        %v4698 = vld [vmem:[%s7 + $0x50] sm:$0xff]
        %v4699 = vld [vmem:[%s7 + $0x58] sm:$0xff]
        %v4700 = vld [vmem:[%s7 + $0x60] sm:$0xff]
        %v4701 = vld [vmem:[%s7 + $0x68] sm:$0xff]
        %v4702 = vld [vmem:[%s7 + $0x70] sm:$0xff]
        %v4703 = vld [vmem:[%s7 + $0x78] sm:$0xff]
        %v4704 = vld [vmem:[%s8] sm:$0x1]
        %4705 = vmatprep.subr.mxu0 0.0
        %4706 = vmatpush1.msra.mxu0 %v4688
        %4707 = vmatprep.subr.mxu0 0.0
        %4708 = vmatpush1.msra.mxu0 %v4689
        %4709 = vmatprep.subr.mxu0 0.0
        %4710 = vmatpush1.msra.mxu0 %v4690
        %4711 = vmatprep.subr.mxu0 0.0
        %4712 = vmatpush1.msra.mxu0 %v4691
        %4713 = vmatprep.subr.mxu0 0.0
        %4714 = vmatpush1.msra.mxu0 %v4692
        %4715 = vmatprep.subr.mxu0 0.0
        %4716 = vmatpush1.msra.mxu0 %v4693
        %4717 = vmatprep.subr.mxu0 0.0
        %4718 = vmatpush1.msra.mxu0 %v4694
        %4719 = vmatprep.subr.mxu0 0.0
        %4720 = vmatpush1.msra.mxu0 %v4695
        %4721 = vmatprep.subr.mxu0 0.0
        %4722 = vmatpush1.msra.mxu0 %v4696
        %4723 = vmatprep.subr.mxu0 0.0
        %4724 = vmatpush1.msra.mxu0 %v4697
        %4725 = vmatprep.subr.mxu0 0.0
        %4726 = vmatpush1.msra.mxu0 %v4698
        %4727 = vmatprep.subr.mxu0 0.0
        %4728 = vmatpush1.msra.mxu0 %v4699
        %4729 = vmatprep.subr.mxu0 0.0
        %4730 = vmatpush1.msra.mxu0 %v4700
        %4731 = vmatprep.subr.mxu0 0.0
        %4732 = vmatpush1.msra.mxu0 %v4701
        %4733 = vmatprep.subr.mxu0 0.0
        %4734 = vmatpush1.msra.mxu0 %v4702
        %4735 = vmatprep.subr.mxu0 0.0
        %4736 = vmatpush1.msra.mxu0 %v4703
        %4737 = vmatprep.subr.mxu0 0.0
        %4738 = vmatpush1.msra.mxu0 0.0
        %4739 = vmatprep.subr.mxu0 0.0
        %4740 = vmatpush1.msra.mxu0 0.0
        %4741 = vmatprep.subr.mxu0 0.0
        %4742 = vmatpush1.msra.mxu0 0.0
        %4743 = vmatprep.subr.mxu0 0.0
        %4744 = vmatpush1.msra.mxu0 0.0
        %4745 = vmatprep.subr.mxu0 0.0
        %4746 = vmatpush1.msra.mxu0 0.0
        %4747 = vmatprep.subr.mxu0 0.0
        %4748 = vmatpush1.msra.mxu0 0.0
        %4749 = vmatprep.subr.mxu0 0.0
        %4750 = vmatpush1.msra.mxu0 0.0
        %4751 = vmatprep.subr.mxu0 0.0
        %4752 = vmatpush1.msra.mxu0 0.0
        %4753 = vmatprep.subr.mxu0 0.0
        %4754 = vmatpush1.msra.mxu0 0.0
        %4755 = vmatprep.subr.mxu0 0.0
        %4756 = vmatpush1.msra.mxu0 0.0
        %4757 = vmatprep.subr.mxu0 0.0
        %4758 = vmatpush1.msra.mxu0 0.0
        %4759 = vmatprep.subr.mxu0 0.0
        %4760 = vmatpush1.msra.mxu0 0.0
        %4761 = vmatprep.subr.mxu0 0.0
        %4762 = vmatpush1.msra.mxu0 0.0
        %4763 = vmatprep.subr.mxu0 0.0
        %4764 = vmatpush1.msra.mxu0 0.0
        %4765 = vmatprep.subr.mxu0 0.0
        %4766 = vmatpush1.msra.mxu0 0.0
        %4767 = vmatprep.subr.mxu0 0.0
        %4768 = vmatpush1.msra.mxu0 0.0
        %4769 = vmatprep.mubr.f32.mxu0 0.0
        %4770 = vmatmul.mubr.f32.gmra.mrb[0].mxu0 %v4687
        %v4771 = vpop.f32.mrb[0].mxu0
        %v4772 = vadd.f32 %v4704, %v4771
        %v4773 = vpop.f32.mrb[0].mxu0
        %4774 = vdwg.mxu0
        %4775 = vst [vmem:[%s324] sm:$0x1] %v4772
        %s4776 = sand.u32 %s225, 1
        %s4777 = scalar_lea.sflag [#allocation3], %s4776
        %s4778 = sand.u32 %s225, 1
        %s4779 = scalar_lea.vmem [#allocation2], %s4778
        // Predicated region
        $region57: #{simple_conv_net_forward.1} parent=55 // pred_check
          %p4780 = pneg %p235
        $region58: #{simple_conv_net_forward.1} parent=55 // pred_check_branch
          %4782 = sbr.rel (%p4780) target = $region60
        $region59: #{simple_conv_net_forward.1} parent=55 // pred_region
          %s4784 = ssub.s32 16, 16
          %4785 = vsyncadd %s4777, %s4784
          %s4786 = smul.addr %s23, 16
          %s4787 = scalar_lea.hbm %s9, %s4786
          %s4789 = sshll.u32 %s4779, 4
          %s4790 = int_to_ptr.vmem [resolvable:$true] %s4789
          %4792 = dma.vmem_to_hbm [thread:$0]  %s4790, 16, %s4787, %s4777
        $region60: #{simple_conv_net_forward.1} parent=55 // pred_fallthru
          _
      $region56: #{simple_conv_net_forward.1} parent=5 // pred_fallthru
        _
      %p4793 = scmp.le.s32.totalorder 2, %s18
      // Predicated region
      $region61: #{simple_conv_net_forward.1} parent=5 // pred_check
        %p4794 = pneg %p4793
      $region62: #{simple_conv_net_forward.1} parent=5 // pred_check_branch
        %4796 = sbr.rel (%p4794) target = $region64
      $region63: #{simple_conv_net_forward.1} parent=5 // pred_region
        %s4797 = ssub.s32 %s18, 2
        // Predicated region
        $region65: #{simple_conv_net_forward.1} parent=63 // pred_check
          %p4798 = pneg %p241
        $region66: #{simple_conv_net_forward.1} parent=63 // pred_check_branch
          %4800 = sbr.rel (%p4798) target = $region68
        $region67: #{simple_conv_net_forward.1} parent=63 // pred_region
          %s4801 = sand.u32 %s226, 1
          %s4802 = scalar_lea.sflag [#allocation3], %s4801
          %s4803 = sand.u32 %s226, 1
          %s4804 = scalar_lea.vmem [#allocation2], %s4803
          %4805 = dma.done %s4802, 16
        $region68: #{simple_conv_net_forward.1} parent=63 // pred_fallthru
          _
      $region64: #{simple_conv_net_forward.1} parent=5 // pred_fallthru
        _
    $region6: #{simple_conv_net_forward.1} parent=1 // loop_footer
      %s22 = sadd.s32 1, %s18
    $region7: #{simple_conv_net_forward.1} parent=1 // loop_footer_branch
      %17 = sbr.rel target = $region3
    $region8: #{simple_conv_net_forward.1} parent=1 // loop_exit
      _
    %4806 = vsyncpa [#allocation3], 1
    %s4807 = scalar_lea.sflag [#allocation3], 1
    %4808 = vsyncpa %s4807, 1

</llo_original>
